<compile_context>
chip_gen: v7x
topology: tpu7x:2x2x1
jax: 0.10.0
libtpu: 0.0.40
codegen_flags: <defaults>
</compile_context>

<pallas_src>
import jax
import jax.numpy as jnp
from jax.experimental import pallas as pl
from jax.experimental.pallas import tpu as pltpu


# ------------------------- fused Pallas kernel ----------------------------- #

def _build_fused_decoder_kernel(IC, OC, H, W, K1, K2):
    """Returns (kernel, scratch_shapes, (Ho2, Wo2)) for the fused 2-layer decoder."""
    Ho1, Wo1 = H + K1 - 1, W + K1 - 1          # layer-1 output
    Ho2, Wo2 = Ho1 + K2 - 1, Wo1 + K2 - 1      # layer-2 (final) output
    Hp1, Wp1 = H + 2 * (K1 - 1), W + 2 * (K1 - 1)      # padded layer-1 input
    Hp2, Wp2 = Ho1 + 2 * (K2 - 1), Wo1 + 2 * (K2 - 1)  # padded layer-2 input

    def kernel(x_ref, w1_ref, b1_ref, w2_ref, b2_ref, o_ref, xp_ref, yp_ref):
        # ---- stage 0: zero-pad the (IC, H, W) input tile inside VMEM ------- #
        xp_ref[...] = jnp.zeros((IC, Hp1, Wp1), jnp.float32)
        xp_ref[:, K1 - 1:K1 - 1 + H, K1 - 1:K1 - 1 + W] = x_ref[0]

        # ---- stage 1: ConvTranspose2d #1 (IC -> OC), VPU tap accumulation -- #
        # full-correlation form: flipped kernel against the padded input.
        yp_ref[...] = jnp.zeros((OC, Hp2, Wp2), jnp.float32)
        acc1 = [b1_ref[oc] + jnp.zeros((Ho1, Wo1), jnp.float32) for oc in range(OC)]
        for ic in range(IC):
            for kh in range(K1):
                for kw in range(K1):
                    xw = xp_ref[ic, kh:kh + Ho1, kw:kw + Wo1]     # one VMEM load,
                    base = ic * OC * K1 * K1 + kh * K1 + kw        # reused for all oc
                    for oc in range(OC):
                        acc1[oc] = acc1[oc] + w1_ref[base + oc * K1 * K1] * xw
        # write layer-1 result straight into the zero-padded layer-2 input
        # (intermediate activation never leaves VMEM)
        for oc in range(OC):
            yp_ref[oc, K2 - 1:K2 - 1 + Ho1, K2 - 1:K2 - 1 + Wo1] = acc1[oc]

        # ---- stage 2: ConvTranspose2d #2 (OC -> 1), pure VPU matvec -------- #
        acc2 = b2_ref[0] + jnp.zeros((Ho2, Wo2), jnp.float32)
        for oc in range(OC):
            for kh in range(K2):
                for kw in range(K2):
                    yw = yp_ref[oc, kh:kh + Ho2, kw:kw + Wo2]
                    acc2 = acc2 + w2_ref[(oc * K2 + kh) * K2 + kw] * yw
        o_ref[0, 0] = acc2

    scratch_shapes = [
        pltpu.VMEM((IC, Hp1, Wp1), jnp.float32),
        pltpu.VMEM((OC, Hp2, Wp2), jnp.float32),
    ]
    return kernel, scratch_shapes, (Ho2, Wo2)


def decoder_forward(x, w1, b1, w2, b2):
    """Fused Decoder forward: two stride-1 / pad-0 ConvTranspose2d layers.

    x : (N, IC, H, W) NCHW
    w1: (IC, OC, K1, K1), b1: (OC,)      (PyTorch ConvTranspose2d layout)
    w2: (OC,  1, K2, K2), b2: (1,)
    returns (N, 1, H+K1+K2-2, W+K1+K2-2) float32
    """
    N, IC, H, W = x.shape
    _, OC, K1, _ = w1.shape
    _, _, K2, _ = w2.shape
    Ho1, Wo1 = H + K1 - 1, W + K1 - 1
    kernel, scratch_shapes, (Ho2, Wo2) = _build_fused_decoder_kernel(IC, OC, H, W, K1, K2)

    # flip kernels (full-correlation form) and flatten in (ic, oc, kh, kw) /
    # (oc, 0, kh, kw) order; tiny XLA-side op, weights are read as SMEM scalars.
    w1_flat = jnp.flip(w1, axis=(2, 3)).reshape(-1).astype(jnp.float32)
    w2_flat = jnp.flip(w2, axis=(2, 3)).reshape(-1).astype(jnp.float32)

    flops = 2 * N * (IC * OC * K1 * K1 * Ho1 * Wo1 + OC * K2 * K2 * Ho2 * Wo2)
    bytes_accessed = 4 * (x.size + N * Ho2 * Wo2
                          + w1_flat.size + b1.size + w2_flat.size + b2.size)

    smem_spec = pl.BlockSpec(memory_space=pltpu.MemorySpace.SMEM)

    return pl.pallas_call(
        kernel,
        out_shape=jax.ShapeDtypeStruct((N, 1, Ho2, Wo2), jnp.float32),
        grid=(N,),
        in_specs=[
            pl.BlockSpec((1, IC, H, W), lambda n: (n, 0, 0, 0)),
            smem_spec,   # w1 (flipped, flattened)
            smem_spec,   # b1
            smem_spec,   # w2 (flipped, flattened)
            smem_spec,   # b2
        ],
        out_specs=pl.BlockSpec((1, 1, Ho2, Wo2), lambda n: (n, 0, 0, 0)),
        scratch_shapes=scratch_shapes,
        compiler_params=pltpu.CompilerParams(
            dimension_semantics=("parallel",),   # megacore sharding over batch on v7x
        ),
        cost_estimate=pl.CostEstimate(
            flops=int(flops), transcendentals=0, bytes_accessed=int(bytes_accessed)),
    )(x.astype(jnp.float32), w1_flat, b1.astype(jnp.float32),
      w2_flat, b2.astype(jnp.float32))


# --------------------------------- Module ---------------------------------- #

class Decoder:
    """JAX/Pallas port of the PyTorch Decoder (stride=1, padding=0)."""

    def __init__(self, in_channel, out_channel, kernel_size_1, kernel_size_2, key):
        k1, k2, k3, k4 = jax.random.split(key, 4)

        def uinit(k, shape, fan):
            bound = 1.0 / (fan ** 0.5)
            return jax.random.uniform(k, shape, jnp.float32, -bound, bound)

        # deterministic, PyTorch-shaped parameters (synthetic init, no checkpoint)
        self.w1 = uinit(k1, (in_channel, out_channel, kernel_size_1, kernel_size_1),
                        in_channel * kernel_size_1 * kernel_size_1)
        self.b1 = uinit(k2, (out_channel,), in_channel * kernel_size_1 * kernel_size_1)
        self.w2 = uinit(k3, (out_channel, 1, kernel_size_2, kernel_size_2),
                        out_channel * kernel_size_2 * kernel_size_2)
        self.b2 = uinit(k4, (1,), out_channel * kernel_size_2 * kernel_size_2)
        self._forward = jax.jit(decoder_forward)

    def __call__(self, x):
        return self._forward(x, self.w1, self.b1, self.w2, self.b2)


# ------------------------- pure-JAX reference check ------------------------ #

def conv_transpose2d_ref(x, w, b):
    """Direct scatter definition of transposed convolution (stride=1, pad=0)."""
    N, IC, H, W = x.shape
    _, OC, K, _ = w.shape
    Ho, Wo = H + K - 1, W + K - 1
    out = jnp.zeros((N, OC, Ho, Wo), jnp.float32)
    for kh in range(K):
        for kw in range(K):
            out = out.at[:, :, kh:kh + H, kw:kw + W].add(
                jnp.einsum('nihw,io->nohw', x, w[:, :, kh, kw]))
    return out + b.reshape(1, OC, 1, 1)


def decoder_ref(dec, x):
    x = conv_transpose2d_ref(x, dec.w1, dec.b1)
    x = conv_transpose2d_ref(x, dec.w2, dec.b2)
    return x


# ----------------------------------- main ----------------------------------- #

if __name__ == "__main__":
    key = jax.random.PRNGKey(0)
    kx, kp = jax.random.split(key)

    # small shapes consistent with the module: N=2, C_in=4, H=W=16, k1=k2=3
    x = jax.random.normal(kx, (2, 4, 16, 16), jnp.float32)

    dec = Decoder(in_channel=4, out_channel=4, kernel_size_1=3, kernel_size_2=3, key=kp)

    y = jax.block_until_ready(dec(x))
    assert y.shape == (2, 1, 20, 20), y.shape

    y_ref = jax.block_until_ready(decoder_ref(dec, x))
    assert jnp.allclose(y, y_ref, atol=1e-4, rtol=1e-4), float(jnp.max(jnp.abs(y - y_ref)))

    print("KERNEL_OK")
</pallas_src>

<mosaic_0001>
module attributes {stable_mosaic.version = 11 : i64} {
  func.func @kernel(%arg0: i32, %arg1: memref<1x4x16x16xf32, #tpu.memory_space<vmem>>, %arg2: memref<144xf32, #tpu.memory_space<smem>>, %arg3: memref<4xf32, #tpu.memory_space<smem>>, %arg4: memref<36xf32, #tpu.memory_space<smem>>, %arg5: memref<1xf32, #tpu.memory_space<smem>>, %arg6: memref<1x1x20x20xf32, #tpu.memory_space<vmem>>, %arg7: memref<4x20x20xf32, #tpu.memory_space<vmem>>, %arg8: memref<4x22x22xf32, #tpu.memory_space<vmem>>) attributes {dimension_semantics = [#tpu.dimension_semantics<parallel>], iteration_bounds = array<i64: 2>, scalar_prefetch = 0 : i64, scratch_operands = 2 : i64, tpu.core_type = #tpu.core_type<tc>, window_params = [{transform_indices = @transform_0, window_bounds = array<i64: 1, 4, 16, 16>}, {transform_indices = @transform_1, window_bounds = array<i64: 144>}, {transform_indices = @transform_2, window_bounds = array<i64: 4>}, {transform_indices = @transform_3, window_bounds = array<i64: 36>}, {transform_indices = @transform_4, window_bounds = array<i64: 1>}, {transform_indices = @transform_5, window_bounds = array<i64: 1, 1, 20, 20>}]} {
    %cst = arith.constant 0.000000e+00 : f32
    %0 = vector.broadcast %cst : f32 to vector<4x20x20xf32>
    %c0 = arith.constant 0 : index
    %c0_0 = arith.constant 0 : index
    %c0_1 = arith.constant 0 : index
    %1 = vector.load %arg7[%c0, %c0_0, %c0_1] : memref<4x20x20xf32, #tpu.memory_space<vmem>>, vector<4x20x20xf32>
    tpu.vector_store %arg7[%c0, %c0_0, %c0_1], %0 {strides = array<i32>} : memref<4x20x20xf32, #tpu.memory_space<vmem>>, vector<4x20x20xf32>,
    %c0_2 = arith.constant 0 : index
    %c0_3 = arith.constant 0 : index
    %c0_4 = arith.constant 0 : index
    %c0_5 = arith.constant 0 : index
    %2 = vector.load %arg1[%c0_2, %c0_3, %c0_4, %c0_5] : memref<1x4x16x16xf32, #tpu.memory_space<vmem>>, vector<1x4x16x16xf32>
    %3 = vector.shape_cast %2 : vector<1x4x16x16xf32> to vector<4x16x16xf32>
    %c0_6 = arith.constant 0 : index
    %c2 = arith.constant 2 : index
    %c2_7 = arith.constant 2 : index
    %4 = vector.load %arg7[%c0_6, %c2, %c2_7] : memref<4x20x20xf32, #tpu.memory_space<vmem>>, vector<4x16x16xf32>
    tpu.vector_store %arg7[%c0_6, %c2, %c2_7], %3 {strides = array<i32>} : memref<4x20x20xf32, #tpu.memory_space<vmem>>, vector<4x16x16xf32>,
    %cst_8 = arith.constant 0.000000e+00 : f32
    %5 = vector.broadcast %cst_8 : f32 to vector<4x22x22xf32>
    %c0_9 = arith.constant 0 : index
    %c0_10 = arith.constant 0 : index
    %c0_11 = arith.constant 0 : index
    %6 = vector.load %arg8[%c0_9, %c0_10, %c0_11] : memref<4x22x22xf32, #tpu.memory_space<vmem>>, vector<4x22x22xf32>
    tpu.vector_store %arg8[%c0_9, %c0_10, %c0_11], %5 {strides = array<i32>} : memref<4x22x22xf32, #tpu.memory_space<vmem>>, vector<4x22x22xf32>,
    %c0_12 = arith.constant 0 : index
    %7 = memref.load %arg3[%c0_12] : memref<4xf32, #tpu.memory_space<smem>>
    %cst_13 = arith.constant 0.000000e+00 : f32
    %8 = vector.broadcast %cst_13 : f32 to vector<18x18xf32>
    %9 = vector.broadcast %7 : f32 to vector<18x18xf32>
    %10 = arith.addf %9, %8 : vector<18x18xf32>
    %c1 = arith.constant 1 : index
    %11 = memref.load %arg3[%c1] : memref<4xf32, #tpu.memory_space<smem>>
    %cst_14 = arith.constant 0.000000e+00 : f32
    %12 = vector.broadcast %cst_14 : f32 to vector<18x18xf32>
    %13 = vector.broadcast %11 : f32 to vector<18x18xf32>
    %14 = arith.addf %13, %12 : vector<18x18xf32>
    %c2_15 = arith.constant 2 : index
    %15 = memref.load %arg3[%c2_15] : memref<4xf32, #tpu.memory_space<smem>>
    %cst_16 = arith.constant 0.000000e+00 : f32
    %16 = vector.broadcast %cst_16 : f32 to vector<18x18xf32>
    %17 = vector.broadcast %15 : f32 to vector<18x18xf32>
    %18 = arith.addf %17, %16 : vector<18x18xf32>
    %c3 = arith.constant 3 : index
    %19 = memref.load %arg3[%c3] : memref<4xf32, #tpu.memory_space<smem>>
    %cst_17 = arith.constant 0.000000e+00 : f32
    %20 = vector.broadcast %cst_17 : f32 to vector<18x18xf32>
    %21 = vector.broadcast %19 : f32 to vector<18x18xf32>
    %22 = arith.addf %21, %20 : vector<18x18xf32>
    %c0_18 = arith.constant 0 : index
    %c0_19 = arith.constant 0 : index
    %c0_20 = arith.constant 0 : index
    %23 = vector.load %arg7[%c0_18, %c0_19, %c0_20] : memref<4x20x20xf32, #tpu.memory_space<vmem>>, vector<1x18x18xf32>
    %24 = vector.shape_cast %23 : vector<1x18x18xf32> to vector<18x18xf32>
    %c0_21 = arith.constant 0 : index
    %25 = memref.load %arg2[%c0_21] : memref<144xf32, #tpu.memory_space<smem>>
    %26 = vector.broadcast %25 : f32 to vector<18x18xf32>
    %27 = arith.mulf %26, %24 : vector<18x18xf32>
    %28 = arith.addf %10, %27 : vector<18x18xf32>
    %c9 = arith.constant 9 : index
    %29 = memref.load %arg2[%c9] : memref<144xf32, #tpu.memory_space<smem>>
    %30 = vector.broadcast %29 : f32 to vector<18x18xf32>
    %31 = arith.mulf %30, %24 : vector<18x18xf32>
    %32 = arith.addf %14, %31 : vector<18x18xf32>
    %c18 = arith.constant 18 : index
    %33 = memref.load %arg2[%c18] : memref<144xf32, #tpu.memory_space<smem>>
    %34 = vector.broadcast %33 : f32 to vector<18x18xf32>
    %35 = arith.mulf %34, %24 : vector<18x18xf32>
    %36 = arith.addf %18, %35 : vector<18x18xf32>
    %c27 = arith.constant 27 : index
    %37 = memref.load %arg2[%c27] : memref<144xf32, #tpu.memory_space<smem>>
    %38 = vector.broadcast %37 : f32 to vector<18x18xf32>
    %39 = arith.mulf %38, %24 : vector<18x18xf32>
    %40 = arith.addf %22, %39 : vector<18x18xf32>
    %c0_22 = arith.constant 0 : index
    %c0_23 = arith.constant 0 : index
    %c1_24 = arith.constant 1 : index
    %41 = vector.load %arg7[%c0_22, %c0_23, %c1_24] : memref<4x20x20xf32, #tpu.memory_space<vmem>>, vector<1x18x18xf32>
    %42 = vector.shape_cast %41 : vector<1x18x18xf32> to vector<18x18xf32>
    %c1_25 = arith.constant 1 : index
    %43 = memref.load %arg2[%c1_25] : memref<144xf32, #tpu.memory_space<smem>>
    %44 = vector.broadcast %43 : f32 to vector<18x18xf32>
    %45 = arith.mulf %44, %42 : vector<18x18xf32>
    %46 = arith.addf %28, %45 : vector<18x18xf32>
    %c10 = arith.constant 10 : index
    %47 = memref.load %arg2[%c10] : memref<144xf32, #tpu.memory_space<smem>>
    %48 = vector.broadcast %47 : f32 to vector<18x18xf32>
    %49 = arith.mulf %48, %42 : vector<18x18xf32>
    %50 = arith.addf %32, %49 : vector<18x18xf32>
    %c19 = arith.constant 19 : index
    %51 = memref.load %arg2[%c19] : memref<144xf32, #tpu.memory_space<smem>>
    %52 = vector.broadcast %51 : f32 to vector<18x18xf32>
    %53 = arith.mulf %52, %42 : vector<18x18xf32>
    %54 = arith.addf %36, %53 : vector<18x18xf32>
    %c28 = arith.constant 28 : index
    %55 = memref.load %arg2[%c28] : memref<144xf32, #tpu.memory_space<smem>>
    %56 = vector.broadcast %55 : f32 to vector<18x18xf32>
    %57 = arith.mulf %56, %42 : vector<18x18xf32>
    %58 = arith.addf %40, %57 : vector<18x18xf32>
    %c0_26 = arith.constant 0 : index
    %c0_27 = arith.constant 0 : index
    %c2_28 = arith.constant 2 : index
    %59 = vector.load %arg7[%c0_26, %c0_27, %c2_28] : memref<4x20x20xf32, #tpu.memory_space<vmem>>, vector<1x18x18xf32>
    %60 = vector.shape_cast %59 : vector<1x18x18xf32> to vector<18x18xf32>
    %c2_29 = arith.constant 2 : index
    %61 = memref.load %arg2[%c2_29] : memref<144xf32, #tpu.memory_space<smem>>
    %62 = vector.broadcast %61 : f32 to vector<18x18xf32>
    %63 = arith.mulf %62, %60 : vector<18x18xf32>
    %64 = arith.addf %46, %63 : vector<18x18xf32>
    %c11 = arith.constant 11 : index
    %65 = memref.load %arg2[%c11] : memref<144xf32, #tpu.memory_space<smem>>
    %66 = vector.broadcast %65 : f32 to vector<18x18xf32>
    %67 = arith.mulf %66, %60 : vector<18x18xf32>
    %68 = arith.addf %50, %67 : vector<18x18xf32>
    %c20 = arith.constant 20 : index
    %69 = memref.load %arg2[%c20] : memref<144xf32, #tpu.memory_space<smem>>
    %70 = vector.broadcast %69 : f32 to vector<18x18xf32>
    %71 = arith.mulf %70, %60 : vector<18x18xf32>
    %72 = arith.addf %54, %71 : vector<18x18xf32>
    %c29 = arith.constant 29 : index
    %73 = memref.load %arg2[%c29] : memref<144xf32, #tpu.memory_space<smem>>
    %74 = vector.broadcast %73 : f32 to vector<18x18xf32>
    %75 = arith.mulf %74, %60 : vector<18x18xf32>
    %76 = arith.addf %58, %75 : vector<18x18xf32>
    %c0_30 = arith.constant 0 : index
    %c1_31 = arith.constant 1 : index
    %c0_32 = arith.constant 0 : index
    %77 = vector.load %arg7[%c0_30, %c1_31, %c0_32] : memref<4x20x20xf32, #tpu.memory_space<vmem>>, vector<1x18x18xf32>
    %78 = vector.shape_cast %77 : vector<1x18x18xf32> to vector<18x18xf32>
    %c3_33 = arith.constant 3 : index
    %79 = memref.load %arg2[%c3_33] : memref<144xf32, #tpu.memory_space<smem>>
    %80 = vector.broadcast %79 : f32 to vector<18x18xf32>
    %81 = arith.mulf %80, %78 : vector<18x18xf32>
    %82 = arith.addf %64, %81 : vector<18x18xf32>
    %c12 = arith.constant 12 : index
    %83 = memref.load %arg2[%c12] : memref<144xf32, #tpu.memory_space<smem>>
    %84 = vector.broadcast %83 : f32 to vector<18x18xf32>
    %85 = arith.mulf %84, %78 : vector<18x18xf32>
    %86 = arith.addf %68, %85 : vector<18x18xf32>
    %c21 = arith.constant 21 : index
    %87 = memref.load %arg2[%c21] : memref<144xf32, #tpu.memory_space<smem>>
    %88 = vector.broadcast %87 : f32 to vector<18x18xf32>
    %89 = arith.mulf %88, %78 : vector<18x18xf32>
    %90 = arith.addf %72, %89 : vector<18x18xf32>
    %c30 = arith.constant 30 : index
    %91 = memref.load %arg2[%c30] : memref<144xf32, #tpu.memory_space<smem>>
    %92 = vector.broadcast %91 : f32 to vector<18x18xf32>
    %93 = arith.mulf %92, %78 : vector<18x18xf32>
    %94 = arith.addf %76, %93 : vector<18x18xf32>
    %c0_34 = arith.constant 0 : index
    %c1_35 = arith.constant 1 : index
    %c1_36 = arith.constant 1 : index
    %95 = vector.load %arg7[%c0_34, %c1_35, %c1_36] : memref<4x20x20xf32, #tpu.memory_space<vmem>>, vector<1x18x18xf32>
    %96 = vector.shape_cast %95 : vector<1x18x18xf32> to vector<18x18xf32>
    %c4 = arith.constant 4 : index
    %97 = memref.load %arg2[%c4] : memref<144xf32, #tpu.memory_space<smem>>
    %98 = vector.broadcast %97 : f32 to vector<18x18xf32>
    %99 = arith.mulf %98, %96 : vector<18x18xf32>
    %100 = arith.addf %82, %99 : vector<18x18xf32>
    %c13 = arith.constant 13 : index
    %101 = memref.load %arg2[%c13] : memref<144xf32, #tpu.memory_space<smem>>
    %102 = vector.broadcast %101 : f32 to vector<18x18xf32>
    %103 = arith.mulf %102, %96 : vector<18x18xf32>
    %104 = arith.addf %86, %103 : vector<18x18xf32>
    %c22 = arith.constant 22 : index
    %105 = memref.load %arg2[%c22] : memref<144xf32, #tpu.memory_space<smem>>
    %106 = vector.broadcast %105 : f32 to vector<18x18xf32>
    %107 = arith.mulf %106, %96 : vector<18x18xf32>
    %108 = arith.addf %90, %107 : vector<18x18xf32>
    %c31 = arith.constant 31 : index
    %109 = memref.load %arg2[%c31] : memref<144xf32, #tpu.memory_space<smem>>
    %110 = vector.broadcast %109 : f32 to vector<18x18xf32>
    %111 = arith.mulf %110, %96 : vector<18x18xf32>
    %112 = arith.addf %94, %111 : vector<18x18xf32>
    %c0_37 = arith.constant 0 : index
    %c1_38 = arith.constant 1 : index
    %c2_39 = arith.constant 2 : index
    %113 = vector.load %arg7[%c0_37, %c1_38, %c2_39] : memref<4x20x20xf32, #tpu.memory_space<vmem>>, vector<1x18x18xf32>
    %114 = vector.shape_cast %113 : vector<1x18x18xf32> to vector<18x18xf32>
    %c5 = arith.constant 5 : index
    %115 = memref.load %arg2[%c5] : memref<144xf32, #tpu.memory_space<smem>>
    %116 = vector.broadcast %115 : f32 to vector<18x18xf32>
    %117 = arith.mulf %116, %114 : vector<18x18xf32>
    %118 = arith.addf %100, %117 : vector<18x18xf32>
    %c14 = arith.constant 14 : index
    %119 = memref.load %arg2[%c14] : memref<144xf32, #tpu.memory_space<smem>>
    %120 = vector.broadcast %119 : f32 to vector<18x18xf32>
    %121 = arith.mulf %120, %114 : vector<18x18xf32>
    %122 = arith.addf %104, %121 : vector<18x18xf32>
    %c23 = arith.constant 23 : index
    %123 = memref.load %arg2[%c23] : memref<144xf32, #tpu.memory_space<smem>>
    %124 = vector.broadcast %123 : f32 to vector<18x18xf32>
    %125 = arith.mulf %124, %114 : vector<18x18xf32>
    %126 = arith.addf %108, %125 : vector<18x18xf32>
    %c32 = arith.constant 32 : index
    %127 = memref.load %arg2[%c32] : memref<144xf32, #tpu.memory_space<smem>>
    %128 = vector.broadcast %127 : f32 to vector<18x18xf32>
    %129 = arith.mulf %128, %114 : vector<18x18xf32>
    %130 = arith.addf %112, %129 : vector<18x18xf32>
    %c0_40 = arith.constant 0 : index
    %c2_41 = arith.constant 2 : index
    %c0_42 = arith.constant 0 : index
    %131 = vector.load %arg7[%c0_40, %c2_41, %c0_42] : memref<4x20x20xf32, #tpu.memory_space<vmem>>, vector<1x18x18xf32>
    %132 = vector.shape_cast %131 : vector<1x18x18xf32> to vector<18x18xf32>
    %c6 = arith.constant 6 : index
    %133 = memref.load %arg2[%c6] : memref<144xf32, #tpu.memory_space<smem>>
    %134 = vector.broadcast %133 : f32 to vector<18x18xf32>
    %135 = arith.mulf %134, %132 : vector<18x18xf32>
    %136 = arith.addf %118, %135 : vector<18x18xf32>
    %c15 = arith.constant 15 : index
    %137 = memref.load %arg2[%c15] : memref<144xf32, #tpu.memory_space<smem>>
    %138 = vector.broadcast %137 : f32 to vector<18x18xf32>
    %139 = arith.mulf %138, %132 : vector<18x18xf32>
    %140 = arith.addf %122, %139 : vector<18x18xf32>
    %c24 = arith.constant 24 : index
    %141 = memref.load %arg2[%c24] : memref<144xf32, #tpu.memory_space<smem>>
    %142 = vector.broadcast %141 : f32 to vector<18x18xf32>
    %143 = arith.mulf %142, %132 : vector<18x18xf32>
    %144 = arith.addf %126, %143 : vector<18x18xf32>
    %c33 = arith.constant 33 : index
    %145 = memref.load %arg2[%c33] : memref<144xf32, #tpu.memory_space<smem>>
    %146 = vector.broadcast %145 : f32 to vector<18x18xf32>
    %147 = arith.mulf %146, %132 : vector<18x18xf32>
    %148 = arith.addf %130, %147 : vector<18x18xf32>
    %c0_43 = arith.constant 0 : index
    %c2_44 = arith.constant 2 : index
    %c1_45 = arith.constant 1 : index
    %149 = vector.load %arg7[%c0_43, %c2_44, %c1_45] : memref<4x20x20xf32, #tpu.memory_space<vmem>>, vector<1x18x18xf32>
    %150 = vector.shape_cast %149 : vector<1x18x18xf32> to vector<18x18xf32>
    %c7 = arith.constant 7 : index
    %151 = memref.load %arg2[%c7] : memref<144xf32, #tpu.memory_space<smem>>
    %152 = vector.broadcast %151 : f32 to vector<18x18xf32>
    %153 = arith.mulf %152, %150 : vector<18x18xf32>
    %154 = arith.addf %136, %153 : vector<18x18xf32>
    %c16 = arith.constant 16 : index
    %155 = memref.load %arg2[%c16] : memref<144xf32, #tpu.memory_space<smem>>
    %156 = vector.broadcast %155 : f32 to vector<18x18xf32>
    %157 = arith.mulf %156, %150 : vector<18x18xf32>
    %158 = arith.addf %140, %157 : vector<18x18xf32>
    %c25 = arith.constant 25 : index
    %159 = memref.load %arg2[%c25] : memref<144xf32, #tpu.memory_space<smem>>
    %160 = vector.broadcast %159 : f32 to vector<18x18xf32>
    %161 = arith.mulf %160, %150 : vector<18x18xf32>
    %162 = arith.addf %144, %161 : vector<18x18xf32>
    %c34 = arith.constant 34 : index
    %163 = memref.load %arg2[%c34] : memref<144xf32, #tpu.memory_space<smem>>
    %164 = vector.broadcast %163 : f32 to vector<18x18xf32>
    %165 = arith.mulf %164, %150 : vector<18x18xf32>
    %166 = arith.addf %148, %165 : vector<18x18xf32>
    %c0_46 = arith.constant 0 : index
    %c2_47 = arith.constant 2 : index
    %c2_48 = arith.constant 2 : index
    %167 = vector.load %arg7[%c0_46, %c2_47, %c2_48] : memref<4x20x20xf32, #tpu.memory_space<vmem>>, vector<1x18x18xf32>
    %168 = vector.shape_cast %167 : vector<1x18x18xf32> to vector<18x18xf32>
    %c8 = arith.constant 8 : index
    %169 = memref.load %arg2[%c8] : memref<144xf32, #tpu.memory_space<smem>>
    %170 = vector.broadcast %169 : f32 to vector<18x18xf32>
    %171 = arith.mulf %170, %168 : vector<18x18xf32>
    %172 = arith.addf %154, %171 : vector<18x18xf32>
    %c17 = arith.constant 17 : index
    %173 = memref.load %arg2[%c17] : memref<144xf32, #tpu.memory_space<smem>>
    %174 = vector.broadcast %173 : f32 to vector<18x18xf32>
    %175 = arith.mulf %174, %168 : vector<18x18xf32>
    %176 = arith.addf %158, %175 : vector<18x18xf32>
    %c26 = arith.constant 26 : index
    %177 = memref.load %arg2[%c26] : memref<144xf32, #tpu.memory_space<smem>>
    %178 = vector.broadcast %177 : f32 to vector<18x18xf32>
    %179 = arith.mulf %178, %168 : vector<18x18xf32>
    %180 = arith.addf %162, %179 : vector<18x18xf32>
    %c35 = arith.constant 35 : index
    %181 = memref.load %arg2[%c35] : memref<144xf32, #tpu.memory_space<smem>>
    %182 = vector.broadcast %181 : f32 to vector<18x18xf32>
    %183 = arith.mulf %182, %168 : vector<18x18xf32>
    %184 = arith.addf %166, %183 : vector<18x18xf32>
    %c1_49 = arith.constant 1 : index
    %c0_50 = arith.constant 0 : index
    %c0_51 = arith.constant 0 : index
    %185 = vector.load %arg7[%c1_49, %c0_50, %c0_51] : memref<4x20x20xf32, #tpu.memory_space<vmem>>, vector<1x18x18xf32>
    %186 = vector.shape_cast %185 : vector<1x18x18xf32> to vector<18x18xf32>
    %c36 = arith.constant 36 : index
    %187 = memref.load %arg2[%c36] : memref<144xf32, #tpu.memory_space<smem>>
    %188 = vector.broadcast %187 : f32 to vector<18x18xf32>
    %189 = arith.mulf %188, %186 : vector<18x18xf32>
    %190 = arith.addf %172, %189 : vector<18x18xf32>
    %c45 = arith.constant 45 : index
    %191 = memref.load %arg2[%c45] : memref<144xf32, #tpu.memory_space<smem>>
    %192 = vector.broadcast %191 : f32 to vector<18x18xf32>
    %193 = arith.mulf %192, %186 : vector<18x18xf32>
    %194 = arith.addf %176, %193 : vector<18x18xf32>
    %c54 = arith.constant 54 : index
    %195 = memref.load %arg2[%c54] : memref<144xf32, #tpu.memory_space<smem>>
    %196 = vector.broadcast %195 : f32 to vector<18x18xf32>
    %197 = arith.mulf %196, %186 : vector<18x18xf32>
    %198 = arith.addf %180, %197 : vector<18x18xf32>
    %c63 = arith.constant 63 : index
    %199 = memref.load %arg2[%c63] : memref<144xf32, #tpu.memory_space<smem>>
    %200 = vector.broadcast %199 : f32 to vector<18x18xf32>
    %201 = arith.mulf %200, %186 : vector<18x18xf32>
    %202 = arith.addf %184, %201 : vector<18x18xf32>
    %c1_52 = arith.constant 1 : index
    %c0_53 = arith.constant 0 : index
    %c1_54 = arith.constant 1 : index
    %203 = vector.load %arg7[%c1_52, %c0_53, %c1_54] : memref<4x20x20xf32, #tpu.memory_space<vmem>>, vector<1x18x18xf32>
    %204 = vector.shape_cast %203 : vector<1x18x18xf32> to vector<18x18xf32>
    %c37 = arith.constant 37 : index
    %205 = memref.load %arg2[%c37] : memref<144xf32, #tpu.memory_space<smem>>
    %206 = vector.broadcast %205 : f32 to vector<18x18xf32>
    %207 = arith.mulf %206, %204 : vector<18x18xf32>
    %208 = arith.addf %190, %207 : vector<18x18xf32>
    %c46 = arith.constant 46 : index
    %209 = memref.load %arg2[%c46] : memref<144xf32, #tpu.memory_space<smem>>
    %210 = vector.broadcast %209 : f32 to vector<18x18xf32>
    %211 = arith.mulf %210, %204 : vector<18x18xf32>
    %212 = arith.addf %194, %211 : vector<18x18xf32>
    %c55 = arith.constant 55 : index
    %213 = memref.load %arg2[%c55] : memref<144xf32, #tpu.memory_space<smem>>
    %214 = vector.broadcast %213 : f32 to vector<18x18xf32>
    %215 = arith.mulf %214, %204 : vector<18x18xf32>
    %216 = arith.addf %198, %215 : vector<18x18xf32>
    %c64 = arith.constant 64 : index
    %217 = memref.load %arg2[%c64] : memref<144xf32, #tpu.memory_space<smem>>
    %218 = vector.broadcast %217 : f32 to vector<18x18xf32>
    %219 = arith.mulf %218, %204 : vector<18x18xf32>
    %220 = arith.addf %202, %219 : vector<18x18xf32>
    %c1_55 = arith.constant 1 : index
    %c0_56 = arith.constant 0 : index
    %c2_57 = arith.constant 2 : index
    %221 = vector.load %arg7[%c1_55, %c0_56, %c2_57] : memref<4x20x20xf32, #tpu.memory_space<vmem>>, vector<1x18x18xf32>
    %222 = vector.shape_cast %221 : vector<1x18x18xf32> to vector<18x18xf32>
    %c38 = arith.constant 38 : index
    %223 = memref.load %arg2[%c38] : memref<144xf32, #tpu.memory_space<smem>>
    %224 = vector.broadcast %223 : f32 to vector<18x18xf32>
    %225 = arith.mulf %224, %222 : vector<18x18xf32>
    %226 = arith.addf %208, %225 : vector<18x18xf32>
    %c47 = arith.constant 47 : index
    %227 = memref.load %arg2[%c47] : memref<144xf32, #tpu.memory_space<smem>>
    %228 = vector.broadcast %227 : f32 to vector<18x18xf32>
    %229 = arith.mulf %228, %222 : vector<18x18xf32>
    %230 = arith.addf %212, %229 : vector<18x18xf32>
    %c56 = arith.constant 56 : index
    %231 = memref.load %arg2[%c56] : memref<144xf32, #tpu.memory_space<smem>>
    %232 = vector.broadcast %231 : f32 to vector<18x18xf32>
    %233 = arith.mulf %232, %222 : vector<18x18xf32>
    %234 = arith.addf %216, %233 : vector<18x18xf32>
    %c65 = arith.constant 65 : index
    %235 = memref.load %arg2[%c65] : memref<144xf32, #tpu.memory_space<smem>>
    %236 = vector.broadcast %235 : f32 to vector<18x18xf32>
    %237 = arith.mulf %236, %222 : vector<18x18xf32>
    %238 = arith.addf %220, %237 : vector<18x18xf32>
    %c1_58 = arith.constant 1 : index
    %c1_59 = arith.constant 1 : index
    %c0_60 = arith.constant 0 : index
    %239 = vector.load %arg7[%c1_58, %c1_59, %c0_60] : memref<4x20x20xf32, #tpu.memory_space<vmem>>, vector<1x18x18xf32>
    %240 = vector.shape_cast %239 : vector<1x18x18xf32> to vector<18x18xf32>
    %c39 = arith.constant 39 : index
    %241 = memref.load %arg2[%c39] : memref<144xf32, #tpu.memory_space<smem>>
    %242 = vector.broadcast %241 : f32 to vector<18x18xf32>
    %243 = arith.mulf %242, %240 : vector<18x18xf32>
    %244 = arith.addf %226, %243 : vector<18x18xf32>
    %c48 = arith.constant 48 : index
    %245 = memref.load %arg2[%c48] : memref<144xf32, #tpu.memory_space<smem>>
    %246 = vector.broadcast %245 : f32 to vector<18x18xf32>
    %247 = arith.mulf %246, %240 : vector<18x18xf32>
    %248 = arith.addf %230, %247 : vector<18x18xf32>
    %c57 = arith.constant 57 : index
    %249 = memref.load %arg2[%c57] : memref<144xf32, #tpu.memory_space<smem>>
    %250 = vector.broadcast %249 : f32 to vector<18x18xf32>
    %251 = arith.mulf %250, %240 : vector<18x18xf32>
    %252 = arith.addf %234, %251 : vector<18x18xf32>
    %c66 = arith.constant 66 : index
    %253 = memref.load %arg2[%c66] : memref<144xf32, #tpu.memory_space<smem>>
    %254 = vector.broadcast %253 : f32 to vector<18x18xf32>
    %255 = arith.mulf %254, %240 : vector<18x18xf32>
    %256 = arith.addf %238, %255 : vector<18x18xf32>
    %c1_61 = arith.constant 1 : index
    %c1_62 = arith.constant 1 : index
    %c1_63 = arith.constant 1 : index
    %257 = vector.load %arg7[%c1_61, %c1_62, %c1_63] : memref<4x20x20xf32, #tpu.memory_space<vmem>>, vector<1x18x18xf32>
    %258 = vector.shape_cast %257 : vector<1x18x18xf32> to vector<18x18xf32>
    %c40 = arith.constant 40 : index
    %259 = memref.load %arg2[%c40] : memref<144xf32, #tpu.memory_space<smem>>
    %260 = vector.broadcast %259 : f32 to vector<18x18xf32>
    %261 = arith.mulf %260, %258 : vector<18x18xf32>
    %262 = arith.addf %244, %261 : vector<18x18xf32>
    %c49 = arith.constant 49 : index
    %263 = memref.load %arg2[%c49] : memref<144xf32, #tpu.memory_space<smem>>
    %264 = vector.broadcast %263 : f32 to vector<18x18xf32>
    %265 = arith.mulf %264, %258 : vector<18x18xf32>
    %266 = arith.addf %248, %265 : vector<18x18xf32>
    %c58 = arith.constant 58 : index
    %267 = memref.load %arg2[%c58] : memref<144xf32, #tpu.memory_space<smem>>
    %268 = vector.broadcast %267 : f32 to vector<18x18xf32>
    %269 = arith.mulf %268, %258 : vector<18x18xf32>
    %270 = arith.addf %252, %269 : vector<18x18xf32>
    %c67 = arith.constant 67 : index
    %271 = memref.load %arg2[%c67] : memref<144xf32, #tpu.memory_space<smem>>
    %272 = vector.broadcast %271 : f32 to vector<18x18xf32>
    %273 = arith.mulf %272, %258 : vector<18x18xf32>
    %274 = arith.addf %256, %273 : vector<18x18xf32>
    %c1_64 = arith.constant 1 : index
    %c1_65 = arith.constant 1 : index
    %c2_66 = arith.constant 2 : index
    %275 = vector.load %arg7[%c1_64, %c1_65, %c2_66] : memref<4x20x20xf32, #tpu.memory_space<vmem>>, vector<1x18x18xf32>
    %276 = vector.shape_cast %275 : vector<1x18x18xf32> to vector<18x18xf32>
    %c41 = arith.constant 41 : index
    %277 = memref.load %arg2[%c41] : memref<144xf32, #tpu.memory_space<smem>>
    %278 = vector.broadcast %277 : f32 to vector<18x18xf32>
    %279 = arith.mulf %278, %276 : vector<18x18xf32>
    %280 = arith.addf %262, %279 : vector<18x18xf32>
    %c50 = arith.constant 50 : index
    %281 = memref.load %arg2[%c50] : memref<144xf32, #tpu.memory_space<smem>>
    %282 = vector.broadcast %281 : f32 to vector<18x18xf32>
    %283 = arith.mulf %282, %276 : vector<18x18xf32>
    %284 = arith.addf %266, %283 : vector<18x18xf32>
    %c59 = arith.constant 59 : index
    %285 = memref.load %arg2[%c59] : memref<144xf32, #tpu.memory_space<smem>>
    %286 = vector.broadcast %285 : f32 to vector<18x18xf32>
    %287 = arith.mulf %286, %276 : vector<18x18xf32>
    %288 = arith.addf %270, %287 : vector<18x18xf32>
    %c68 = arith.constant 68 : index
    %289 = memref.load %arg2[%c68] : memref<144xf32, #tpu.memory_space<smem>>
    %290 = vector.broadcast %289 : f32 to vector<18x18xf32>
    %291 = arith.mulf %290, %276 : vector<18x18xf32>
    %292 = arith.addf %274, %291 : vector<18x18xf32>
    %c1_67 = arith.constant 1 : index
    %c2_68 = arith.constant 2 : index
    %c0_69 = arith.constant 0 : index
    %293 = vector.load %arg7[%c1_67, %c2_68, %c0_69] : memref<4x20x20xf32, #tpu.memory_space<vmem>>, vector<1x18x18xf32>
    %294 = vector.shape_cast %293 : vector<1x18x18xf32> to vector<18x18xf32>
    %c42 = arith.constant 42 : index
    %295 = memref.load %arg2[%c42] : memref<144xf32, #tpu.memory_space<smem>>
    %296 = vector.broadcast %295 : f32 to vector<18x18xf32>
    %297 = arith.mulf %296, %294 : vector<18x18xf32>
    %298 = arith.addf %280, %297 : vector<18x18xf32>
    %c51 = arith.constant 51 : index
    %299 = memref.load %arg2[%c51] : memref<144xf32, #tpu.memory_space<smem>>
    %300 = vector.broadcast %299 : f32 to vector<18x18xf32>
    %301 = arith.mulf %300, %294 : vector<18x18xf32>
    %302 = arith.addf %284, %301 : vector<18x18xf32>
    %c60 = arith.constant 60 : index
    %303 = memref.load %arg2[%c60] : memref<144xf32, #tpu.memory_space<smem>>
    %304 = vector.broadcast %303 : f32 to vector<18x18xf32>
    %305 = arith.mulf %304, %294 : vector<18x18xf32>
    %306 = arith.addf %288, %305 : vector<18x18xf32>
    %c69 = arith.constant 69 : index
    %307 = memref.load %arg2[%c69] : memref<144xf32, #tpu.memory_space<smem>>
    %308 = vector.broadcast %307 : f32 to vector<18x18xf32>
    %309 = arith.mulf %308, %294 : vector<18x18xf32>
    %310 = arith.addf %292, %309 : vector<18x18xf32>
    %c1_70 = arith.constant 1 : index
    %c2_71 = arith.constant 2 : index
    %c1_72 = arith.constant 1 : index
    %311 = vector.load %arg7[%c1_70, %c2_71, %c1_72] : memref<4x20x20xf32, #tpu.memory_space<vmem>>, vector<1x18x18xf32>
    %312 = vector.shape_cast %311 : vector<1x18x18xf32> to vector<18x18xf32>
    %c43 = arith.constant 43 : index
    %313 = memref.load %arg2[%c43] : memref<144xf32, #tpu.memory_space<smem>>
    %314 = vector.broadcast %313 : f32 to vector<18x18xf32>
    %315 = arith.mulf %314, %312 : vector<18x18xf32>
    %316 = arith.addf %298, %315 : vector<18x18xf32>
    %c52 = arith.constant 52 : index
    %317 = memref.load %arg2[%c52] : memref<144xf32, #tpu.memory_space<smem>>
    %318 = vector.broadcast %317 : f32 to vector<18x18xf32>
    %319 = arith.mulf %318, %312 : vector<18x18xf32>
    %320 = arith.addf %302, %319 : vector<18x18xf32>
    %c61 = arith.constant 61 : index
    %321 = memref.load %arg2[%c61] : memref<144xf32, #tpu.memory_space<smem>>
    %322 = vector.broadcast %321 : f32 to vector<18x18xf32>
    %323 = arith.mulf %322, %312 : vector<18x18xf32>
    %324 = arith.addf %306, %323 : vector<18x18xf32>
    %c70 = arith.constant 70 : index
    %325 = memref.load %arg2[%c70] : memref<144xf32, #tpu.memory_space<smem>>
    %326 = vector.broadcast %325 : f32 to vector<18x18xf32>
    %327 = arith.mulf %326, %312 : vector<18x18xf32>
    %328 = arith.addf %310, %327 : vector<18x18xf32>
    %c1_73 = arith.constant 1 : index
    %c2_74 = arith.constant 2 : index
    %c2_75 = arith.constant 2 : index
    %329 = vector.load %arg7[%c1_73, %c2_74, %c2_75] : memref<4x20x20xf32, #tpu.memory_space<vmem>>, vector<1x18x18xf32>
    %330 = vector.shape_cast %329 : vector<1x18x18xf32> to vector<18x18xf32>
    %c44 = arith.constant 44 : index
    %331 = memref.load %arg2[%c44] : memref<144xf32, #tpu.memory_space<smem>>
    %332 = vector.broadcast %331 : f32 to vector<18x18xf32>
    %333 = arith.mulf %332, %330 : vector<18x18xf32>
    %334 = arith.addf %316, %333 : vector<18x18xf32>
    %c53 = arith.constant 53 : index
    %335 = memref.load %arg2[%c53] : memref<144xf32, #tpu.memory_space<smem>>
    %336 = vector.broadcast %335 : f32 to vector<18x18xf32>
    %337 = arith.mulf %336, %330 : vector<18x18xf32>
    %338 = arith.addf %320, %337 : vector<18x18xf32>
    %c62 = arith.constant 62 : index
    %339 = memref.load %arg2[%c62] : memref<144xf32, #tpu.memory_space<smem>>
    %340 = vector.broadcast %339 : f32 to vector<18x18xf32>
    %341 = arith.mulf %340, %330 : vector<18x18xf32>
    %342 = arith.addf %324, %341 : vector<18x18xf32>
    %c71 = arith.constant 71 : index
    %343 = memref.load %arg2[%c71] : memref<144xf32, #tpu.memory_space<smem>>
    %344 = vector.broadcast %343 : f32 to vector<18x18xf32>
    %345 = arith.mulf %344, %330 : vector<18x18xf32>
    %346 = arith.addf %328, %345 : vector<18x18xf32>
    %c2_76 = arith.constant 2 : index
    %c0_77 = arith.constant 0 : index
    %c0_78 = arith.constant 0 : index
    %347 = vector.load %arg7[%c2_76, %c0_77, %c0_78] : memref<4x20x20xf32, #tpu.memory_space<vmem>>, vector<1x18x18xf32>
    %348 = vector.shape_cast %347 : vector<1x18x18xf32> to vector<18x18xf32>
    %c72 = arith.constant 72 : index
    %349 = memref.load %arg2[%c72] : memref<144xf32, #tpu.memory_space<smem>>
    %350 = vector.broadcast %349 : f32 to vector<18x18xf32>
    %351 = arith.mulf %350, %348 : vector<18x18xf32>
    %352 = arith.addf %334, %351 : vector<18x18xf32>
    %c81 = arith.constant 81 : index
    %353 = memref.load %arg2[%c81] : memref<144xf32, #tpu.memory_space<smem>>
    %354 = vector.broadcast %353 : f32 to vector<18x18xf32>
    %355 = arith.mulf %354, %348 : vector<18x18xf32>
    %356 = arith.addf %338, %355 : vector<18x18xf32>
    %c90 = arith.constant 90 : index
    %357 = memref.load %arg2[%c90] : memref<144xf32, #tpu.memory_space<smem>>
    %358 = vector.broadcast %357 : f32 to vector<18x18xf32>
    %359 = arith.mulf %358, %348 : vector<18x18xf32>
    %360 = arith.addf %342, %359 : vector<18x18xf32>
    %c99 = arith.constant 99 : index
    %361 = memref.load %arg2[%c99] : memref<144xf32, #tpu.memory_space<smem>>
    %362 = vector.broadcast %361 : f32 to vector<18x18xf32>
    %363 = arith.mulf %362, %348 : vector<18x18xf32>
    %364 = arith.addf %346, %363 : vector<18x18xf32>
    %c2_79 = arith.constant 2 : index
    %c0_80 = arith.constant 0 : index
    %c1_81 = arith.constant 1 : index
    %365 = vector.load %arg7[%c2_79, %c0_80, %c1_81] : memref<4x20x20xf32, #tpu.memory_space<vmem>>, vector<1x18x18xf32>
    %366 = vector.shape_cast %365 : vector<1x18x18xf32> to vector<18x18xf32>
    %c73 = arith.constant 73 : index
    %367 = memref.load %arg2[%c73] : memref<144xf32, #tpu.memory_space<smem>>
    %368 = vector.broadcast %367 : f32 to vector<18x18xf32>
    %369 = arith.mulf %368, %366 : vector<18x18xf32>
    %370 = arith.addf %352, %369 : vector<18x18xf32>
    %c82 = arith.constant 82 : index
    %371 = memref.load %arg2[%c82] : memref<144xf32, #tpu.memory_space<smem>>
    %372 = vector.broadcast %371 : f32 to vector<18x18xf32>
    %373 = arith.mulf %372, %366 : vector<18x18xf32>
    %374 = arith.addf %356, %373 : vector<18x18xf32>
    %c91 = arith.constant 91 : index
    %375 = memref.load %arg2[%c91] : memref<144xf32, #tpu.memory_space<smem>>
    %376 = vector.broadcast %375 : f32 to vector<18x18xf32>
    %377 = arith.mulf %376, %366 : vector<18x18xf32>
    %378 = arith.addf %360, %377 : vector<18x18xf32>
    %c100 = arith.constant 100 : index
    %379 = memref.load %arg2[%c100] : memref<144xf32, #tpu.memory_space<smem>>
    %380 = vector.broadcast %379 : f32 to vector<18x18xf32>
    %381 = arith.mulf %380, %366 : vector<18x18xf32>
    %382 = arith.addf %364, %381 : vector<18x18xf32>
    %c2_82 = arith.constant 2 : index
    %c0_83 = arith.constant 0 : index
    %c2_84 = arith.constant 2 : index
    %383 = vector.load %arg7[%c2_82, %c0_83, %c2_84] : memref<4x20x20xf32, #tpu.memory_space<vmem>>, vector<1x18x18xf32>
    %384 = vector.shape_cast %383 : vector<1x18x18xf32> to vector<18x18xf32>
    %c74 = arith.constant 74 : index
    %385 = memref.load %arg2[%c74] : memref<144xf32, #tpu.memory_space<smem>>
    %386 = vector.broadcast %385 : f32 to vector<18x18xf32>
    %387 = arith.mulf %386, %384 : vector<18x18xf32>
    %388 = arith.addf %370, %387 : vector<18x18xf32>
    %c83 = arith.constant 83 : index
    %389 = memref.load %arg2[%c83] : memref<144xf32, #tpu.memory_space<smem>>
    %390 = vector.broadcast %389 : f32 to vector<18x18xf32>
    %391 = arith.mulf %390, %384 : vector<18x18xf32>
    %392 = arith.addf %374, %391 : vector<18x18xf32>
    %c92 = arith.constant 92 : index
    %393 = memref.load %arg2[%c92] : memref<144xf32, #tpu.memory_space<smem>>
    %394 = vector.broadcast %393 : f32 to vector<18x18xf32>
    %395 = arith.mulf %394, %384 : vector<18x18xf32>
    %396 = arith.addf %378, %395 : vector<18x18xf32>
    %c101 = arith.constant 101 : index
    %397 = memref.load %arg2[%c101] : memref<144xf32, #tpu.memory_space<smem>>
    %398 = vector.broadcast %397 : f32 to vector<18x18xf32>
    %399 = arith.mulf %398, %384 : vector<18x18xf32>
    %400 = arith.addf %382, %399 : vector<18x18xf32>
    %c2_85 = arith.constant 2 : index
    %c1_86 = arith.constant 1 : index
    %c0_87 = arith.constant 0 : index
    %401 = vector.load %arg7[%c2_85, %c1_86, %c0_87] : memref<4x20x20xf32, #tpu.memory_space<vmem>>, vector<1x18x18xf32>
    %402 = vector.shape_cast %401 : vector<1x18x18xf32> to vector<18x18xf32>
    %c75 = arith.constant 75 : index
    %403 = memref.load %arg2[%c75] : memref<144xf32, #tpu.memory_space<smem>>
    %404 = vector.broadcast %403 : f32 to vector<18x18xf32>
    %405 = arith.mulf %404, %402 : vector<18x18xf32>
    %406 = arith.addf %388, %405 : vector<18x18xf32>
    %c84 = arith.constant 84 : index
    %407 = memref.load %arg2[%c84] : memref<144xf32, #tpu.memory_space<smem>>
    %408 = vector.broadcast %407 : f32 to vector<18x18xf32>
    %409 = arith.mulf %408, %402 : vector<18x18xf32>
    %410 = arith.addf %392, %409 : vector<18x18xf32>
    %c93 = arith.constant 93 : index
    %411 = memref.load %arg2[%c93] : memref<144xf32, #tpu.memory_space<smem>>
    %412 = vector.broadcast %411 : f32 to vector<18x18xf32>
    %413 = arith.mulf %412, %402 : vector<18x18xf32>
    %414 = arith.addf %396, %413 : vector<18x18xf32>
    %c102 = arith.constant 102 : index
    %415 = memref.load %arg2[%c102] : memref<144xf32, #tpu.memory_space<smem>>
    %416 = vector.broadcast %415 : f32 to vector<18x18xf32>
    %417 = arith.mulf %416, %402 : vector<18x18xf32>
    %418 = arith.addf %400, %417 : vector<18x18xf32>
    %c2_88 = arith.constant 2 : index
    %c1_89 = arith.constant 1 : index
    %c1_90 = arith.constant 1 : index
    %419 = vector.load %arg7[%c2_88, %c1_89, %c1_90] : memref<4x20x20xf32, #tpu.memory_space<vmem>>, vector<1x18x18xf32>
    %420 = vector.shape_cast %419 : vector<1x18x18xf32> to vector<18x18xf32>
    %c76 = arith.constant 76 : index
    %421 = memref.load %arg2[%c76] : memref<144xf32, #tpu.memory_space<smem>>
    %422 = vector.broadcast %421 : f32 to vector<18x18xf32>
    %423 = arith.mulf %422, %420 : vector<18x18xf32>
    %424 = arith.addf %406, %423 : vector<18x18xf32>
    %c85 = arith.constant 85 : index
    %425 = memref.load %arg2[%c85] : memref<144xf32, #tpu.memory_space<smem>>
    %426 = vector.broadcast %425 : f32 to vector<18x18xf32>
    %427 = arith.mulf %426, %420 : vector<18x18xf32>
    %428 = arith.addf %410, %427 : vector<18x18xf32>
    %c94 = arith.constant 94 : index
    %429 = memref.load %arg2[%c94] : memref<144xf32, #tpu.memory_space<smem>>
    %430 = vector.broadcast %429 : f32 to vector<18x18xf32>
    %431 = arith.mulf %430, %420 : vector<18x18xf32>
    %432 = arith.addf %414, %431 : vector<18x18xf32>
    %c103 = arith.constant 103 : index
    %433 = memref.load %arg2[%c103] : memref<144xf32, #tpu.memory_space<smem>>
    %434 = vector.broadcast %433 : f32 to vector<18x18xf32>
    %435 = arith.mulf %434, %420 : vector<18x18xf32>
    %436 = arith.addf %418, %435 : vector<18x18xf32>
    %c2_91 = arith.constant 2 : index
    %c1_92 = arith.constant 1 : index
    %c2_93 = arith.constant 2 : index
    %437 = vector.load %arg7[%c2_91, %c1_92, %c2_93] : memref<4x20x20xf32, #tpu.memory_space<vmem>>, vector<1x18x18xf32>
    %438 = vector.shape_cast %437 : vector<1x18x18xf32> to vector<18x18xf32>
    %c77 = arith.constant 77 : index
    %439 = memref.load %arg2[%c77] : memref<144xf32, #tpu.memory_space<smem>>
    %440 = vector.broadcast %439 : f32 to vector<18x18xf32>
    %441 = arith.mulf %440, %438 : vector<18x18xf32>
    %442 = arith.addf %424, %441 : vector<18x18xf32>
    %c86 = arith.constant 86 : index
    %443 = memref.load %arg2[%c86] : memref<144xf32, #tpu.memory_space<smem>>
    %444 = vector.broadcast %443 : f32 to vector<18x18xf32>
    %445 = arith.mulf %444, %438 : vector<18x18xf32>
    %446 = arith.addf %428, %445 : vector<18x18xf32>
    %c95 = arith.constant 95 : index
    %447 = memref.load %arg2[%c95] : memref<144xf32, #tpu.memory_space<smem>>
    %448 = vector.broadcast %447 : f32 to vector<18x18xf32>
    %449 = arith.mulf %448, %438 : vector<18x18xf32>
    %450 = arith.addf %432, %449 : vector<18x18xf32>
    %c104 = arith.constant 104 : index
    %451 = memref.load %arg2[%c104] : memref<144xf32, #tpu.memory_space<smem>>
    %452 = vector.broadcast %451 : f32 to vector<18x18xf32>
    %453 = arith.mulf %452, %438 : vector<18x18xf32>
    %454 = arith.addf %436, %453 : vector<18x18xf32>
    %c2_94 = arith.constant 2 : index
    %c2_95 = arith.constant 2 : index
    %c0_96 = arith.constant 0 : index
    %455 = vector.load %arg7[%c2_94, %c2_95, %c0_96] : memref<4x20x20xf32, #tpu.memory_space<vmem>>, vector<1x18x18xf32>
    %456 = vector.shape_cast %455 : vector<1x18x18xf32> to vector<18x18xf32>
    %c78 = arith.constant 78 : index
    %457 = memref.load %arg2[%c78] : memref<144xf32, #tpu.memory_space<smem>>
    %458 = vector.broadcast %457 : f32 to vector<18x18xf32>
    %459 = arith.mulf %458, %456 : vector<18x18xf32>
    %460 = arith.addf %442, %459 : vector<18x18xf32>
    %c87 = arith.constant 87 : index
    %461 = memref.load %arg2[%c87] : memref<144xf32, #tpu.memory_space<smem>>
    %462 = vector.broadcast %461 : f32 to vector<18x18xf32>
    %463 = arith.mulf %462, %456 : vector<18x18xf32>
    %464 = arith.addf %446, %463 : vector<18x18xf32>
    %c96 = arith.constant 96 : index
    %465 = memref.load %arg2[%c96] : memref<144xf32, #tpu.memory_space<smem>>
    %466 = vector.broadcast %465 : f32 to vector<18x18xf32>
    %467 = arith.mulf %466, %456 : vector<18x18xf32>
    %468 = arith.addf %450, %467 : vector<18x18xf32>
    %c105 = arith.constant 105 : index
    %469 = memref.load %arg2[%c105] : memref<144xf32, #tpu.memory_space<smem>>
    %470 = vector.broadcast %469 : f32 to vector<18x18xf32>
    %471 = arith.mulf %470, %456 : vector<18x18xf32>
    %472 = arith.addf %454, %471 : vector<18x18xf32>
    %c2_97 = arith.constant 2 : index
    %c2_98 = arith.constant 2 : index
    %c1_99 = arith.constant 1 : index
    %473 = vector.load %arg7[%c2_97, %c2_98, %c1_99] : memref<4x20x20xf32, #tpu.memory_space<vmem>>, vector<1x18x18xf32>
    %474 = vector.shape_cast %473 : vector<1x18x18xf32> to vector<18x18xf32>
    %c79 = arith.constant 79 : index
    %475 = memref.load %arg2[%c79] : memref<144xf32, #tpu.memory_space<smem>>
    %476 = vector.broadcast %475 : f32 to vector<18x18xf32>
    %477 = arith.mulf %476, %474 : vector<18x18xf32>
    %478 = arith.addf %460, %477 : vector<18x18xf32>
    %c88 = arith.constant 88 : index
    %479 = memref.load %arg2[%c88] : memref<144xf32, #tpu.memory_space<smem>>
    %480 = vector.broadcast %479 : f32 to vector<18x18xf32>
    %481 = arith.mulf %480, %474 : vector<18x18xf32>
    %482 = arith.addf %464, %481 : vector<18x18xf32>
    %c97 = arith.constant 97 : index
    %483 = memref.load %arg2[%c97] : memref<144xf32, #tpu.memory_space<smem>>
    %484 = vector.broadcast %483 : f32 to vector<18x18xf32>
    %485 = arith.mulf %484, %474 : vector<18x18xf32>
    %486 = arith.addf %468, %485 : vector<18x18xf32>
    %c106 = arith.constant 106 : index
    %487 = memref.load %arg2[%c106] : memref<144xf32, #tpu.memory_space<smem>>
    %488 = vector.broadcast %487 : f32 to vector<18x18xf32>
    %489 = arith.mulf %488, %474 : vector<18x18xf32>
    %490 = arith.addf %472, %489 : vector<18x18xf32>
    %c2_100 = arith.constant 2 : index
    %c2_101 = arith.constant 2 : index
    %c2_102 = arith.constant 2 : index
    %491 = vector.load %arg7[%c2_100, %c2_101, %c2_102] : memref<4x20x20xf32, #tpu.memory_space<vmem>>, vector<1x18x18xf32>
    %492 = vector.shape_cast %491 : vector<1x18x18xf32> to vector<18x18xf32>
    %c80 = arith.constant 80 : index
    %493 = memref.load %arg2[%c80] : memref<144xf32, #tpu.memory_space<smem>>
    %494 = vector.broadcast %493 : f32 to vector<18x18xf32>
    %495 = arith.mulf %494, %492 : vector<18x18xf32>
    %496 = arith.addf %478, %495 : vector<18x18xf32>
    %c89 = arith.constant 89 : index
    %497 = memref.load %arg2[%c89] : memref<144xf32, #tpu.memory_space<smem>>
    %498 = vector.broadcast %497 : f32 to vector<18x18xf32>
    %499 = arith.mulf %498, %492 : vector<18x18xf32>
    %500 = arith.addf %482, %499 : vector<18x18xf32>
    %c98 = arith.constant 98 : index
    %501 = memref.load %arg2[%c98] : memref<144xf32, #tpu.memory_space<smem>>
    %502 = vector.broadcast %501 : f32 to vector<18x18xf32>
    %503 = arith.mulf %502, %492 : vector<18x18xf32>
    %504 = arith.addf %486, %503 : vector<18x18xf32>
    %c107 = arith.constant 107 : index
    %505 = memref.load %arg2[%c107] : memref<144xf32, #tpu.memory_space<smem>>
    %506 = vector.broadcast %505 : f32 to vector<18x18xf32>
    %507 = arith.mulf %506, %492 : vector<18x18xf32>
    %508 = arith.addf %490, %507 : vector<18x18xf32>
    %c3_103 = arith.constant 3 : index
    %c0_104 = arith.constant 0 : index
    %c0_105 = arith.constant 0 : index
    %509 = vector.load %arg7[%c3_103, %c0_104, %c0_105] : memref<4x20x20xf32, #tpu.memory_space<vmem>>, vector<1x18x18xf32>
    %510 = vector.shape_cast %509 : vector<1x18x18xf32> to vector<18x18xf32>
    %c108 = arith.constant 108 : index
    %511 = memref.load %arg2[%c108] : memref<144xf32, #tpu.memory_space<smem>>
    %512 = vector.broadcast %511 : f32 to vector<18x18xf32>
    %513 = arith.mulf %512, %510 : vector<18x18xf32>
    %514 = arith.addf %496, %513 : vector<18x18xf32>
    %c117 = arith.constant 117 : index
    %515 = memref.load %arg2[%c117] : memref<144xf32, #tpu.memory_space<smem>>
    %516 = vector.broadcast %515 : f32 to vector<18x18xf32>
    %517 = arith.mulf %516, %510 : vector<18x18xf32>
    %518 = arith.addf %500, %517 : vector<18x18xf32>
    %c126 = arith.constant 126 : index
    %519 = memref.load %arg2[%c126] : memref<144xf32, #tpu.memory_space<smem>>
    %520 = vector.broadcast %519 : f32 to vector<18x18xf32>
    %521 = arith.mulf %520, %510 : vector<18x18xf32>
    %522 = arith.addf %504, %521 : vector<18x18xf32>
    %c135 = arith.constant 135 : index
    %523 = memref.load %arg2[%c135] : memref<144xf32, #tpu.memory_space<smem>>
    %524 = vector.broadcast %523 : f32 to vector<18x18xf32>
    %525 = arith.mulf %524, %510 : vector<18x18xf32>
    %526 = arith.addf %508, %525 : vector<18x18xf32>
    %c3_106 = arith.constant 3 : index
    %c0_107 = arith.constant 0 : index
    %c1_108 = arith.constant 1 : index
    %527 = vector.load %arg7[%c3_106, %c0_107, %c1_108] : memref<4x20x20xf32, #tpu.memory_space<vmem>>, vector<1x18x18xf32>
    %528 = vector.shape_cast %527 : vector<1x18x18xf32> to vector<18x18xf32>
    %c109 = arith.constant 109 : index
    %529 = memref.load %arg2[%c109] : memref<144xf32, #tpu.memory_space<smem>>
    %530 = vector.broadcast %529 : f32 to vector<18x18xf32>
    %531 = arith.mulf %530, %528 : vector<18x18xf32>
    %532 = arith.addf %514, %531 : vector<18x18xf32>
    %c118 = arith.constant 118 : index
    %533 = memref.load %arg2[%c118] : memref<144xf32, #tpu.memory_space<smem>>
    %534 = vector.broadcast %533 : f32 to vector<18x18xf32>
    %535 = arith.mulf %534, %528 : vector<18x18xf32>
    %536 = arith.addf %518, %535 : vector<18x18xf32>
    %c127 = arith.constant 127 : index
    %537 = memref.load %arg2[%c127] : memref<144xf32, #tpu.memory_space<smem>>
    %538 = vector.broadcast %537 : f32 to vector<18x18xf32>
    %539 = arith.mulf %538, %528 : vector<18x18xf32>
    %540 = arith.addf %522, %539 : vector<18x18xf32>
    %c136 = arith.constant 136 : index
    %541 = memref.load %arg2[%c136] : memref<144xf32, #tpu.memory_space<smem>>
    %542 = vector.broadcast %541 : f32 to vector<18x18xf32>
    %543 = arith.mulf %542, %528 : vector<18x18xf32>
    %544 = arith.addf %526, %543 : vector<18x18xf32>
    %c3_109 = arith.constant 3 : index
    %c0_110 = arith.constant 0 : index
    %c2_111 = arith.constant 2 : index
    %545 = vector.load %arg7[%c3_109, %c0_110, %c2_111] : memref<4x20x20xf32, #tpu.memory_space<vmem>>, vector<1x18x18xf32>
    %546 = vector.shape_cast %545 : vector<1x18x18xf32> to vector<18x18xf32>
    %c110 = arith.constant 110 : index
    %547 = memref.load %arg2[%c110] : memref<144xf32, #tpu.memory_space<smem>>
    %548 = vector.broadcast %547 : f32 to vector<18x18xf32>
    %549 = arith.mulf %548, %546 : vector<18x18xf32>
    %550 = arith.addf %532, %549 : vector<18x18xf32>
    %c119 = arith.constant 119 : index
    %551 = memref.load %arg2[%c119] : memref<144xf32, #tpu.memory_space<smem>>
    %552 = vector.broadcast %551 : f32 to vector<18x18xf32>
    %553 = arith.mulf %552, %546 : vector<18x18xf32>
    %554 = arith.addf %536, %553 : vector<18x18xf32>
    %c128 = arith.constant 128 : index
    %555 = memref.load %arg2[%c128] : memref<144xf32, #tpu.memory_space<smem>>
    %556 = vector.broadcast %555 : f32 to vector<18x18xf32>
    %557 = arith.mulf %556, %546 : vector<18x18xf32>
    %558 = arith.addf %540, %557 : vector<18x18xf32>
    %c137 = arith.constant 137 : index
    %559 = memref.load %arg2[%c137] : memref<144xf32, #tpu.memory_space<smem>>
    %560 = vector.broadcast %559 : f32 to vector<18x18xf32>
    %561 = arith.mulf %560, %546 : vector<18x18xf32>
    %562 = arith.addf %544, %561 : vector<18x18xf32>
    %c3_112 = arith.constant 3 : index
    %c1_113 = arith.constant 1 : index
    %c0_114 = arith.constant 0 : index
    %563 = vector.load %arg7[%c3_112, %c1_113, %c0_114] : memref<4x20x20xf32, #tpu.memory_space<vmem>>, vector<1x18x18xf32>
    %564 = vector.shape_cast %563 : vector<1x18x18xf32> to vector<18x18xf32>
    %c111 = arith.constant 111 : index
    %565 = memref.load %arg2[%c111] : memref<144xf32, #tpu.memory_space<smem>>
    %566 = vector.broadcast %565 : f32 to vector<18x18xf32>
    %567 = arith.mulf %566, %564 : vector<18x18xf32>
    %568 = arith.addf %550, %567 : vector<18x18xf32>
    %c120 = arith.constant 120 : index
    %569 = memref.load %arg2[%c120] : memref<144xf32, #tpu.memory_space<smem>>
    %570 = vector.broadcast %569 : f32 to vector<18x18xf32>
    %571 = arith.mulf %570, %564 : vector<18x18xf32>
    %572 = arith.addf %554, %571 : vector<18x18xf32>
    %c129 = arith.constant 129 : index
    %573 = memref.load %arg2[%c129] : memref<144xf32, #tpu.memory_space<smem>>
    %574 = vector.broadcast %573 : f32 to vector<18x18xf32>
    %575 = arith.mulf %574, %564 : vector<18x18xf32>
    %576 = arith.addf %558, %575 : vector<18x18xf32>
    %c138 = arith.constant 138 : index
    %577 = memref.load %arg2[%c138] : memref<144xf32, #tpu.memory_space<smem>>
    %578 = vector.broadcast %577 : f32 to vector<18x18xf32>
    %579 = arith.mulf %578, %564 : vector<18x18xf32>
    %580 = arith.addf %562, %579 : vector<18x18xf32>
    %c3_115 = arith.constant 3 : index
    %c1_116 = arith.constant 1 : index
    %c1_117 = arith.constant 1 : index
    %581 = vector.load %arg7[%c3_115, %c1_116, %c1_117] : memref<4x20x20xf32, #tpu.memory_space<vmem>>, vector<1x18x18xf32>
    %582 = vector.shape_cast %581 : vector<1x18x18xf32> to vector<18x18xf32>
    %c112 = arith.constant 112 : index
    %583 = memref.load %arg2[%c112] : memref<144xf32, #tpu.memory_space<smem>>
    %584 = vector.broadcast %583 : f32 to vector<18x18xf32>
    %585 = arith.mulf %584, %582 : vector<18x18xf32>
    %586 = arith.addf %568, %585 : vector<18x18xf32>
    %c121 = arith.constant 121 : index
    %587 = memref.load %arg2[%c121] : memref<144xf32, #tpu.memory_space<smem>>
    %588 = vector.broadcast %587 : f32 to vector<18x18xf32>
    %589 = arith.mulf %588, %582 : vector<18x18xf32>
    %590 = arith.addf %572, %589 : vector<18x18xf32>
    %c130 = arith.constant 130 : index
    %591 = memref.load %arg2[%c130] : memref<144xf32, #tpu.memory_space<smem>>
    %592 = vector.broadcast %591 : f32 to vector<18x18xf32>
    %593 = arith.mulf %592, %582 : vector<18x18xf32>
    %594 = arith.addf %576, %593 : vector<18x18xf32>
    %c139 = arith.constant 139 : index
    %595 = memref.load %arg2[%c139] : memref<144xf32, #tpu.memory_space<smem>>
    %596 = vector.broadcast %595 : f32 to vector<18x18xf32>
    %597 = arith.mulf %596, %582 : vector<18x18xf32>
    %598 = arith.addf %580, %597 : vector<18x18xf32>
    %c3_118 = arith.constant 3 : index
    %c1_119 = arith.constant 1 : index
    %c2_120 = arith.constant 2 : index
    %599 = vector.load %arg7[%c3_118, %c1_119, %c2_120] : memref<4x20x20xf32, #tpu.memory_space<vmem>>, vector<1x18x18xf32>
    %600 = vector.shape_cast %599 : vector<1x18x18xf32> to vector<18x18xf32>
    %c113 = arith.constant 113 : index
    %601 = memref.load %arg2[%c113] : memref<144xf32, #tpu.memory_space<smem>>
    %602 = vector.broadcast %601 : f32 to vector<18x18xf32>
    %603 = arith.mulf %602, %600 : vector<18x18xf32>
    %604 = arith.addf %586, %603 : vector<18x18xf32>
    %c122 = arith.constant 122 : index
    %605 = memref.load %arg2[%c122] : memref<144xf32, #tpu.memory_space<smem>>
    %606 = vector.broadcast %605 : f32 to vector<18x18xf32>
    %607 = arith.mulf %606, %600 : vector<18x18xf32>
    %608 = arith.addf %590, %607 : vector<18x18xf32>
    %c131 = arith.constant 131 : index
    %609 = memref.load %arg2[%c131] : memref<144xf32, #tpu.memory_space<smem>>
    %610 = vector.broadcast %609 : f32 to vector<18x18xf32>
    %611 = arith.mulf %610, %600 : vector<18x18xf32>
    %612 = arith.addf %594, %611 : vector<18x18xf32>
    %c140 = arith.constant 140 : index
    %613 = memref.load %arg2[%c140] : memref<144xf32, #tpu.memory_space<smem>>
    %614 = vector.broadcast %613 : f32 to vector<18x18xf32>
    %615 = arith.mulf %614, %600 : vector<18x18xf32>
    %616 = arith.addf %598, %615 : vector<18x18xf32>
    %c3_121 = arith.constant 3 : index
    %c2_122 = arith.constant 2 : index
    %c0_123 = arith.constant 0 : index
    %617 = vector.load %arg7[%c3_121, %c2_122, %c0_123] : memref<4x20x20xf32, #tpu.memory_space<vmem>>, vector<1x18x18xf32>
    %618 = vector.shape_cast %617 : vector<1x18x18xf32> to vector<18x18xf32>
    %c114 = arith.constant 114 : index
    %619 = memref.load %arg2[%c114] : memref<144xf32, #tpu.memory_space<smem>>
    %620 = vector.broadcast %619 : f32 to vector<18x18xf32>
    %621 = arith.mulf %620, %618 : vector<18x18xf32>
    %622 = arith.addf %604, %621 : vector<18x18xf32>
    %c123 = arith.constant 123 : index
    %623 = memref.load %arg2[%c123] : memref<144xf32, #tpu.memory_space<smem>>
    %624 = vector.broadcast %623 : f32 to vector<18x18xf32>
    %625 = arith.mulf %624, %618 : vector<18x18xf32>
    %626 = arith.addf %608, %625 : vector<18x18xf32>
    %c132 = arith.constant 132 : index
    %627 = memref.load %arg2[%c132] : memref<144xf32, #tpu.memory_space<smem>>
    %628 = vector.broadcast %627 : f32 to vector<18x18xf32>
    %629 = arith.mulf %628, %618 : vector<18x18xf32>
    %630 = arith.addf %612, %629 : vector<18x18xf32>
    %c141 = arith.constant 141 : index
    %631 = memref.load %arg2[%c141] : memref<144xf32, #tpu.memory_space<smem>>
    %632 = vector.broadcast %631 : f32 to vector<18x18xf32>
    %633 = arith.mulf %632, %618 : vector<18x18xf32>
    %634 = arith.addf %616, %633 : vector<18x18xf32>
    %c3_124 = arith.constant 3 : index
    %c2_125 = arith.constant 2 : index
    %c1_126 = arith.constant 1 : index
    %635 = vector.load %arg7[%c3_124, %c2_125, %c1_126] : memref<4x20x20xf32, #tpu.memory_space<vmem>>, vector<1x18x18xf32>
    %636 = vector.shape_cast %635 : vector<1x18x18xf32> to vector<18x18xf32>
    %c115 = arith.constant 115 : index
    %637 = memref.load %arg2[%c115] : memref<144xf32, #tpu.memory_space<smem>>
    %638 = vector.broadcast %637 : f32 to vector<18x18xf32>
    %639 = arith.mulf %638, %636 : vector<18x18xf32>
    %640 = arith.addf %622, %639 : vector<18x18xf32>
    %c124 = arith.constant 124 : index
    %641 = memref.load %arg2[%c124] : memref<144xf32, #tpu.memory_space<smem>>
    %642 = vector.broadcast %641 : f32 to vector<18x18xf32>
    %643 = arith.mulf %642, %636 : vector<18x18xf32>
    %644 = arith.addf %626, %643 : vector<18x18xf32>
    %c133 = arith.constant 133 : index
    %645 = memref.load %arg2[%c133] : memref<144xf32, #tpu.memory_space<smem>>
    %646 = vector.broadcast %645 : f32 to vector<18x18xf32>
    %647 = arith.mulf %646, %636 : vector<18x18xf32>
    %648 = arith.addf %630, %647 : vector<18x18xf32>
    %c142 = arith.constant 142 : index
    %649 = memref.load %arg2[%c142] : memref<144xf32, #tpu.memory_space<smem>>
    %650 = vector.broadcast %649 : f32 to vector<18x18xf32>
    %651 = arith.mulf %650, %636 : vector<18x18xf32>
    %652 = arith.addf %634, %651 : vector<18x18xf32>
    %c3_127 = arith.constant 3 : index
    %c2_128 = arith.constant 2 : index
    %c2_129 = arith.constant 2 : index
    %653 = vector.load %arg7[%c3_127, %c2_128, %c2_129] : memref<4x20x20xf32, #tpu.memory_space<vmem>>, vector<1x18x18xf32>
    %654 = vector.shape_cast %653 : vector<1x18x18xf32> to vector<18x18xf32>
    %c116 = arith.constant 116 : index
    %655 = memref.load %arg2[%c116] : memref<144xf32, #tpu.memory_space<smem>>
    %656 = vector.broadcast %655 : f32 to vector<18x18xf32>
    %657 = arith.mulf %656, %654 : vector<18x18xf32>
    %658 = arith.addf %640, %657 : vector<18x18xf32>
    %c125 = arith.constant 125 : index
    %659 = memref.load %arg2[%c125] : memref<144xf32, #tpu.memory_space<smem>>
    %660 = vector.broadcast %659 : f32 to vector<18x18xf32>
    %661 = arith.mulf %660, %654 : vector<18x18xf32>
    %662 = arith.addf %644, %661 : vector<18x18xf32>
    %c134 = arith.constant 134 : index
    %663 = memref.load %arg2[%c134] : memref<144xf32, #tpu.memory_space<smem>>
    %664 = vector.broadcast %663 : f32 to vector<18x18xf32>
    %665 = arith.mulf %664, %654 : vector<18x18xf32>
    %666 = arith.addf %648, %665 : vector<18x18xf32>
    %c143 = arith.constant 143 : index
    %667 = memref.load %arg2[%c143] : memref<144xf32, #tpu.memory_space<smem>>
    %668 = vector.broadcast %667 : f32 to vector<18x18xf32>
    %669 = arith.mulf %668, %654 : vector<18x18xf32>
    %670 = arith.addf %652, %669 : vector<18x18xf32>
    %c0_130 = arith.constant 0 : index
    %c2_131 = arith.constant 2 : index
    %c2_132 = arith.constant 2 : index
    %671 = vector.load %arg8[%c0_130, %c2_131, %c2_132] : memref<4x22x22xf32, #tpu.memory_space<vmem>>, vector<1x18x18xf32>
    %672 = vector.shape_cast %671 : vector<1x18x18xf32> to vector<18x18xf32>
    %673 = vector.shape_cast %658 : vector<18x18xf32> to vector<1x18x18xf32>
    tpu.vector_store %arg8[%c0_130, %c2_131, %c2_132], %673 {strides = array<i32>} : memref<4x22x22xf32, #tpu.memory_space<vmem>>, vector<1x18x18xf32>,
    %c1_133 = arith.constant 1 : index
    %c2_134 = arith.constant 2 : index
    %c2_135 = arith.constant 2 : index
    %674 = vector.load %arg8[%c1_133, %c2_134, %c2_135] : memref<4x22x22xf32, #tpu.memory_space<vmem>>, vector<1x18x18xf32>
    %675 = vector.shape_cast %674 : vector<1x18x18xf32> to vector<18x18xf32>
    %676 = vector.shape_cast %662 : vector<18x18xf32> to vector<1x18x18xf32>
    tpu.vector_store %arg8[%c1_133, %c2_134, %c2_135], %676 {strides = array<i32>} : memref<4x22x22xf32, #tpu.memory_space<vmem>>, vector<1x18x18xf32>,
    %c2_136 = arith.constant 2 : index
    %c2_137 = arith.constant 2 : index
    %c2_138 = arith.constant 2 : index
    %677 = vector.load %arg8[%c2_136, %c2_137, %c2_138] : memref<4x22x22xf32, #tpu.memory_space<vmem>>, vector<1x18x18xf32>
    %678 = vector.shape_cast %677 : vector<1x18x18xf32> to vector<18x18xf32>
    %679 = vector.shape_cast %666 : vector<18x18xf32> to vector<1x18x18xf32>
    tpu.vector_store %arg8[%c2_136, %c2_137, %c2_138], %679 {strides = array<i32>} : memref<4x22x22xf32, #tpu.memory_space<vmem>>, vector<1x18x18xf32>,
    %c3_139 = arith.constant 3 : index
    %c2_140 = arith.constant 2 : index
    %c2_141 = arith.constant 2 : index
    %680 = vector.load %arg8[%c3_139, %c2_140, %c2_141] : memref<4x22x22xf32, #tpu.memory_space<vmem>>, vector<1x18x18xf32>
    %681 = vector.shape_cast %680 : vector<1x18x18xf32> to vector<18x18xf32>
    %682 = vector.shape_cast %670 : vector<18x18xf32> to vector<1x18x18xf32>
    tpu.vector_store %arg8[%c3_139, %c2_140, %c2_141], %682 {strides = array<i32>} : memref<4x22x22xf32, #tpu.memory_space<vmem>>, vector<1x18x18xf32>,
    %c0_142 = arith.constant 0 : index
    %683 = memref.load %arg5[%c0_142] : memref<1xf32, #tpu.memory_space<smem>>
    %cst_143 = arith.constant 0.000000e+00 : f32
    %684 = vector.broadcast %cst_143 : f32 to vector<20x20xf32>
    %685 = vector.broadcast %683 : f32 to vector<20x20xf32>
    %686 = arith.addf %685, %684 : vector<20x20xf32>
    %c0_144 = arith.constant 0 : index
    %c0_145 = arith.constant 0 : index
    %c0_146 = arith.constant 0 : index
    %687 = vector.load %arg8[%c0_144, %c0_145, %c0_146] : memref<4x22x22xf32, #tpu.memory_space<vmem>>, vector<1x20x20xf32>
    %688 = vector.shape_cast %687 : vector<1x20x20xf32> to vector<20x20xf32>
    %c0_147 = arith.constant 0 : index
    %689 = memref.load %arg4[%c0_147] : memref<36xf32, #tpu.memory_space<smem>>
    %690 = vector.broadcast %689 : f32 to vector<20x20xf32>
    %691 = arith.mulf %690, %688 : vector<20x20xf32>
    %692 = arith.addf %686, %691 : vector<20x20xf32>
    %c0_148 = arith.constant 0 : index
    %c0_149 = arith.constant 0 : index
    %c1_150 = arith.constant 1 : index
    %693 = vector.load %arg8[%c0_148, %c0_149, %c1_150] : memref<4x22x22xf32, #tpu.memory_space<vmem>>, vector<1x20x20xf32>
    %694 = vector.shape_cast %693 : vector<1x20x20xf32> to vector<20x20xf32>
    %c1_151 = arith.constant 1 : index
    %695 = memref.load %arg4[%c1_151] : memref<36xf32, #tpu.memory_space<smem>>
    %696 = vector.broadcast %695 : f32 to vector<20x20xf32>
    %697 = arith.mulf %696, %694 : vector<20x20xf32>
    %698 = arith.addf %692, %697 : vector<20x20xf32>
    %c0_152 = arith.constant 0 : index
    %c0_153 = arith.constant 0 : index
    %c2_154 = arith.constant 2 : index
    %699 = vector.load %arg8[%c0_152, %c0_153, %c2_154] : memref<4x22x22xf32, #tpu.memory_space<vmem>>, vector<1x20x20xf32>
    %700 = vector.shape_cast %699 : vector<1x20x20xf32> to vector<20x20xf32>
    %c2_155 = arith.constant 2 : index
    %701 = memref.load %arg4[%c2_155] : memref<36xf32, #tpu.memory_space<smem>>
    %702 = vector.broadcast %701 : f32 to vector<20x20xf32>
    %703 = arith.mulf %702, %700 : vector<20x20xf32>
    %704 = arith.addf %698, %703 : vector<20x20xf32>
    %c0_156 = arith.constant 0 : index
    %c1_157 = arith.constant 1 : index
    %c0_158 = arith.constant 0 : index
    %705 = vector.load %arg8[%c0_156, %c1_157, %c0_158] : memref<4x22x22xf32, #tpu.memory_space<vmem>>, vector<1x20x20xf32>
    %706 = vector.shape_cast %705 : vector<1x20x20xf32> to vector<20x20xf32>
    %c3_159 = arith.constant 3 : index
    %707 = memref.load %arg4[%c3_159] : memref<36xf32, #tpu.memory_space<smem>>
    %708 = vector.broadcast %707 : f32 to vector<20x20xf32>
    %709 = arith.mulf %708, %706 : vector<20x20xf32>
    %710 = arith.addf %704, %709 : vector<20x20xf32>
    %c0_160 = arith.constant 0 : index
    %c1_161 = arith.constant 1 : index
    %c1_162 = arith.constant 1 : index
    %711 = vector.load %arg8[%c0_160, %c1_161, %c1_162] : memref<4x22x22xf32, #tpu.memory_space<vmem>>, vector<1x20x20xf32>
    %712 = vector.shape_cast %711 : vector<1x20x20xf32> to vector<20x20xf32>
    %c4_163 = arith.constant 4 : index
    %713 = memref.load %arg4[%c4_163] : memref<36xf32, #tpu.memory_space<smem>>
    %714 = vector.broadcast %713 : f32 to vector<20x20xf32>
    %715 = arith.mulf %714, %712 : vector<20x20xf32>
    %716 = arith.addf %710, %715 : vector<20x20xf32>
    %c0_164 = arith.constant 0 : index
    %c1_165 = arith.constant 1 : index
    %c2_166 = arith.constant 2 : index
    %717 = vector.load %arg8[%c0_164, %c1_165, %c2_166] : memref<4x22x22xf32, #tpu.memory_space<vmem>>, vector<1x20x20xf32>
    %718 = vector.shape_cast %717 : vector<1x20x20xf32> to vector<20x20xf32>
    %c5_167 = arith.constant 5 : index
    %719 = memref.load %arg4[%c5_167] : memref<36xf32, #tpu.memory_space<smem>>
    %720 = vector.broadcast %719 : f32 to vector<20x20xf32>
    %721 = arith.mulf %720, %718 : vector<20x20xf32>
    %722 = arith.addf %716, %721 : vector<20x20xf32>
    %c0_168 = arith.constant 0 : index
    %c2_169 = arith.constant 2 : index
    %c0_170 = arith.constant 0 : index
    %723 = vector.load %arg8[%c0_168, %c2_169, %c0_170] : memref<4x22x22xf32, #tpu.memory_space<vmem>>, vector<1x20x20xf32>
    %724 = vector.shape_cast %723 : vector<1x20x20xf32> to vector<20x20xf32>
    %c6_171 = arith.constant 6 : index
    %725 = memref.load %arg4[%c6_171] : memref<36xf32, #tpu.memory_space<smem>>
    %726 = vector.broadcast %725 : f32 to vector<20x20xf32>
    %727 = arith.mulf %726, %724 : vector<20x20xf32>
    %728 = arith.addf %722, %727 : vector<20x20xf32>
    %c0_172 = arith.constant 0 : index
    %c2_173 = arith.constant 2 : index
    %c1_174 = arith.constant 1 : index
    %729 = vector.load %arg8[%c0_172, %c2_173, %c1_174] : memref<4x22x22xf32, #tpu.memory_space<vmem>>, vector<1x20x20xf32>
    %730 = vector.shape_cast %729 : vector<1x20x20xf32> to vector<20x20xf32>
    %c7_175 = arith.constant 7 : index
    %731 = memref.load %arg4[%c7_175] : memref<36xf32, #tpu.memory_space<smem>>
    %732 = vector.broadcast %731 : f32 to vector<20x20xf32>
    %733 = arith.mulf %732, %730 : vector<20x20xf32>
    %734 = arith.addf %728, %733 : vector<20x20xf32>
    %c0_176 = arith.constant 0 : index
    %c2_177 = arith.constant 2 : index
    %c2_178 = arith.constant 2 : index
    %735 = vector.load %arg8[%c0_176, %c2_177, %c2_178] : memref<4x22x22xf32, #tpu.memory_space<vmem>>, vector<1x20x20xf32>
    %736 = vector.shape_cast %735 : vector<1x20x20xf32> to vector<20x20xf32>
    %c8_179 = arith.constant 8 : index
    %737 = memref.load %arg4[%c8_179] : memref<36xf32, #tpu.memory_space<smem>>
    %738 = vector.broadcast %737 : f32 to vector<20x20xf32>
    %739 = arith.mulf %738, %736 : vector<20x20xf32>
    %740 = arith.addf %734, %739 : vector<20x20xf32>
    %c1_180 = arith.constant 1 : index
    %c0_181 = arith.constant 0 : index
    %c0_182 = arith.constant 0 : index
    %741 = vector.load %arg8[%c1_180, %c0_181, %c0_182] : memref<4x22x22xf32, #tpu.memory_space<vmem>>, vector<1x20x20xf32>
    %742 = vector.shape_cast %741 : vector<1x20x20xf32> to vector<20x20xf32>
    %c9_183 = arith.constant 9 : index
    %743 = memref.load %arg4[%c9_183] : memref<36xf32, #tpu.memory_space<smem>>
    %744 = vector.broadcast %743 : f32 to vector<20x20xf32>
    %745 = arith.mulf %744, %742 : vector<20x20xf32>
    %746 = arith.addf %740, %745 : vector<20x20xf32>
    %c1_184 = arith.constant 1 : index
    %c0_185 = arith.constant 0 : index
    %c1_186 = arith.constant 1 : index
    %747 = vector.load %arg8[%c1_184, %c0_185, %c1_186] : memref<4x22x22xf32, #tpu.memory_space<vmem>>, vector<1x20x20xf32>
    %748 = vector.shape_cast %747 : vector<1x20x20xf32> to vector<20x20xf32>
    %c10_187 = arith.constant 10 : index
    %749 = memref.load %arg4[%c10_187] : memref<36xf32, #tpu.memory_space<smem>>
    %750 = vector.broadcast %749 : f32 to vector<20x20xf32>
    %751 = arith.mulf %750, %748 : vector<20x20xf32>
    %752 = arith.addf %746, %751 : vector<20x20xf32>
    %c1_188 = arith.constant 1 : index
    %c0_189 = arith.constant 0 : index
    %c2_190 = arith.constant 2 : index
    %753 = vector.load %arg8[%c1_188, %c0_189, %c2_190] : memref<4x22x22xf32, #tpu.memory_space<vmem>>, vector<1x20x20xf32>
    %754 = vector.shape_cast %753 : vector<1x20x20xf32> to vector<20x20xf32>
    %c11_191 = arith.constant 11 : index
    %755 = memref.load %arg4[%c11_191] : memref<36xf32, #tpu.memory_space<smem>>
    %756 = vector.broadcast %755 : f32 to vector<20x20xf32>
    %757 = arith.mulf %756, %754 : vector<20x20xf32>
    %758 = arith.addf %752, %757 : vector<20x20xf32>
    %c1_192 = arith.constant 1 : index
    %c1_193 = arith.constant 1 : index
    %c0_194 = arith.constant 0 : index
    %759 = vector.load %arg8[%c1_192, %c1_193, %c0_194] : memref<4x22x22xf32, #tpu.memory_space<vmem>>, vector<1x20x20xf32>
    %760 = vector.shape_cast %759 : vector<1x20x20xf32> to vector<20x20xf32>
    %c12_195 = arith.constant 12 : index
    %761 = memref.load %arg4[%c12_195] : memref<36xf32, #tpu.memory_space<smem>>
    %762 = vector.broadcast %761 : f32 to vector<20x20xf32>
    %763 = arith.mulf %762, %760 : vector<20x20xf32>
    %764 = arith.addf %758, %763 : vector<20x20xf32>
    %c1_196 = arith.constant 1 : index
    %c1_197 = arith.constant 1 : index
    %c1_198 = arith.constant 1 : index
    %765 = vector.load %arg8[%c1_196, %c1_197, %c1_198] : memref<4x22x22xf32, #tpu.memory_space<vmem>>, vector<1x20x20xf32>
    %766 = vector.shape_cast %765 : vector<1x20x20xf32> to vector<20x20xf32>
    %c13_199 = arith.constant 13 : index
    %767 = memref.load %arg4[%c13_199] : memref<36xf32, #tpu.memory_space<smem>>
    %768 = vector.broadcast %767 : f32 to vector<20x20xf32>
    %769 = arith.mulf %768, %766 : vector<20x20xf32>
    %770 = arith.addf %764, %769 : vector<20x20xf32>
    %c1_200 = arith.constant 1 : index
    %c1_201 = arith.constant 1 : index
    %c2_202 = arith.constant 2 : index
    %771 = vector.load %arg8[%c1_200, %c1_201, %c2_202] : memref<4x22x22xf32, #tpu.memory_space<vmem>>, vector<1x20x20xf32>
    %772 = vector.shape_cast %771 : vector<1x20x20xf32> to vector<20x20xf32>
    %c14_203 = arith.constant 14 : index
    %773 = memref.load %arg4[%c14_203] : memref<36xf32, #tpu.memory_space<smem>>
    %774 = vector.broadcast %773 : f32 to vector<20x20xf32>
    %775 = arith.mulf %774, %772 : vector<20x20xf32>
    %776 = arith.addf %770, %775 : vector<20x20xf32>
    %c1_204 = arith.constant 1 : index
    %c2_205 = arith.constant 2 : index
    %c0_206 = arith.constant 0 : index
    %777 = vector.load %arg8[%c1_204, %c2_205, %c0_206] : memref<4x22x22xf32, #tpu.memory_space<vmem>>, vector<1x20x20xf32>
    %778 = vector.shape_cast %777 : vector<1x20x20xf32> to vector<20x20xf32>
    %c15_207 = arith.constant 15 : index
    %779 = memref.load %arg4[%c15_207] : memref<36xf32, #tpu.memory_space<smem>>
    %780 = vector.broadcast %779 : f32 to vector<20x20xf32>
    %781 = arith.mulf %780, %778 : vector<20x20xf32>
    %782 = arith.addf %776, %781 : vector<20x20xf32>
    %c1_208 = arith.constant 1 : index
    %c2_209 = arith.constant 2 : index
    %c1_210 = arith.constant 1 : index
    %783 = vector.load %arg8[%c1_208, %c2_209, %c1_210] : memref<4x22x22xf32, #tpu.memory_space<vmem>>, vector<1x20x20xf32>
    %784 = vector.shape_cast %783 : vector<1x20x20xf32> to vector<20x20xf32>
    %c16_211 = arith.constant 16 : index
    %785 = memref.load %arg4[%c16_211] : memref<36xf32, #tpu.memory_space<smem>>
    %786 = vector.broadcast %785 : f32 to vector<20x20xf32>
    %787 = arith.mulf %786, %784 : vector<20x20xf32>
    %788 = arith.addf %782, %787 : vector<20x20xf32>
    %c1_212 = arith.constant 1 : index
    %c2_213 = arith.constant 2 : index
    %c2_214 = arith.constant 2 : index
    %789 = vector.load %arg8[%c1_212, %c2_213, %c2_214] : memref<4x22x22xf32, #tpu.memory_space<vmem>>, vector<1x20x20xf32>
    %790 = vector.shape_cast %789 : vector<1x20x20xf32> to vector<20x20xf32>
    %c17_215 = arith.constant 17 : index
    %791 = memref.load %arg4[%c17_215] : memref<36xf32, #tpu.memory_space<smem>>
    %792 = vector.broadcast %791 : f32 to vector<20x20xf32>
    %793 = arith.mulf %792, %790 : vector<20x20xf32>
    %794 = arith.addf %788, %793 : vector<20x20xf32>
    %c2_216 = arith.constant 2 : index
    %c0_217 = arith.constant 0 : index
    %c0_218 = arith.constant 0 : index
    %795 = vector.load %arg8[%c2_216, %c0_217, %c0_218] : memref<4x22x22xf32, #tpu.memory_space<vmem>>, vector<1x20x20xf32>
    %796 = vector.shape_cast %795 : vector<1x20x20xf32> to vector<20x20xf32>
    %c18_219 = arith.constant 18 : index
    %797 = memref.load %arg4[%c18_219] : memref<36xf32, #tpu.memory_space<smem>>
    %798 = vector.broadcast %797 : f32 to vector<20x20xf32>
    %799 = arith.mulf %798, %796 : vector<20x20xf32>
    %800 = arith.addf %794, %799 : vector<20x20xf32>
    %c2_220 = arith.constant 2 : index
    %c0_221 = arith.constant 0 : index
    %c1_222 = arith.constant 1 : index
    %801 = vector.load %arg8[%c2_220, %c0_221, %c1_222] : memref<4x22x22xf32, #tpu.memory_space<vmem>>, vector<1x20x20xf32>
    %802 = vector.shape_cast %801 : vector<1x20x20xf32> to vector<20x20xf32>
    %c19_223 = arith.constant 19 : index
    %803 = memref.load %arg4[%c19_223] : memref<36xf32, #tpu.memory_space<smem>>
    %804 = vector.broadcast %803 : f32 to vector<20x20xf32>
    %805 = arith.mulf %804, %802 : vector<20x20xf32>
    %806 = arith.addf %800, %805 : vector<20x20xf32>
    %c2_224 = arith.constant 2 : index
    %c0_225 = arith.constant 0 : index
    %c2_226 = arith.constant 2 : index
    %807 = vector.load %arg8[%c2_224, %c0_225, %c2_226] : memref<4x22x22xf32, #tpu.memory_space<vmem>>, vector<1x20x20xf32>
    %808 = vector.shape_cast %807 : vector<1x20x20xf32> to vector<20x20xf32>
    %c20_227 = arith.constant 20 : index
    %809 = memref.load %arg4[%c20_227] : memref<36xf32, #tpu.memory_space<smem>>
    %810 = vector.broadcast %809 : f32 to vector<20x20xf32>
    %811 = arith.mulf %810, %808 : vector<20x20xf32>
    %812 = arith.addf %806, %811 : vector<20x20xf32>
    %c2_228 = arith.constant 2 : index
    %c1_229 = arith.constant 1 : index
    %c0_230 = arith.constant 0 : index
    %813 = vector.load %arg8[%c2_228, %c1_229, %c0_230] : memref<4x22x22xf32, #tpu.memory_space<vmem>>, vector<1x20x20xf32>
    %814 = vector.shape_cast %813 : vector<1x20x20xf32> to vector<20x20xf32>
    %c21_231 = arith.constant 21 : index
    %815 = memref.load %arg4[%c21_231] : memref<36xf32, #tpu.memory_space<smem>>
    %816 = vector.broadcast %815 : f32 to vector<20x20xf32>
    %817 = arith.mulf %816, %814 : vector<20x20xf32>
    %818 = arith.addf %812, %817 : vector<20x20xf32>
    %c2_232 = arith.constant 2 : index
    %c1_233 = arith.constant 1 : index
    %c1_234 = arith.constant 1 : index
    %819 = vector.load %arg8[%c2_232, %c1_233, %c1_234] : memref<4x22x22xf32, #tpu.memory_space<vmem>>, vector<1x20x20xf32>
    %820 = vector.shape_cast %819 : vector<1x20x20xf32> to vector<20x20xf32>
    %c22_235 = arith.constant 22 : index
    %821 = memref.load %arg4[%c22_235] : memref<36xf32, #tpu.memory_space<smem>>
    %822 = vector.broadcast %821 : f32 to vector<20x20xf32>
    %823 = arith.mulf %822, %820 : vector<20x20xf32>
    %824 = arith.addf %818, %823 : vector<20x20xf32>
    %c2_236 = arith.constant 2 : index
    %c1_237 = arith.constant 1 : index
    %c2_238 = arith.constant 2 : index
    %825 = vector.load %arg8[%c2_236, %c1_237, %c2_238] : memref<4x22x22xf32, #tpu.memory_space<vmem>>, vector<1x20x20xf32>
    %826 = vector.shape_cast %825 : vector<1x20x20xf32> to vector<20x20xf32>
    %c23_239 = arith.constant 23 : index
    %827 = memref.load %arg4[%c23_239] : memref<36xf32, #tpu.memory_space<smem>>
    %828 = vector.broadcast %827 : f32 to vector<20x20xf32>
    %829 = arith.mulf %828, %826 : vector<20x20xf32>
    %830 = arith.addf %824, %829 : vector<20x20xf32>
    %c2_240 = arith.constant 2 : index
    %c2_241 = arith.constant 2 : index
    %c0_242 = arith.constant 0 : index
    %831 = vector.load %arg8[%c2_240, %c2_241, %c0_242] : memref<4x22x22xf32, #tpu.memory_space<vmem>>, vector<1x20x20xf32>
    %832 = vector.shape_cast %831 : vector<1x20x20xf32> to vector<20x20xf32>
    %c24_243 = arith.constant 24 : index
    %833 = memref.load %arg4[%c24_243] : memref<36xf32, #tpu.memory_space<smem>>
    %834 = vector.broadcast %833 : f32 to vector<20x20xf32>
    %835 = arith.mulf %834, %832 : vector<20x20xf32>
    %836 = arith.addf %830, %835 : vector<20x20xf32>
    %c2_244 = arith.constant 2 : index
    %c2_245 = arith.constant 2 : index
    %c1_246 = arith.constant 1 : index
    %837 = vector.load %arg8[%c2_244, %c2_245, %c1_246] : memref<4x22x22xf32, #tpu.memory_space<vmem>>, vector<1x20x20xf32>
    %838 = vector.shape_cast %837 : vector<1x20x20xf32> to vector<20x20xf32>
    %c25_247 = arith.constant 25 : index
    %839 = memref.load %arg4[%c25_247] : memref<36xf32, #tpu.memory_space<smem>>
    %840 = vector.broadcast %839 : f32 to vector<20x20xf32>
    %841 = arith.mulf %840, %838 : vector<20x20xf32>
    %842 = arith.addf %836, %841 : vector<20x20xf32>
    %c2_248 = arith.constant 2 : index
    %c2_249 = arith.constant 2 : index
    %c2_250 = arith.constant 2 : index
    %843 = vector.load %arg8[%c2_248, %c2_249, %c2_250] : memref<4x22x22xf32, #tpu.memory_space<vmem>>, vector<1x20x20xf32>
    %844 = vector.shape_cast %843 : vector<1x20x20xf32> to vector<20x20xf32>
    %c26_251 = arith.constant 26 : index
    %845 = memref.load %arg4[%c26_251] : memref<36xf32, #tpu.memory_space<smem>>
    %846 = vector.broadcast %845 : f32 to vector<20x20xf32>
    %847 = arith.mulf %846, %844 : vector<20x20xf32>
    %848 = arith.addf %842, %847 : vector<20x20xf32>
    %c3_252 = arith.constant 3 : index
    %c0_253 = arith.constant 0 : index
    %c0_254 = arith.constant 0 : index
    %849 = vector.load %arg8[%c3_252, %c0_253, %c0_254] : memref<4x22x22xf32, #tpu.memory_space<vmem>>, vector<1x20x20xf32>
    %850 = vector.shape_cast %849 : vector<1x20x20xf32> to vector<20x20xf32>
    %c27_255 = arith.constant 27 : index
    %851 = memref.load %arg4[%c27_255] : memref<36xf32, #tpu.memory_space<smem>>
    %852 = vector.broadcast %851 : f32 to vector<20x20xf32>
    %853 = arith.mulf %852, %850 : vector<20x20xf32>
    %854 = arith.addf %848, %853 : vector<20x20xf32>
    %c3_256 = arith.constant 3 : index
    %c0_257 = arith.constant 0 : index
    %c1_258 = arith.constant 1 : index
    %855 = vector.load %arg8[%c3_256, %c0_257, %c1_258] : memref<4x22x22xf32, #tpu.memory_space<vmem>>, vector<1x20x20xf32>
    %856 = vector.shape_cast %855 : vector<1x20x20xf32> to vector<20x20xf32>
    %c28_259 = arith.constant 28 : index
    %857 = memref.load %arg4[%c28_259] : memref<36xf32, #tpu.memory_space<smem>>
    %858 = vector.broadcast %857 : f32 to vector<20x20xf32>
    %859 = arith.mulf %858, %856 : vector<20x20xf32>
    %860 = arith.addf %854, %859 : vector<20x20xf32>
    %c3_260 = arith.constant 3 : index
    %c0_261 = arith.constant 0 : index
    %c2_262 = arith.constant 2 : index
    %861 = vector.load %arg8[%c3_260, %c0_261, %c2_262] : memref<4x22x22xf32, #tpu.memory_space<vmem>>, vector<1x20x20xf32>
    %862 = vector.shape_cast %861 : vector<1x20x20xf32> to vector<20x20xf32>
    %c29_263 = arith.constant 29 : index
    %863 = memref.load %arg4[%c29_263] : memref<36xf32, #tpu.memory_space<smem>>
    %864 = vector.broadcast %863 : f32 to vector<20x20xf32>
    %865 = arith.mulf %864, %862 : vector<20x20xf32>
    %866 = arith.addf %860, %865 : vector<20x20xf32>
    %c3_264 = arith.constant 3 : index
    %c1_265 = arith.constant 1 : index
    %c0_266 = arith.constant 0 : index
    %867 = vector.load %arg8[%c3_264, %c1_265, %c0_266] : memref<4x22x22xf32, #tpu.memory_space<vmem>>, vector<1x20x20xf32>
    %868 = vector.shape_cast %867 : vector<1x20x20xf32> to vector<20x20xf32>
    %c30_267 = arith.constant 30 : index
    %869 = memref.load %arg4[%c30_267] : memref<36xf32, #tpu.memory_space<smem>>
    %870 = vector.broadcast %869 : f32 to vector<20x20xf32>
    %871 = arith.mulf %870, %868 : vector<20x20xf32>
    %872 = arith.addf %866, %871 : vector<20x20xf32>
    %c3_268 = arith.constant 3 : index
    %c1_269 = arith.constant 1 : index
    %c1_270 = arith.constant 1 : index
    %873 = vector.load %arg8[%c3_268, %c1_269, %c1_270] : memref<4x22x22xf32, #tpu.memory_space<vmem>>, vector<1x20x20xf32>
    %874 = vector.shape_cast %873 : vector<1x20x20xf32> to vector<20x20xf32>
    %c31_271 = arith.constant 31 : index
    %875 = memref.load %arg4[%c31_271] : memref<36xf32, #tpu.memory_space<smem>>
    %876 = vector.broadcast %875 : f32 to vector<20x20xf32>
    %877 = arith.mulf %876, %874 : vector<20x20xf32>
    %878 = arith.addf %872, %877 : vector<20x20xf32>
    %c3_272 = arith.constant 3 : index
    %c1_273 = arith.constant 1 : index
    %c2_274 = arith.constant 2 : index
    %879 = vector.load %arg8[%c3_272, %c1_273, %c2_274] : memref<4x22x22xf32, #tpu.memory_space<vmem>>, vector<1x20x20xf32>
    %880 = vector.shape_cast %879 : vector<1x20x20xf32> to vector<20x20xf32>
    %c32_275 = arith.constant 32 : index
    %881 = memref.load %arg4[%c32_275] : memref<36xf32, #tpu.memory_space<smem>>
    %882 = vector.broadcast %881 : f32 to vector<20x20xf32>
    %883 = arith.mulf %882, %880 : vector<20x20xf32>
    %884 = arith.addf %878, %883 : vector<20x20xf32>
    %c3_276 = arith.constant 3 : index
    %c2_277 = arith.constant 2 : index
    %c0_278 = arith.constant 0 : index
    %885 = vector.load %arg8[%c3_276, %c2_277, %c0_278] : memref<4x22x22xf32, #tpu.memory_space<vmem>>, vector<1x20x20xf32>
    %886 = vector.shape_cast %885 : vector<1x20x20xf32> to vector<20x20xf32>
    %c33_279 = arith.constant 33 : index
    %887 = memref.load %arg4[%c33_279] : memref<36xf32, #tpu.memory_space<smem>>
    %888 = vector.broadcast %887 : f32 to vector<20x20xf32>
    %889 = arith.mulf %888, %886 : vector<20x20xf32>
    %890 = arith.addf %884, %889 : vector<20x20xf32>
    %c3_280 = arith.constant 3 : index
    %c2_281 = arith.constant 2 : index
    %c1_282 = arith.constant 1 : index
    %891 = vector.load %arg8[%c3_280, %c2_281, %c1_282] : memref<4x22x22xf32, #tpu.memory_space<vmem>>, vector<1x20x20xf32>
    %892 = vector.shape_cast %891 : vector<1x20x20xf32> to vector<20x20xf32>
    %c34_283 = arith.constant 34 : index
    %893 = memref.load %arg4[%c34_283] : memref<36xf32, #tpu.memory_space<smem>>
    %894 = vector.broadcast %893 : f32 to vector<20x20xf32>
    %895 = arith.mulf %894, %892 : vector<20x20xf32>
    %896 = arith.addf %890, %895 : vector<20x20xf32>
    %c3_284 = arith.constant 3 : index
    %c2_285 = arith.constant 2 : index
    %c2_286 = arith.constant 2 : index
    %897 = vector.load %arg8[%c3_284, %c2_285, %c2_286] : memref<4x22x22xf32, #tpu.memory_space<vmem>>, vector<1x20x20xf32>
    %898 = vector.shape_cast %897 : vector<1x20x20xf32> to vector<20x20xf32>
    %c35_287 = arith.constant 35 : index
    %899 = memref.load %arg4[%c35_287] : memref<36xf32, #tpu.memory_space<smem>>
    %900 = vector.broadcast %899 : f32 to vector<20x20xf32>
    %901 = arith.mulf %900, %898 : vector<20x20xf32>
    %902 = arith.addf %896, %901 : vector<20x20xf32>
    %c0_288 = arith.constant 0 : index
    %c0_289 = arith.constant 0 : index
    %c0_290 = arith.constant 0 : index
    %c0_291 = arith.constant 0 : index
    %903 = vector.load %arg6[%c0_288, %c0_289, %c0_290, %c0_291] : memref<1x1x20x20xf32, #tpu.memory_space<vmem>>, vector<1x1x20x20xf32>
    %904 = vector.shape_cast %903 : vector<1x1x20x20xf32> to vector<20x20xf32>
    %905 = vector.shape_cast %902 : vector<20x20xf32> to vector<1x1x20x20xf32>
    tpu.vector_store %arg6[%c0_288, %c0_289, %c0_290, %c0_291], %905 {strides = array<i32>} : memref<1x1x20x20xf32, #tpu.memory_space<vmem>>, vector<1x1x20x20xf32>,
    return
  }
  func.func @transform_0(%arg0: i32) -> (i32, i32, i32, i32) {
    %c0_i32 = arith.constant 0 : i32
    %c0_i32_0 = arith.constant 0 : i32
    %c0_i32_1 = arith.constant 0 : i32
    %c0_i32_2 = arith.constant 0 : i32
    return %arg0, %c0_i32, %c0_i32_0, %c0_i32_1 : i32, i32, i32, i32
  }
  func.func @transform_1(%arg0: i32) -> i32 {
    %c0_i32 = arith.constant 0 : i32
    %c0_i32_0 = arith.constant 0 : i32
    return %c0_i32 : i32
  }
  func.func @transform_2(%arg0: i32) -> i32 {
    %c0_i32 = arith.constant 0 : i32
    %c0_i32_0 = arith.constant 0 : i32
    return %c0_i32 : i32
  }
  func.func @transform_3(%arg0: i32) -> i32 {
    %c0_i32 = arith.constant 0 : i32
    %c0_i32_0 = arith.constant 0 : i32
    return %c0_i32 : i32
  }
  func.func @transform_4(%arg0: i32) -> i32 {
    %c0_i32 = arith.constant 0 : i32
    %c0_i32_0 = arith.constant 0 : i32
    return %c0_i32 : i32
  }
  func.func @transform_5(%arg0: i32) -> (i32, i32, i32, i32) {
    %c0_i32 = arith.constant 0 : i32
    %c0_i32_0 = arith.constant 0 : i32
    %c0_i32_1 = arith.constant 0 : i32
    %c0_i32_2 = arith.constant 0 : i32
    return %arg0, %c0_i32, %c0_i32_0, %c0_i32_1 : i32, i32, i32, i32
  }
}

</mosaic_0001>

<llo_original>
// kernel: decoder_forward.1
$region0: #{decoder_forward.1}
  #allocation0 [shape = 'u32[]', space=smem, size = 0x4, offset = 0x4, fixed_abs, tag = 'smem constant byte address 0x4 - core index']
  #allocation1 [shape = 'u32[144,128]{1,0:T(1,128)}', space=vmem, size = 0x12000, scoped, tag = 'internal scratch']
  #allocation2 [shape = 'f32[4,20,20]{2,1,0:T(8,128)}', space=vmem, size = 0xc000, scoped, tag = 'scratch operand']
  #allocation3 [shape = 'f32[4,22,22]{2,1,0:T(8,128)}', space=vmem, size = 0xc000, scoped, tag = 'scratch operand']
  #allocation4 [shape = 'f32[1]{0:T(128)S(6)}', space=smem, size = 0x200, scoped, tag = 'scoped memory for decoder_forward.1']
  %s0 = inlined_call_operand.vmem [shape: f32[2,4,16,16], index: 0, kind: input, shape index: {}]
  %s1 = inlined_call_operand.vmem [shape: f32[144], index: 1, kind: input, shape index: {}]
  %s2 = inlined_call_operand.vmem [shape: f32[4], index: 2, kind: input, shape index: {}]
  %s3 = inlined_call_operand.vmem [shape: f32[36], index: 3, kind: input, shape index: {}]
  %s4 = inlined_call_operand.<no memory space> [shape: f32[1], index: 4, kind: input, shape index: {}]
  %s5 = inlined_call_operand.vmem [shape: f32[2,1,20,20], index: 5, kind: output, shape index: {}]
  %s6 = sld [smem:[#allocation0]]
  $region65: #{decoder_forward.1} parent=0
    _
  %s8 = ssub.s32 1, %s6
  %s9 = scalar_select 0, %s8, %s6
  %10 = sst [smem:[#allocation4]] %s4
  $region1: #{decoder_forward.1} parent=0
    #allocation5 [shape = 'u8[1024]{0}', space=smem, size = 0x400, scoped, tag = 'input window, operand 1, single buffered']
    #allocation6 [shape = 's32[2]{0}', space=sflag, size = 0x8, scoped, tag = 'scoped memory for decoder_forward.1']
    #allocation7 [shape = 'u8[512]{0}', space=smem, size = 0x200, scoped, tag = 'input window, operand 2, single buffered']
    #allocation8 [shape = 's32[1]{0}', space=sflag, size = 0x4, scoped, tag = 'scoped memory for decoder_forward.1']
    #allocation9 [shape = 'u8[512]{0}', space=smem, size = 0x200, scoped, tag = 'input window, operand 3, single buffered']
    %11 = vsyncpa [#allocation6], 0
    %12 = vsyncpa [#allocation8], 0
    loop: start=0, step=1, limit=4
    $region2: #{decoder_forward.1} parent=1 // loop_pre_header
      _
    $region3: #{decoder_forward.1} parent=1 // loop_header
      %s14 = sphi 0, %s18
      %p15 = scmp.ge.s32.totalorder %s14, 4
      %s24 = sphi 0, %s26
      %s27 = sphi 0, %s24
      %s28 = sphi 0, %s27
      %s44 = sphi 0, %s28
      %s48 = sphi 0, %s48
      %s50 = sphi 0, %s48
      %s51 = sphi 0, %s50
      %s65 = sphi 0, %s51
      %s69 = sphi 0, %s69
      %s71 = sphi 0, %s69
      %s72 = sphi 0, %s71
      %s86 = sphi 0, %s72
      %s90 = sphi 0, %s90
      %s92 = sphi 0, %s90
      %s93 = sphi 0, %s92
      %s107 = sphi 0, %s93
      %s111 = sphi 0, %s111
      %s113 = sphi 0, %s111
      %s114 = sphi 0, %s113
      %s128 = sphi 0, %s114
      %s134 = sphi 0, %s136
      %s137 = sphi 0, %s134
      %s138 = sphi 0, %s137
      %s154 = sphi 0, %s138
    $region4: #{decoder_forward.1} parent=1 // loop_header_branch
      %17 = sbr.rel (%p15) target = $region8
    $region5: #{decoder_forward.1} parent=1 // loop_body
      %s19 = ssub.s32 %s14, 1
      %s20 = ssub.s32 %s14, 2
      %s21 = sadd.s32 %s14, 1
      %s22 = ssub.s32 %s14, %s21
      %p23 = scmp.eq.s32.totalorder %s22, 0
      %s25 = sadd.s32 %s24, 1
      %s26 = scalar_select %p23, %s24, %s25
      %p29 = pneg %p23
      %p30 = scmp.eq.s32.totalorder %s14, 1
      %p31 = por %p29, %p30
      %p32 = scmp.ne.s32.totalorder %s24, %s27
      %p33 = scmp.eq.s32.totalorder %s14, 0
      %p34 = por %p32, %p33
      %p35 = scmp.ne.s32.totalorder %s24, %s27
      %p36 = scmp.eq.s32.totalorder %s19, 1
      %p37 = por %p35, %p36
      %p38 = scmp.ne.s32.totalorder %s27, %s28
      %p39 = scmp.eq.s32.totalorder %s19, 0
      %p40 = por %p38, %p39
      %p41 = scmp.ne.s32.totalorder %s27, %s28
      %p42 = scmp.eq.s32.totalorder %s20, 1
      %p43 = por %p41, %p42
      %p45 = scmp.ne.s32.totalorder %s28, %s44
      %p46 = scmp.eq.s32.totalorder %s20, 0
      %p47 = por %p45, %p46
      %s49 = sadd.s32 %s48, 1
      %p52 = scmp.eq.s32.totalorder %s14, 1
      %p53 = scmp.ne.s32.totalorder %s48, %s50
      %p54 = scmp.eq.s32.totalorder %s14, 0
      %p55 = por %p53, %p54
      %p56 = scmp.ne.s32.totalorder %s48, %s50
      %p57 = scmp.eq.s32.totalorder %s19, 1
      %p58 = por %p56, %p57
      %p59 = scmp.ne.s32.totalorder %s50, %s51
      %p60 = scmp.eq.s32.totalorder %s19, 0
      %p61 = por %p59, %p60
      %p62 = scmp.ne.s32.totalorder %s50, %s51
      %p63 = scmp.eq.s32.totalorder %s20, 1
      %p64 = por %p62, %p63
      %p66 = scmp.ne.s32.totalorder %s51, %s65
      %p67 = scmp.eq.s32.totalorder %s20, 0
      %p68 = por %p66, %p67
      %s70 = sadd.s32 %s69, 1
      %p73 = scmp.eq.s32.totalorder %s14, 1
      %p74 = scmp.ne.s32.totalorder %s69, %s71
      %p75 = scmp.eq.s32.totalorder %s14, 0
      %p76 = por %p74, %p75
      %p77 = scmp.ne.s32.totalorder %s69, %s71
      %p78 = scmp.eq.s32.totalorder %s19, 1
      %p79 = por %p77, %p78
      %p80 = scmp.ne.s32.totalorder %s71, %s72
      %p81 = scmp.eq.s32.totalorder %s19, 0
      %p82 = por %p80, %p81
      %p83 = scmp.ne.s32.totalorder %s71, %s72
      %p84 = scmp.eq.s32.totalorder %s20, 1
      %p85 = por %p83, %p84
      %p87 = scmp.ne.s32.totalorder %s72, %s86
      %p88 = scmp.eq.s32.totalorder %s20, 0
      %p89 = por %p87, %p88
      %s91 = sadd.s32 %s90, 1
      %p94 = scmp.eq.s32.totalorder %s14, 1
      %p95 = scmp.ne.s32.totalorder %s90, %s92
      %p96 = scmp.eq.s32.totalorder %s14, 0
      %p97 = por %p95, %p96
      %p98 = scmp.ne.s32.totalorder %s90, %s92
      %p99 = scmp.eq.s32.totalorder %s19, 1
      %p100 = por %p98, %p99
      %p101 = scmp.ne.s32.totalorder %s92, %s93
      %p102 = scmp.eq.s32.totalorder %s19, 0
      %p103 = por %p101, %p102
      %p104 = scmp.ne.s32.totalorder %s92, %s93
      %p105 = scmp.eq.s32.totalorder %s20, 1
      %p106 = por %p104, %p105
      %p108 = scmp.ne.s32.totalorder %s93, %s107
      %p109 = scmp.eq.s32.totalorder %s20, 0
      %p110 = por %p108, %p109
      %s112 = sadd.s32 %s111, 1
      %p115 = scmp.eq.s32.totalorder %s14, 1
      %p116 = scmp.ne.s32.totalorder %s111, %s113
      %p117 = scmp.eq.s32.totalorder %s14, 0
      %p118 = por %p116, %p117
      %p119 = scmp.ne.s32.totalorder %s111, %s113
      %p120 = scmp.eq.s32.totalorder %s19, 1
      %p121 = por %p119, %p120
      %p122 = scmp.ne.s32.totalorder %s113, %s114
      %p123 = scmp.eq.s32.totalorder %s19, 0
      %p124 = por %p122, %p123
      %p125 = scmp.ne.s32.totalorder %s113, %s114
      %p126 = scmp.eq.s32.totalorder %s20, 1
      %p127 = por %p125, %p126
      %p129 = scmp.ne.s32.totalorder %s114, %s128
      %p130 = scmp.eq.s32.totalorder %s20, 0
      %p131 = por %p129, %p130
      %s132 = ssub.s32 %s14, %s21
      %p133 = scmp.eq.s32.totalorder %s132, 0
      %s135 = sadd.s32 %s134, 1
      %s136 = scalar_select %p133, %s134, %s135
      %p139 = pneg %p133
      %p140 = scmp.eq.s32.totalorder %s14, 1
      %p141 = por %p139, %p140
      %p142 = scmp.ne.s32.totalorder %s134, %s137
      %p143 = scmp.eq.s32.totalorder %s14, 0
      %p144 = por %p142, %p143
      %p145 = scmp.ne.s32.totalorder %s134, %s137
      %p146 = scmp.eq.s32.totalorder %s19, 1
      %p147 = por %p145, %p146
      %p148 = scmp.ne.s32.totalorder %s137, %s138
      %p149 = scmp.eq.s32.totalorder %s19, 0
      %p150 = por %p148, %p149
      %p151 = scmp.ne.s32.totalorder %s137, %s138
      %p152 = scmp.eq.s32.totalorder %s20, 1
      %p153 = por %p151, %p152
      %p155 = scmp.ne.s32.totalorder %s138, %s154
      %p156 = scmp.eq.s32.totalorder %s20, 0
      %p157 = por %p155, %p156
      %p158 = scmp.le.s32.totalorder 1, %s14
      %p159 = scmp.lt.s32.totalorder %s14, 3
      %p160 = pnand %p158, %p159
      %p161 = pneg %p160
      // Predicated region
      $region9: #{decoder_forward.1} parent=5 // pred_check
        _
      $region10: #{decoder_forward.1} parent=5 // pred_check_branch
        %163 = sbr.rel (%p160) target = $region12
      $region11: #{decoder_forward.1} parent=5 // pred_region
        %s164 = ssub.s32 %s14, 1
        // Predicated region
        $region13: #{decoder_forward.1} parent=11 // pred_check
          %p165 = pneg %p61
        $region14: #{decoder_forward.1} parent=11 // pred_check_branch
          %167 = sbr.rel (%p165) target = $region16
        $region15: #{decoder_forward.1} parent=11 // pred_region
          %s169 = ssub.s32 32, 32
          %170 = vsyncadd [#allocation6], %s169
          %s172 = sshll.u32 %s1, 4
          %s173 = int_to_ptr.vmem [resolvable:$true] %s172
          %175 = dma.vmem_to_smem %s173, 32, [#allocation5], [#allocation6]
        $region16: #{decoder_forward.1} parent=11 // pred_fallthru
          _
        // Predicated region
        $region17: #{decoder_forward.1} parent=11 // pred_check
          %p176 = pneg %p82
        $region18: #{decoder_forward.1} parent=11 // pred_check_branch
          %178 = sbr.rel (%p176) target = $region20
        $region19: #{decoder_forward.1} parent=11 // pred_region
          %s180 = ssub.s32 16, 16
          %181 = vsyncadd [#allocation8], %s180
          %s183 = sshll.u32 %s2, 4
          %s184 = int_to_ptr.vmem [resolvable:$true] %s183
          %186 = dma.vmem_to_smem %s184, 16, [#allocation7], [#allocation8]
        $region20: #{decoder_forward.1} parent=11 // pred_fallthru
          _
        // Predicated region
        $region21: #{decoder_forward.1} parent=11 // pred_check
          %p187 = pneg %p103
        $region22: #{decoder_forward.1} parent=11 // pred_check_branch
          %189 = sbr.rel (%p187) target = $region24
        $region23: #{decoder_forward.1} parent=11 // pred_region
          %s191 = ssub.s32 16, 16
          %192 = vsyncadd [#allocation8], %s191
          %s194 = sshll.u32 %s3, 4
          %s195 = int_to_ptr.vmem [resolvable:$true] %s194
          %197 = dma.vmem_to_smem %s195, 16, [#allocation9], [#allocation8]
        $region24: #{decoder_forward.1} parent=11 // pred_fallthru
          _
        // Predicated region
        $region25: #{decoder_forward.1} parent=11 // pred_check
          %p198 = pneg %p124
        $region26: #{decoder_forward.1} parent=11 // pred_check_branch
          %200 = sbr.rel (%p198) target = $region28
        $region27: #{decoder_forward.1} parent=11 // pred_region
          _
        $region28: #{decoder_forward.1} parent=11 // pred_fallthru
          _
      $region12: #{decoder_forward.1} parent=5 // pred_fallthru
        _
      %p201 = scmp.lt.s32.totalorder %s14, 2
      // Predicated region
      $region29: #{decoder_forward.1} parent=5 // pred_check
        %p202 = pneg %p201
      $region30: #{decoder_forward.1} parent=5 // pred_check_branch
        %204 = sbr.rel (%p202) target = $region32
      $region31: #{decoder_forward.1} parent=5 // pred_region
        // Predicated region
        $region33: #{decoder_forward.1} parent=31 // pred_check
          %p205 = pneg %p34
        $region34: #{decoder_forward.1} parent=31 // pred_check_branch
          %207 = sbr.rel (%p205) target = $region36
        $region35: #{decoder_forward.1} parent=31 // pred_region
          %p208 = scmp.lt.s32.totalorder %s14, 1
          %s209 = scalar_select %p208, %s14, 1
          %s210 = smul.addr %s209, 8
          %s211 = smul.addr %s210, 8
          %s212 = scalar_lea.vmem %s0, %s211
        $region36: #{decoder_forward.1} parent=31 // pred_fallthru
          _
      $region32: #{decoder_forward.1} parent=5 // pred_fallthru
        _
      %p213 = scmp.le.s32.totalorder 1, %s14
      %p214 = scmp.lt.s32.totalorder %s14, 3
      %p215 = pnand %p213, %p214
      %p216 = pneg %p215
      // Predicated region
      $region37: #{decoder_forward.1} parent=5 // pred_check
        _
      $region38: #{decoder_forward.1} parent=5 // pred_check_branch
        %218 = sbr.rel (%p215) target = $region40
      $region39: #{decoder_forward.1} parent=5 // pred_region
        %s219 = ssub.s32 %s14, 1
        // Predicated region
        $region41: #{decoder_forward.1} parent=39 // pred_check
          %p220 = pneg %p61
        $region42: #{decoder_forward.1} parent=39 // pred_check_branch
          %222 = sbr.rel (%p220) target = $region44
        $region43: #{decoder_forward.1} parent=39 // pred_region
          %223 = dma.done [#allocation6], 32
        $region44: #{decoder_forward.1} parent=39 // pred_fallthru
          _
        // Predicated region
        $region45: #{decoder_forward.1} parent=39 // pred_check
          %p224 = pneg %p82
        $region46: #{decoder_forward.1} parent=39 // pred_check_branch
          %226 = sbr.rel (%p224) target = $region48
        $region47: #{decoder_forward.1} parent=39 // pred_region
          %227 = dma.done [#allocation8], 16
        $region48: #{decoder_forward.1} parent=39 // pred_fallthru
          _
        // Predicated region
        $region49: #{decoder_forward.1} parent=39 // pred_check
          %p228 = pneg %p103
        $region50: #{decoder_forward.1} parent=39 // pred_check_branch
          %230 = sbr.rel (%p228) target = $region52
        $region51: #{decoder_forward.1} parent=39 // pred_region
          %231 = dma.done [#allocation8], 16
        $region52: #{decoder_forward.1} parent=39 // pred_fallthru
          _
        %232 = sfence
        %p233 = scmp.lt.s32.totalorder %s19, 1
        %s234 = scalar_select %p233, %s19, 1
        %s235 = smul.addr %s234, 8
        %s236 = smul.addr %s235, 8
        %s237 = scalar_lea.vmem %s0, %s236
        %p238 = pneg %p40
        %p239 = pneg %p37
        %p240 = pneg %p61
        %p241 = pneg %p58
        %p242 = pneg %p82
        %p243 = pneg %p79
        %p244 = pneg %p103
        %p245 = pneg %p100
        %p246 = pneg %p124
        %p247 = pneg %p121
        %p248 = pneg %p150
        %p249 = pneg %p147
        %p250 = scmp.lt.s32.totalorder %s19, 1
        %s251 = scalar_select %p250, %s19, 1
        %s252 = smul.addr %s251, 3
        %s253 = smul.addr %s252, 8
        %s254 = scalar_lea.vmem %s5, %s253
        %p255 = scmp.lt.s32.totalorder %s19, 1
        %s256 = scalar_select %p255, %s19, 1
        %s257 = smul.addr %s256, 8
        %s258 = smul.addr %s257, 8
        %s259 = scalar_lea.vmem %s0, %s258
        %p260 = scmp.lt.s32.totalorder %s19, 1
        %s261 = scalar_select %p260, %s19, 1
        %s262 = smul.addr %s261, 3
        %s263 = smul.addr %s262, 8
        %s264 = scalar_lea.vmem %s5, %s263
        %vm265 = vcmask 162816
        %266 = vst.msk [vmem:[#allocation2] sm:$0xff] %vm265, 0.0
        %267 = vst.msk [vmem:[#allocation2 + $0x8] sm:$0xff] %vm265, 0.0
        %vm268 = vcmask 158720
        %269 = vst.msk [vmem:[#allocation2 + $0x10] sm:$0xf] %vm268, 0.0
        %270 = vst.msk [vmem:[#allocation2 + $0x18] sm:$0xff] %vm265, 0.0
        %271 = vst.msk [vmem:[#allocation2 + $0x20] sm:$0xff] %vm265, 0.0
        %272 = vst.msk [vmem:[#allocation2 + $0x28] sm:$0xf] %vm268, 0.0
        %273 = vst.msk [vmem:[#allocation2 + $0x30] sm:$0xff] %vm265, 0.0
        %274 = vst.msk [vmem:[#allocation2 + $0x38] sm:$0xff] %vm265, 0.0
        %275 = vst.msk [vmem:[#allocation2 + $0x40] sm:$0xf] %vm268, 0.0
        %276 = vst.msk [vmem:[#allocation2 + $0x48] sm:$0xff] %vm265, 0.0
        %277 = vst.msk [vmem:[#allocation2 + $0x50] sm:$0xff] %vm265, 0.0
        %278 = vst.msk [vmem:[#allocation2 + $0x58] sm:$0xf] %vm268, 0.0
        %v279 = vld [vmem:[%s259] sm:$0xff]
        %v280 = vld [vmem:[%s259 + $0x8] sm:$0xff]
        %v281 = vld [vmem:[%s259 + $0x10] sm:$0xff]
        %v282 = vld [vmem:[%s259 + $0x18] sm:$0xff]
        %v283 = vld [vmem:[%s259 + $0x20] sm:$0xff]
        %v284 = vld [vmem:[%s259 + $0x28] sm:$0xff]
        %v285 = vld [vmem:[%s259 + $0x30] sm:$0xff]
        %v286 = vld [vmem:[%s259 + $0x38] sm:$0xff]
        %295 = vrot.lane.b32.xlu0 %v279, 2
        %v296 = vpop.permute.xlu0 %295
        %297 = vrot.lane.b32.xlu0 %v280, 2
        %v298 = vpop.permute.xlu0 %297
        %299 = vrot.lane.b32.xlu0 %v281, 2
        %v300 = vpop.permute.xlu0 %299
        %301 = vrot.lane.b32.xlu0 %v282, 2
        %v302 = vpop.permute.xlu0 %301
        %303 = vrot.lane.b32.xlu0 %v283, 2
        %v304 = vpop.permute.xlu0 %303
        %305 = vrot.lane.b32.xlu0 %v284, 2
        %v306 = vpop.permute.xlu0 %305
        %307 = vrot.lane.b32.xlu0 %v285, 2
        %v308 = vpop.permute.xlu0 %307
        %309 = vrot.lane.b32.xlu0 %v286, 2
        %v310 = vpop.permute.xlu0 %309
        %vm319 = vcmask 146448
        %320 = vst.msk [vmem:[#allocation2 + $0x2] sm:$0xff] %vm319, %v296
        %321 = vst.msk [vmem:[#allocation2 + $0xa] sm:$0xff] %vm319, %v298
        %322 = vst.msk [vmem:[#allocation2 + $0x1a] sm:$0xff] %vm319, %v300
        %323 = vst.msk [vmem:[#allocation2 + $0x22] sm:$0xff] %vm319, %v302
        %324 = vst.msk [vmem:[#allocation2 + $0x32] sm:$0xff] %vm319, %v304
        %325 = vst.msk [vmem:[#allocation2 + $0x3a] sm:$0xff] %vm319, %v306
        %326 = vst.msk [vmem:[#allocation2 + $0x4a] sm:$0xff] %vm319, %v308
        %327 = vst.msk [vmem:[#allocation2 + $0x52] sm:$0xff] %vm319, %v310
        %vm328 = vcmask 179200
        %329 = vst.msk [vmem:[#allocation3] sm:$0xff] %vm328, 0.0
        %330 = vst.msk [vmem:[#allocation3 + $0x8] sm:$0xff] %vm328, 0.0
        %vm331 = vcmask 177152
        %332 = vst.msk [vmem:[#allocation3 + $0x10] sm:$0x3f] %vm331, 0.0
        %333 = vst.msk [vmem:[#allocation3 + $0x18] sm:$0xff] %vm328, 0.0
        %334 = vst.msk [vmem:[#allocation3 + $0x20] sm:$0xff] %vm328, 0.0
        %335 = vst.msk [vmem:[#allocation3 + $0x28] sm:$0x3f] %vm331, 0.0
        %336 = vst.msk [vmem:[#allocation3 + $0x30] sm:$0xff] %vm328, 0.0
        %337 = vst.msk [vmem:[#allocation3 + $0x38] sm:$0xff] %vm328, 0.0
        %338 = vst.msk [vmem:[#allocation3 + $0x40] sm:$0x3f] %vm331, 0.0
        %339 = vst.msk [vmem:[#allocation3 + $0x48] sm:$0xff] %vm328, 0.0
        %340 = vst.msk [vmem:[#allocation3 + $0x50] sm:$0xff] %vm328, 0.0
        %341 = vst.msk [vmem:[#allocation3 + $0x58] sm:$0x3f] %vm331, 0.0
        %s342 = sld [smem:[#allocation7]]
        %v343 = vstv %s342
        %v344 = vadd.f32 %v343, 0.0
        %s345 = sld [smem:[#allocation7 + $0x1]]
        %v346 = vstv %s345
        %v347 = vadd.f32 %v346, 0.0
        %s348 = sld [smem:[#allocation7 + $0x2]]
        %v349 = vstv %s348
        %v350 = vadd.f32 %v349, 0.0
        %s351 = sld [smem:[#allocation7 + $0x3]]
        %v352 = vstv %s351
        %v353 = vadd.f32 %v352, 0.0
        %v354 = vld [vmem:[#allocation2] sm:$0xff]
        %v355 = vld [vmem:[#allocation2 + $0x8] sm:$0xff]
        %v356 = vld [vmem:[#allocation2 + $0x10] sm:$0x3]
        %s357 = sld [smem:[#allocation5]]
        %v358 = vstv %s357
        %v359 = vmul.f32 %v358, %v354
        %v360 = vmul.f32 %v358, %v355
        %v361 = vmul.f32 %v358, %v356
        %v362 = vadd.f32 %v344, %v359
        %v363 = vadd.f32 %v344, %v360
        %v364 = vadd.f32 %v344, %v361
        %s365 = sld [smem:[#allocation5 + $0x9]]
        %v366 = vstv %s365
        %v367 = vmul.f32 %v366, %v354
        %v368 = vmul.f32 %v366, %v355
        %v369 = vmul.f32 %v366, %v356
        %v370 = vadd.f32 %v347, %v367
        %v371 = vadd.f32 %v347, %v368
        %v372 = vadd.f32 %v347, %v369
        %s373 = sld [smem:[#allocation5 + $0x12]]
        %v374 = vstv %s373
        %v375 = vmul.f32 %v374, %v354
        %v376 = vmul.f32 %v374, %v355
        %v377 = vmul.f32 %v374, %v356
        %v378 = vadd.f32 %v350, %v375
        %v379 = vadd.f32 %v350, %v376
        %v380 = vadd.f32 %v350, %v377
        %s381 = sld [smem:[#allocation5 + $0x1b]]
        %v382 = vstv %s381
        %v383 = vmul.f32 %v382, %v354
        %v384 = vmul.f32 %v382, %v355
        %v385 = vmul.f32 %v382, %v356
        %v386 = vadd.f32 %v353, %v383
        %v387 = vadd.f32 %v353, %v384
        %v388 = vadd.f32 %v353, %v385
        %s389 = sld [smem:[#allocation5 + $0x1]]
        %v390 = vstv %s389
        %v391 = vmul.f32 %v390, %v354
        %v392 = vmul.f32 %v390, %v355
        %v393 = vmul.f32 %v390, %v356
        %397 = vrot.lane.b32.xlu0 %v391, 127
        %v398 = vpop.permute.xlu0 %397
        %399 = vrot.lane.b32.xlu0 %v392, 127
        %v400 = vpop.permute.xlu0 %399
        %401 = vrot.lane.b32.xlu0 %v393, 127
        %v402 = vpop.permute.xlu0 %401
        %v406 = vadd.f32 %v362, %v398
        %v407 = vadd.f32 %v363, %v400
        %v408 = vadd.f32 %v364, %v402
        %s409 = sld [smem:[#allocation5 + $0xa]]
        %v410 = vstv %s409
        %v411 = vmul.f32 %v410, %v354
        %v412 = vmul.f32 %v410, %v355
        %v413 = vmul.f32 %v410, %v356
        %417 = vrot.lane.b32.xlu0 %v411, 127
        %v418 = vpop.permute.xlu0 %417
        %419 = vrot.lane.b32.xlu0 %v412, 127
        %v420 = vpop.permute.xlu0 %419
        %421 = vrot.lane.b32.xlu0 %v413, 127
        %v422 = vpop.permute.xlu0 %421
        %v426 = vadd.f32 %v370, %v418
        %v427 = vadd.f32 %v371, %v420
        %v428 = vadd.f32 %v372, %v422
        %s429 = sld [smem:[#allocation5 + $0x13]]
        %v430 = vstv %s429
        %v431 = vmul.f32 %v430, %v354
        %v432 = vmul.f32 %v430, %v355
        %v433 = vmul.f32 %v430, %v356
        %437 = vrot.lane.b32.xlu0 %v431, 127
        %v438 = vpop.permute.xlu0 %437
        %439 = vrot.lane.b32.xlu0 %v432, 127
        %v440 = vpop.permute.xlu0 %439
        %441 = vrot.lane.b32.xlu0 %v433, 127
        %v442 = vpop.permute.xlu0 %441
        %v446 = vadd.f32 %v378, %v438
        %v447 = vadd.f32 %v379, %v440
        %v448 = vadd.f32 %v380, %v442
        %s449 = sld [smem:[#allocation5 + $0x1c]]
        %v450 = vstv %s449
        %v451 = vmul.f32 %v450, %v354
        %v452 = vmul.f32 %v450, %v355
        %v453 = vmul.f32 %v450, %v356
        %457 = vrot.lane.b32.xlu0 %v451, 127
        %v458 = vpop.permute.xlu0 %457
        %459 = vrot.lane.b32.xlu0 %v452, 127
        %v460 = vpop.permute.xlu0 %459
        %461 = vrot.lane.b32.xlu0 %v453, 127
        %v462 = vpop.permute.xlu0 %461
        %v466 = vadd.f32 %v386, %v458
        %v467 = vadd.f32 %v387, %v460
        %v468 = vadd.f32 %v388, %v462
        %s469 = sld [smem:[#allocation5 + $0x2]]
        %v470 = vstv %s469
        %v471 = vmul.f32 %v470, %v354
        %v472 = vmul.f32 %v470, %v355
        %v473 = vmul.f32 %v470, %v356
        %477 = vrot.lane.b32.xlu0 %v471, 126
        %v478 = vpop.permute.xlu0 %477
        %479 = vrot.lane.b32.xlu0 %v472, 126
        %v480 = vpop.permute.xlu0 %479
        %481 = vrot.lane.b32.xlu0 %v473, 126
        %v482 = vpop.permute.xlu0 %481
        %v486 = vadd.f32 %v406, %v478
        %v487 = vadd.f32 %v407, %v480
        %v488 = vadd.f32 %v408, %v482
        %s489 = sld [smem:[#allocation5 + $0xb]]
        %v490 = vstv %s489
        %v491 = vmul.f32 %v490, %v354
        %v492 = vmul.f32 %v490, %v355
        %v493 = vmul.f32 %v490, %v356
        %497 = vrot.lane.b32.xlu0 %v491, 126
        %v498 = vpop.permute.xlu0 %497
        %499 = vrot.lane.b32.xlu0 %v492, 126
        %v500 = vpop.permute.xlu0 %499
        %501 = vrot.lane.b32.xlu0 %v493, 126
        %v502 = vpop.permute.xlu0 %501
        %v506 = vadd.f32 %v426, %v498
        %v507 = vadd.f32 %v427, %v500
        %v508 = vadd.f32 %v428, %v502
        %s509 = sld [smem:[#allocation5 + $0x14]]
        %v510 = vstv %s509
        %v511 = vmul.f32 %v510, %v354
        %v512 = vmul.f32 %v510, %v355
        %v513 = vmul.f32 %v510, %v356
        %517 = vrot.lane.b32.xlu0 %v511, 126
        %v518 = vpop.permute.xlu0 %517
        %519 = vrot.lane.b32.xlu0 %v512, 126
        %v520 = vpop.permute.xlu0 %519
        %521 = vrot.lane.b32.xlu0 %v513, 126
        %v522 = vpop.permute.xlu0 %521
        %v526 = vadd.f32 %v446, %v518
        %v527 = vadd.f32 %v447, %v520
        %v528 = vadd.f32 %v448, %v522
        %s529 = sld [smem:[#allocation5 + $0x1d]]
        %v530 = vstv %s529
        %v531 = vmul.f32 %v530, %v354
        %v532 = vmul.f32 %v530, %v355
        %v533 = vmul.f32 %v530, %v356
        %537 = vrot.lane.b32.xlu0 %v531, 126
        %v538 = vpop.permute.xlu0 %537
        %539 = vrot.lane.b32.xlu0 %v532, 126
        %v540 = vpop.permute.xlu0 %539
        %541 = vrot.lane.b32.xlu0 %v533, 126
        %v542 = vpop.permute.xlu0 %541
        %v546 = vadd.f32 %v466, %v538
        %v547 = vadd.f32 %v467, %v540
        %v548 = vadd.f32 %v468, %v542
        %v549 = vld [vmem:[#allocation2 + $0x1] sm:$0xff]
        %v550 = vld [vmem:[#allocation2 + $0x9] sm:$0xff]
        %v551 = vld [vmem:[#allocation2 + $0x11] sm:$0x3]
        %s552 = sld [smem:[#allocation5 + $0x3]]
        %v553 = vstv %s552
        %v554 = vmul.f32 %v553, %v549
        %v555 = vmul.f32 %v553, %v550
        %v556 = vmul.f32 %v553, %v551
        %v557 = vadd.f32 %v486, %v554
        %v558 = vadd.f32 %v487, %v555
        %v559 = vadd.f32 %v488, %v556
        %s560 = sld [smem:[#allocation5 + $0xc]]
        %v561 = vstv %s560
        %v562 = vmul.f32 %v561, %v549
        %v563 = vmul.f32 %v561, %v550
        %v564 = vmul.f32 %v561, %v551
        %v565 = vadd.f32 %v506, %v562
        %v566 = vadd.f32 %v507, %v563
        %v567 = vadd.f32 %v508, %v564
        %s568 = sld [smem:[#allocation5 + $0x15]]
        %v569 = vstv %s568
        %v570 = vmul.f32 %v569, %v549
        %v571 = vmul.f32 %v569, %v550
        %v572 = vmul.f32 %v569, %v551
        %v573 = vadd.f32 %v526, %v570
        %v574 = vadd.f32 %v527, %v571
        %v575 = vadd.f32 %v528, %v572
        %s576 = sld [smem:[#allocation5 + $0x1e]]
        %v577 = vstv %s576
        %v578 = vmul.f32 %v577, %v549
        %v579 = vmul.f32 %v577, %v550
        %v580 = vmul.f32 %v577, %v551
        %v581 = vadd.f32 %v546, %v578
        %v582 = vadd.f32 %v547, %v579
        %v583 = vadd.f32 %v548, %v580
        %s584 = sld [smem:[#allocation5 + $0x4]]
        %v585 = vstv %s584
        %v586 = vmul.f32 %v585, %v549
        %v587 = vmul.f32 %v585, %v550
        %v588 = vmul.f32 %v585, %v551
        %592 = vrot.lane.b32.xlu0 %v586, 127
        %v593 = vpop.permute.xlu0 %592
        %594 = vrot.lane.b32.xlu0 %v587, 127
        %v595 = vpop.permute.xlu0 %594
        %596 = vrot.lane.b32.xlu0 %v588, 127
        %v597 = vpop.permute.xlu0 %596
        %v601 = vadd.f32 %v557, %v593
        %v602 = vadd.f32 %v558, %v595
        %v603 = vadd.f32 %v559, %v597
        %s604 = sld [smem:[#allocation5 + $0xd]]
        %v605 = vstv %s604
        %v606 = vmul.f32 %v605, %v549
        %v607 = vmul.f32 %v605, %v550
        %v608 = vmul.f32 %v605, %v551
        %612 = vrot.lane.b32.xlu0 %v606, 127
        %v613 = vpop.permute.xlu0 %612
        %614 = vrot.lane.b32.xlu0 %v607, 127
        %v615 = vpop.permute.xlu0 %614
        %616 = vrot.lane.b32.xlu0 %v608, 127
        %v617 = vpop.permute.xlu0 %616
        %v621 = vadd.f32 %v565, %v613
        %v622 = vadd.f32 %v566, %v615
        %v623 = vadd.f32 %v567, %v617
        %s624 = sld [smem:[#allocation5 + $0x16]]
        %v625 = vstv %s624
        %v626 = vmul.f32 %v625, %v549
        %v627 = vmul.f32 %v625, %v550
        %v628 = vmul.f32 %v625, %v551
        %632 = vrot.lane.b32.xlu0 %v626, 127
        %v633 = vpop.permute.xlu0 %632
        %634 = vrot.lane.b32.xlu0 %v627, 127
        %v635 = vpop.permute.xlu0 %634
        %636 = vrot.lane.b32.xlu0 %v628, 127
        %v637 = vpop.permute.xlu0 %636
        %v641 = vadd.f32 %v573, %v633
        %v642 = vadd.f32 %v574, %v635
        %v643 = vadd.f32 %v575, %v637
        %s644 = sld [smem:[#allocation5 + $0x1f]]
        %v645 = vstv %s644
        %v646 = vmul.f32 %v645, %v549
        %v647 = vmul.f32 %v645, %v550
        %v648 = vmul.f32 %v645, %v551
        %652 = vrot.lane.b32.xlu0 %v646, 127
        %v653 = vpop.permute.xlu0 %652
        %654 = vrot.lane.b32.xlu0 %v647, 127
        %v655 = vpop.permute.xlu0 %654
        %656 = vrot.lane.b32.xlu0 %v648, 127
        %v657 = vpop.permute.xlu0 %656
        %v661 = vadd.f32 %v581, %v653
        %v662 = vadd.f32 %v582, %v655
        %v663 = vadd.f32 %v583, %v657
        %s664 = sld [smem:[#allocation5 + $0x5]]
        %v665 = vstv %s664
        %v666 = vmul.f32 %v665, %v549
        %v667 = vmul.f32 %v665, %v550
        %v668 = vmul.f32 %v665, %v551
        %672 = vrot.lane.b32.xlu0 %v666, 126
        %v673 = vpop.permute.xlu0 %672
        %674 = vrot.lane.b32.xlu0 %v667, 126
        %v675 = vpop.permute.xlu0 %674
        %676 = vrot.lane.b32.xlu0 %v668, 126
        %v677 = vpop.permute.xlu0 %676
        %v681 = vadd.f32 %v601, %v673
        %v682 = vadd.f32 %v602, %v675
        %v683 = vadd.f32 %v603, %v677
        %s684 = sld [smem:[#allocation5 + $0xe]]
        %v685 = vstv %s684
        %v686 = vmul.f32 %v685, %v549
        %v687 = vmul.f32 %v685, %v550
        %v688 = vmul.f32 %v685, %v551
        %692 = vrot.lane.b32.xlu0 %v686, 126
        %v693 = vpop.permute.xlu0 %692
        %694 = vrot.lane.b32.xlu0 %v687, 126
        %v695 = vpop.permute.xlu0 %694
        %696 = vrot.lane.b32.xlu0 %v688, 126
        %v697 = vpop.permute.xlu0 %696
        %v701 = vadd.f32 %v621, %v693
        %v702 = vadd.f32 %v622, %v695
        %v703 = vadd.f32 %v623, %v697
        %s704 = sld [smem:[#allocation5 + $0x17]]
        %v705 = vstv %s704
        %v706 = vmul.f32 %v705, %v549
        %v707 = vmul.f32 %v705, %v550
        %v708 = vmul.f32 %v705, %v551
        %712 = vrot.lane.b32.xlu0 %v706, 126
        %v713 = vpop.permute.xlu0 %712
        %714 = vrot.lane.b32.xlu0 %v707, 126
        %v715 = vpop.permute.xlu0 %714
        %716 = vrot.lane.b32.xlu0 %v708, 126
        %v717 = vpop.permute.xlu0 %716
        %v721 = vadd.f32 %v641, %v713
        %v722 = vadd.f32 %v642, %v715
        %v723 = vadd.f32 %v643, %v717
        %s724 = sld [smem:[#allocation5 + $0x20]]
        %v725 = vstv %s724
        %v726 = vmul.f32 %v725, %v549
        %v727 = vmul.f32 %v725, %v550
        %v728 = vmul.f32 %v725, %v551
        %732 = vrot.lane.b32.xlu0 %v726, 126
        %v733 = vpop.permute.xlu0 %732
        %734 = vrot.lane.b32.xlu0 %v727, 126
        %v735 = vpop.permute.xlu0 %734
        %736 = vrot.lane.b32.xlu0 %v728, 126
        %v737 = vpop.permute.xlu0 %736
        %v741 = vadd.f32 %v661, %v733
        %v742 = vadd.f32 %v662, %v735
        %v743 = vadd.f32 %v663, %v737
        %v744 = vld [vmem:[#allocation2 + $0x2] sm:$0xff]
        %v745 = vld [vmem:[#allocation2 + $0xa] sm:$0xff]
        %v746 = vld [vmem:[#allocation2 + $0x12] sm:$0x3]
        %s747 = sld [smem:[#allocation5 + $0x6]]
        %v748 = vstv %s747
        %v749 = vmul.f32 %v748, %v744
        %v750 = vmul.f32 %v748, %v745
        %v751 = vmul.f32 %v748, %v746
        %v752 = vadd.f32 %v681, %v749
        %v753 = vadd.f32 %v682, %v750
        %v754 = vadd.f32 %v683, %v751
        %s755 = sld [smem:[#allocation5 + $0xf]]
        %v756 = vstv %s755
        %v757 = vmul.f32 %v756, %v744
        %v758 = vmul.f32 %v756, %v745
        %v759 = vmul.f32 %v756, %v746
        %v760 = vadd.f32 %v701, %v757
        %v761 = vadd.f32 %v702, %v758
        %v762 = vadd.f32 %v703, %v759
        %s763 = sld [smem:[#allocation5 + $0x18]]
        %v764 = vstv %s763
        %v765 = vmul.f32 %v764, %v744
        %v766 = vmul.f32 %v764, %v745
        %v767 = vmul.f32 %v764, %v746
        %v768 = vadd.f32 %v721, %v765
        %v769 = vadd.f32 %v722, %v766
        %v770 = vadd.f32 %v723, %v767
        %s771 = sld [smem:[#allocation5 + $0x21]]
        %v772 = vstv %s771
        %v773 = vmul.f32 %v772, %v744
        %v774 = vmul.f32 %v772, %v745
        %v775 = vmul.f32 %v772, %v746
        %v776 = vadd.f32 %v741, %v773
        %v777 = vadd.f32 %v742, %v774
        %v778 = vadd.f32 %v743, %v775
        %s779 = sld [smem:[#allocation5 + $0x7]]
        %v780 = vstv %s779
        %v781 = vmul.f32 %v780, %v744
        %v782 = vmul.f32 %v780, %v745
        %v783 = vmul.f32 %v780, %v746
        %787 = vrot.lane.b32.xlu0 %v781, 127
        %v788 = vpop.permute.xlu0 %787
        %789 = vrot.lane.b32.xlu0 %v782, 127
        %v790 = vpop.permute.xlu0 %789
        %791 = vrot.lane.b32.xlu0 %v783, 127
        %v792 = vpop.permute.xlu0 %791
        %v796 = vadd.f32 %v752, %v788
        %v797 = vadd.f32 %v753, %v790
        %v798 = vadd.f32 %v754, %v792
        %s799 = sld [smem:[#allocation5 + $0x10]]
        %v800 = vstv %s799
        %v801 = vmul.f32 %v800, %v744
        %v802 = vmul.f32 %v800, %v745
        %v803 = vmul.f32 %v800, %v746
        %807 = vrot.lane.b32.xlu0 %v801, 127
        %v808 = vpop.permute.xlu0 %807
        %809 = vrot.lane.b32.xlu0 %v802, 127
        %v810 = vpop.permute.xlu0 %809
        %811 = vrot.lane.b32.xlu0 %v803, 127
        %v812 = vpop.permute.xlu0 %811
        %v816 = vadd.f32 %v760, %v808
        %v817 = vadd.f32 %v761, %v810
        %v818 = vadd.f32 %v762, %v812
        %s819 = sld [smem:[#allocation5 + $0x19]]
        %v820 = vstv %s819
        %v821 = vmul.f32 %v820, %v744
        %v822 = vmul.f32 %v820, %v745
        %v823 = vmul.f32 %v820, %v746
        %827 = vrot.lane.b32.xlu0 %v821, 127
        %v828 = vpop.permute.xlu0 %827
        %829 = vrot.lane.b32.xlu0 %v822, 127
        %v830 = vpop.permute.xlu0 %829
        %831 = vrot.lane.b32.xlu0 %v823, 127
        %v832 = vpop.permute.xlu0 %831
        %v836 = vadd.f32 %v768, %v828
        %v837 = vadd.f32 %v769, %v830
        %v838 = vadd.f32 %v770, %v832
        %s839 = sld [smem:[#allocation5 + $0x22]]
        %v840 = vstv %s839
        %v841 = vmul.f32 %v840, %v744
        %v842 = vmul.f32 %v840, %v745
        %v843 = vmul.f32 %v840, %v746
        %847 = vrot.lane.b32.xlu0 %v841, 127
        %v848 = vpop.permute.xlu0 %847
        %849 = vrot.lane.b32.xlu0 %v842, 127
        %v850 = vpop.permute.xlu0 %849
        %851 = vrot.lane.b32.xlu0 %v843, 127
        %v852 = vpop.permute.xlu0 %851
        %v856 = vadd.f32 %v776, %v848
        %v857 = vadd.f32 %v777, %v850
        %v858 = vadd.f32 %v778, %v852
        %s859 = sld [smem:[#allocation5 + $0x8]]
        %v860 = vstv %s859
        %v861 = vmul.f32 %v860, %v744
        %v862 = vmul.f32 %v860, %v745
        %v863 = vmul.f32 %v860, %v746
        %867 = vrot.lane.b32.xlu0 %v861, 126
        %v868 = vpop.permute.xlu0 %867
        %869 = vrot.lane.b32.xlu0 %v862, 126
        %v870 = vpop.permute.xlu0 %869
        %871 = vrot.lane.b32.xlu0 %v863, 126
        %v872 = vpop.permute.xlu0 %871
        %v876 = vadd.f32 %v796, %v868
        %v877 = vadd.f32 %v797, %v870
        %v878 = vadd.f32 %v798, %v872
        %s879 = sld [smem:[#allocation5 + $0x11]]
        %v880 = vstv %s879
        %v881 = vmul.f32 %v880, %v744
        %v882 = vmul.f32 %v880, %v745
        %v883 = vmul.f32 %v880, %v746
        %887 = vrot.lane.b32.xlu0 %v881, 126
        %v888 = vpop.permute.xlu0 %887
        %889 = vrot.lane.b32.xlu0 %v882, 126
        %v890 = vpop.permute.xlu0 %889
        %891 = vrot.lane.b32.xlu0 %v883, 126
        %v892 = vpop.permute.xlu0 %891
        %v896 = vadd.f32 %v816, %v888
        %v897 = vadd.f32 %v817, %v890
        %v898 = vadd.f32 %v818, %v892
        %s899 = sld [smem:[#allocation5 + $0x1a]]
        %v900 = vstv %s899
        %v901 = vmul.f32 %v900, %v744
        %v902 = vmul.f32 %v900, %v745
        %v903 = vmul.f32 %v900, %v746
        %907 = vrot.lane.b32.xlu0 %v901, 126
        %v908 = vpop.permute.xlu0 %907
        %909 = vrot.lane.b32.xlu0 %v902, 126
        %v910 = vpop.permute.xlu0 %909
        %911 = vrot.lane.b32.xlu0 %v903, 126
        %v912 = vpop.permute.xlu0 %911
        %v916 = vadd.f32 %v836, %v908
        %v917 = vadd.f32 %v837, %v910
        %v918 = vadd.f32 %v838, %v912
        %s919 = sld [smem:[#allocation5 + $0x23]]
        %v920 = vstv %s919
        %v921 = vmul.f32 %v920, %v744
        %v922 = vmul.f32 %v920, %v745
        %v923 = vmul.f32 %v920, %v746
        %927 = vrot.lane.b32.xlu0 %v921, 126
        %v928 = vpop.permute.xlu0 %927
        %929 = vrot.lane.b32.xlu0 %v922, 126
        %v930 = vpop.permute.xlu0 %929
        %931 = vrot.lane.b32.xlu0 %v923, 126
        %v932 = vpop.permute.xlu0 %931
        %v936 = vadd.f32 %v856, %v928
        %v937 = vadd.f32 %v857, %v930
        %v938 = vadd.f32 %v858, %v932
        %s939 = scalar_lea.vmem [#allocation2], 24
        %v940 = vld [vmem:[%s939] sm:$0xff]
        %v941 = vld [vmem:[%s939 + $0x8] sm:$0xff]
        %v942 = vld [vmem:[%s939 + $0x10] sm:$0x3]
        %s943 = sld [smem:[#allocation5 + $0x24]]
        %v944 = vstv %s943
        %v945 = vmul.f32 %v944, %v940
        %v946 = vmul.f32 %v944, %v941
        %v947 = vmul.f32 %v944, %v942
        %v948 = vadd.f32 %v876, %v945
        %v949 = vadd.f32 %v877, %v946
        %v950 = vadd.f32 %v878, %v947
        %s951 = sld [smem:[#allocation5 + $0x2d]]
        %v952 = vstv %s951
        %v953 = vmul.f32 %v952, %v940
        %v954 = vmul.f32 %v952, %v941
        %v955 = vmul.f32 %v952, %v942
        %v956 = vadd.f32 %v896, %v953
        %v957 = vadd.f32 %v897, %v954
        %v958 = vadd.f32 %v898, %v955
        %s959 = sld [smem:[#allocation5 + $0x36]]
        %v960 = vstv %s959
        %v961 = vmul.f32 %v960, %v940
        %v962 = vmul.f32 %v960, %v941
        %v963 = vmul.f32 %v960, %v942
        %v964 = vadd.f32 %v916, %v961
        %v965 = vadd.f32 %v917, %v962
        %v966 = vadd.f32 %v918, %v963
        %s967 = sld [smem:[#allocation5 + $0x3f]]
        %v968 = vstv %s967
        %v969 = vmul.f32 %v968, %v940
        %v970 = vmul.f32 %v968, %v941
        %v971 = vmul.f32 %v968, %v942
        %v972 = vadd.f32 %v936, %v969
        %v973 = vadd.f32 %v937, %v970
        %v974 = vadd.f32 %v938, %v971
        %s975 = sld [smem:[#allocation5 + $0x25]]
        %v976 = vstv %s975
        %v977 = vmul.f32 %v976, %v940
        %v978 = vmul.f32 %v976, %v941
        %v979 = vmul.f32 %v976, %v942
        %983 = vrot.lane.b32.xlu0 %v977, 127
        %v984 = vpop.permute.xlu0 %983
        %985 = vrot.lane.b32.xlu0 %v978, 127
        %v986 = vpop.permute.xlu0 %985
        %987 = vrot.lane.b32.xlu0 %v979, 127
        %v988 = vpop.permute.xlu0 %987
        %v992 = vadd.f32 %v948, %v984
        %v993 = vadd.f32 %v949, %v986
        %v994 = vadd.f32 %v950, %v988
        %s995 = sld [smem:[#allocation5 + $0x2e]]
        %v996 = vstv %s995
        %v997 = vmul.f32 %v996, %v940
        %v998 = vmul.f32 %v996, %v941
        %v999 = vmul.f32 %v996, %v942
        %1003 = vrot.lane.b32.xlu0 %v997, 127
        %v1004 = vpop.permute.xlu0 %1003
        %1005 = vrot.lane.b32.xlu0 %v998, 127
        %v1006 = vpop.permute.xlu0 %1005
        %1007 = vrot.lane.b32.xlu0 %v999, 127
        %v1008 = vpop.permute.xlu0 %1007
        %v1012 = vadd.f32 %v956, %v1004
        %v1013 = vadd.f32 %v957, %v1006
        %v1014 = vadd.f32 %v958, %v1008
        %s1015 = sld [smem:[#allocation5 + $0x37]]
        %v1016 = vstv %s1015
        %v1017 = vmul.f32 %v1016, %v940
        %v1018 = vmul.f32 %v1016, %v941
        %v1019 = vmul.f32 %v1016, %v942
        %1023 = vrot.lane.b32.xlu0 %v1017, 127
        %v1024 = vpop.permute.xlu0 %1023
        %1025 = vrot.lane.b32.xlu0 %v1018, 127
        %v1026 = vpop.permute.xlu0 %1025
        %1027 = vrot.lane.b32.xlu0 %v1019, 127
        %v1028 = vpop.permute.xlu0 %1027
        %v1032 = vadd.f32 %v964, %v1024
        %v1033 = vadd.f32 %v965, %v1026
        %v1034 = vadd.f32 %v966, %v1028
        %s1035 = sld [smem:[#allocation5 + $0x40]]
        %v1036 = vstv %s1035
        %v1037 = vmul.f32 %v1036, %v940
        %v1038 = vmul.f32 %v1036, %v941
        %v1039 = vmul.f32 %v1036, %v942
        %1043 = vrot.lane.b32.xlu0 %v1037, 127
        %v1044 = vpop.permute.xlu0 %1043
        %1045 = vrot.lane.b32.xlu0 %v1038, 127
        %v1046 = vpop.permute.xlu0 %1045
        %1047 = vrot.lane.b32.xlu0 %v1039, 127
        %v1048 = vpop.permute.xlu0 %1047
        %v1052 = vadd.f32 %v972, %v1044
        %v1053 = vadd.f32 %v973, %v1046
        %v1054 = vadd.f32 %v974, %v1048
        %s1055 = sld [smem:[#allocation5 + $0x26]]
        %v1056 = vstv %s1055
        %v1057 = vmul.f32 %v1056, %v940
        %v1058 = vmul.f32 %v1056, %v941
        %v1059 = vmul.f32 %v1056, %v942
        %1063 = vrot.lane.b32.xlu0 %v1057, 126
        %v1064 = vpop.permute.xlu0 %1063
        %1065 = vrot.lane.b32.xlu0 %v1058, 126
        %v1066 = vpop.permute.xlu0 %1065
        %1067 = vrot.lane.b32.xlu0 %v1059, 126
        %v1068 = vpop.permute.xlu0 %1067
        %v1072 = vadd.f32 %v992, %v1064
        %v1073 = vadd.f32 %v993, %v1066
        %v1074 = vadd.f32 %v994, %v1068
        %s1075 = sld [smem:[#allocation5 + $0x2f]]
        %v1076 = vstv %s1075
        %v1077 = vmul.f32 %v1076, %v940
        %v1078 = vmul.f32 %v1076, %v941
        %v1079 = vmul.f32 %v1076, %v942
        %1083 = vrot.lane.b32.xlu0 %v1077, 126
        %v1084 = vpop.permute.xlu0 %1083
        %1085 = vrot.lane.b32.xlu0 %v1078, 126
        %v1086 = vpop.permute.xlu0 %1085
        %1087 = vrot.lane.b32.xlu0 %v1079, 126
        %v1088 = vpop.permute.xlu0 %1087
        %v1092 = vadd.f32 %v1012, %v1084
        %v1093 = vadd.f32 %v1013, %v1086
        %v1094 = vadd.f32 %v1014, %v1088
        %s1095 = sld [smem:[#allocation5 + $0x38]]
        %v1096 = vstv %s1095
        %v1097 = vmul.f32 %v1096, %v940
        %v1098 = vmul.f32 %v1096, %v941
        %v1099 = vmul.f32 %v1096, %v942
        %1103 = vrot.lane.b32.xlu0 %v1097, 126
        %v1104 = vpop.permute.xlu0 %1103
        %1105 = vrot.lane.b32.xlu0 %v1098, 126
        %v1106 = vpop.permute.xlu0 %1105
        %1107 = vrot.lane.b32.xlu0 %v1099, 126
        %v1108 = vpop.permute.xlu0 %1107
        %v1112 = vadd.f32 %v1032, %v1104
        %v1113 = vadd.f32 %v1033, %v1106
        %v1114 = vadd.f32 %v1034, %v1108
        %s1115 = sld [smem:[#allocation5 + $0x41]]
        %v1116 = vstv %s1115
        %v1117 = vmul.f32 %v1116, %v940
        %v1118 = vmul.f32 %v1116, %v941
        %v1119 = vmul.f32 %v1116, %v942
        %1123 = vrot.lane.b32.xlu0 %v1117, 126
        %v1124 = vpop.permute.xlu0 %1123
        %1125 = vrot.lane.b32.xlu0 %v1118, 126
        %v1126 = vpop.permute.xlu0 %1125
        %1127 = vrot.lane.b32.xlu0 %v1119, 126
        %v1128 = vpop.permute.xlu0 %1127
        %v1132 = vadd.f32 %v1052, %v1124
        %v1133 = vadd.f32 %v1053, %v1126
        %v1134 = vadd.f32 %v1054, %v1128
        %v1135 = vld [vmem:[%s939 + $0x1] sm:$0xff]
        %v1136 = vld [vmem:[%s939 + $0x9] sm:$0xff]
        %v1137 = vld [vmem:[%s939 + $0x11] sm:$0x3]
        %s1138 = sld [smem:[#allocation5 + $0x27]]
        %v1139 = vstv %s1138
        %v1140 = vmul.f32 %v1139, %v1135
        %v1141 = vmul.f32 %v1139, %v1136
        %v1142 = vmul.f32 %v1139, %v1137
        %v1143 = vadd.f32 %v1072, %v1140
        %v1144 = vadd.f32 %v1073, %v1141
        %v1145 = vadd.f32 %v1074, %v1142
        %s1146 = sld [smem:[#allocation5 + $0x30]]
        %v1147 = vstv %s1146
        %v1148 = vmul.f32 %v1147, %v1135
        %v1149 = vmul.f32 %v1147, %v1136
        %v1150 = vmul.f32 %v1147, %v1137
        %v1151 = vadd.f32 %v1092, %v1148
        %v1152 = vadd.f32 %v1093, %v1149
        %v1153 = vadd.f32 %v1094, %v1150
        %s1154 = sld [smem:[#allocation5 + $0x39]]
        %v1155 = vstv %s1154
        %v1156 = vmul.f32 %v1155, %v1135
        %v1157 = vmul.f32 %v1155, %v1136
        %v1158 = vmul.f32 %v1155, %v1137
        %v1159 = vadd.f32 %v1112, %v1156
        %v1160 = vadd.f32 %v1113, %v1157
        %v1161 = vadd.f32 %v1114, %v1158
        %s1162 = sld [smem:[#allocation5 + $0x42]]
        %v1163 = vstv %s1162
        %v1164 = vmul.f32 %v1163, %v1135
        %v1165 = vmul.f32 %v1163, %v1136
        %v1166 = vmul.f32 %v1163, %v1137
        %v1167 = vadd.f32 %v1132, %v1164
        %v1168 = vadd.f32 %v1133, %v1165
        %v1169 = vadd.f32 %v1134, %v1166
        %s1170 = sld [smem:[#allocation5 + $0x28]]
        %v1171 = vstv %s1170
        %v1172 = vmul.f32 %v1171, %v1135
        %v1173 = vmul.f32 %v1171, %v1136
        %v1174 = vmul.f32 %v1171, %v1137
        %1178 = vrot.lane.b32.xlu0 %v1172, 127
        %v1179 = vpop.permute.xlu0 %1178
        %1180 = vrot.lane.b32.xlu0 %v1173, 127
        %v1181 = vpop.permute.xlu0 %1180
        %1182 = vrot.lane.b32.xlu0 %v1174, 127
        %v1183 = vpop.permute.xlu0 %1182
        %v1187 = vadd.f32 %v1143, %v1179
        %v1188 = vadd.f32 %v1144, %v1181
        %v1189 = vadd.f32 %v1145, %v1183
        %s1190 = sld [smem:[#allocation5 + $0x31]]
        %v1191 = vstv %s1190
        %v1192 = vmul.f32 %v1191, %v1135
        %v1193 = vmul.f32 %v1191, %v1136
        %v1194 = vmul.f32 %v1191, %v1137
        %1198 = vrot.lane.b32.xlu0 %v1192, 127
        %v1199 = vpop.permute.xlu0 %1198
        %1200 = vrot.lane.b32.xlu0 %v1193, 127
        %v1201 = vpop.permute.xlu0 %1200
        %1202 = vrot.lane.b32.xlu0 %v1194, 127
        %v1203 = vpop.permute.xlu0 %1202
        %v1207 = vadd.f32 %v1151, %v1199
        %v1208 = vadd.f32 %v1152, %v1201
        %v1209 = vadd.f32 %v1153, %v1203
        %s1210 = sld [smem:[#allocation5 + $0x3a]]
        %v1211 = vstv %s1210
        %v1212 = vmul.f32 %v1211, %v1135
        %v1213 = vmul.f32 %v1211, %v1136
        %v1214 = vmul.f32 %v1211, %v1137
        %1218 = vrot.lane.b32.xlu0 %v1212, 127
        %v1219 = vpop.permute.xlu0 %1218
        %1220 = vrot.lane.b32.xlu0 %v1213, 127
        %v1221 = vpop.permute.xlu0 %1220
        %1222 = vrot.lane.b32.xlu0 %v1214, 127
        %v1223 = vpop.permute.xlu0 %1222
        %v1227 = vadd.f32 %v1159, %v1219
        %v1228 = vadd.f32 %v1160, %v1221
        %v1229 = vadd.f32 %v1161, %v1223
        %s1230 = sld [smem:[#allocation5 + $0x43]]
        %v1231 = vstv %s1230
        %v1232 = vmul.f32 %v1231, %v1135
        %v1233 = vmul.f32 %v1231, %v1136
        %v1234 = vmul.f32 %v1231, %v1137
        %1238 = vrot.lane.b32.xlu0 %v1232, 127
        %v1239 = vpop.permute.xlu0 %1238
        %1240 = vrot.lane.b32.xlu0 %v1233, 127
        %v1241 = vpop.permute.xlu0 %1240
        %1242 = vrot.lane.b32.xlu0 %v1234, 127
        %v1243 = vpop.permute.xlu0 %1242
        %v1247 = vadd.f32 %v1167, %v1239
        %v1248 = vadd.f32 %v1168, %v1241
        %v1249 = vadd.f32 %v1169, %v1243
        %s1250 = sld [smem:[#allocation5 + $0x29]]
        %v1251 = vstv %s1250
        %v1252 = vmul.f32 %v1251, %v1135
        %v1253 = vmul.f32 %v1251, %v1136
        %v1254 = vmul.f32 %v1251, %v1137
        %1258 = vrot.lane.b32.xlu0 %v1252, 126
        %v1259 = vpop.permute.xlu0 %1258
        %1260 = vrot.lane.b32.xlu0 %v1253, 126
        %v1261 = vpop.permute.xlu0 %1260
        %1262 = vrot.lane.b32.xlu0 %v1254, 126
        %v1263 = vpop.permute.xlu0 %1262
        %v1267 = vadd.f32 %v1187, %v1259
        %v1268 = vadd.f32 %v1188, %v1261
        %v1269 = vadd.f32 %v1189, %v1263
        %s1270 = sld [smem:[#allocation5 + $0x32]]
        %v1271 = vstv %s1270
        %v1272 = vmul.f32 %v1271, %v1135
        %v1273 = vmul.f32 %v1271, %v1136
        %v1274 = vmul.f32 %v1271, %v1137
        %1278 = vrot.lane.b32.xlu0 %v1272, 126
        %v1279 = vpop.permute.xlu0 %1278
        %1280 = vrot.lane.b32.xlu0 %v1273, 126
        %v1281 = vpop.permute.xlu0 %1280
        %1282 = vrot.lane.b32.xlu0 %v1274, 126
        %v1283 = vpop.permute.xlu0 %1282
        %v1287 = vadd.f32 %v1207, %v1279
        %v1288 = vadd.f32 %v1208, %v1281
        %v1289 = vadd.f32 %v1209, %v1283
        %s1290 = sld [smem:[#allocation5 + $0x3b]]
        %v1291 = vstv %s1290
        %v1292 = vmul.f32 %v1291, %v1135
        %v1293 = vmul.f32 %v1291, %v1136
        %v1294 = vmul.f32 %v1291, %v1137
        %1298 = vrot.lane.b32.xlu0 %v1292, 126
        %v1299 = vpop.permute.xlu0 %1298
        %1300 = vrot.lane.b32.xlu0 %v1293, 126
        %v1301 = vpop.permute.xlu0 %1300
        %1302 = vrot.lane.b32.xlu0 %v1294, 126
        %v1303 = vpop.permute.xlu0 %1302
        %v1307 = vadd.f32 %v1227, %v1299
        %v1308 = vadd.f32 %v1228, %v1301
        %v1309 = vadd.f32 %v1229, %v1303
        %s1310 = sld [smem:[#allocation5 + $0x44]]
        %v1311 = vstv %s1310
        %v1312 = vmul.f32 %v1311, %v1135
        %v1313 = vmul.f32 %v1311, %v1136
        %v1314 = vmul.f32 %v1311, %v1137
        %1318 = vrot.lane.b32.xlu0 %v1312, 126
        %v1319 = vpop.permute.xlu0 %1318
        %1320 = vrot.lane.b32.xlu0 %v1313, 126
        %v1321 = vpop.permute.xlu0 %1320
        %1322 = vrot.lane.b32.xlu0 %v1314, 126
        %v1323 = vpop.permute.xlu0 %1322
        %v1327 = vadd.f32 %v1247, %v1319
        %v1328 = vadd.f32 %v1248, %v1321
        %v1329 = vadd.f32 %v1249, %v1323
        %v1330 = vld [vmem:[%s939 + $0x2] sm:$0xff]
        %v1331 = vld [vmem:[%s939 + $0xa] sm:$0xff]
        %v1332 = vld [vmem:[%s939 + $0x12] sm:$0x3]
        %s1333 = sld [smem:[#allocation5 + $0x2a]]
        %v1334 = vstv %s1333
        %v1335 = vmul.f32 %v1334, %v1330
        %v1336 = vmul.f32 %v1334, %v1331
        %v1337 = vmul.f32 %v1334, %v1332
        %v1338 = vadd.f32 %v1267, %v1335
        %v1339 = vadd.f32 %v1268, %v1336
        %v1340 = vadd.f32 %v1269, %v1337
        %s1341 = sld [smem:[#allocation5 + $0x33]]
        %v1342 = vstv %s1341
        %v1343 = vmul.f32 %v1342, %v1330
        %v1344 = vmul.f32 %v1342, %v1331
        %v1345 = vmul.f32 %v1342, %v1332
        %v1346 = vadd.f32 %v1287, %v1343
        %v1347 = vadd.f32 %v1288, %v1344
        %v1348 = vadd.f32 %v1289, %v1345
        %s1349 = sld [smem:[#allocation5 + $0x3c]]
        %v1350 = vstv %s1349
        %v1351 = vmul.f32 %v1350, %v1330
        %v1352 = vmul.f32 %v1350, %v1331
        %v1353 = vmul.f32 %v1350, %v1332
        %v1354 = vadd.f32 %v1307, %v1351
        %v1355 = vadd.f32 %v1308, %v1352
        %v1356 = vadd.f32 %v1309, %v1353
        %s1357 = sld [smem:[#allocation5 + $0x45]]
        %v1358 = vstv %s1357
        %v1359 = vmul.f32 %v1358, %v1330
        %v1360 = vmul.f32 %v1358, %v1331
        %v1361 = vmul.f32 %v1358, %v1332
        %v1362 = vadd.f32 %v1327, %v1359
        %v1363 = vadd.f32 %v1328, %v1360
        %v1364 = vadd.f32 %v1329, %v1361
        %s1365 = sld [smem:[#allocation5 + $0x2b]]
        %v1366 = vstv %s1365
        %v1367 = vmul.f32 %v1366, %v1330
        %v1368 = vmul.f32 %v1366, %v1331
        %v1369 = vmul.f32 %v1366, %v1332
        %1373 = vrot.lane.b32.xlu0 %v1367, 127
        %v1374 = vpop.permute.xlu0 %1373
        %1375 = vrot.lane.b32.xlu0 %v1368, 127
        %v1376 = vpop.permute.xlu0 %1375
        %1377 = vrot.lane.b32.xlu0 %v1369, 127
        %v1378 = vpop.permute.xlu0 %1377
        %v1382 = vadd.f32 %v1338, %v1374
        %v1383 = vadd.f32 %v1339, %v1376
        %v1384 = vadd.f32 %v1340, %v1378
        %s1385 = sld [smem:[#allocation5 + $0x34]]
        %v1386 = vstv %s1385
        %v1387 = vmul.f32 %v1386, %v1330
        %v1388 = vmul.f32 %v1386, %v1331
        %v1389 = vmul.f32 %v1386, %v1332
        %1393 = vrot.lane.b32.xlu0 %v1387, 127
        %v1394 = vpop.permute.xlu0 %1393
        %1395 = vrot.lane.b32.xlu0 %v1388, 127
        %v1396 = vpop.permute.xlu0 %1395
        %1397 = vrot.lane.b32.xlu0 %v1389, 127
        %v1398 = vpop.permute.xlu0 %1397
        %v1402 = vadd.f32 %v1346, %v1394
        %v1403 = vadd.f32 %v1347, %v1396
        %v1404 = vadd.f32 %v1348, %v1398
        %s1405 = sld [smem:[#allocation5 + $0x3d]]
        %v1406 = vstv %s1405
        %v1407 = vmul.f32 %v1406, %v1330
        %v1408 = vmul.f32 %v1406, %v1331
        %v1409 = vmul.f32 %v1406, %v1332
        %1413 = vrot.lane.b32.xlu0 %v1407, 127
        %v1414 = vpop.permute.xlu0 %1413
        %1415 = vrot.lane.b32.xlu0 %v1408, 127
        %v1416 = vpop.permute.xlu0 %1415
        %1417 = vrot.lane.b32.xlu0 %v1409, 127
        %v1418 = vpop.permute.xlu0 %1417
        %v1422 = vadd.f32 %v1354, %v1414
        %v1423 = vadd.f32 %v1355, %v1416
        %v1424 = vadd.f32 %v1356, %v1418
        %s1425 = sld [smem:[#allocation5 + $0x46]]
        %v1426 = vstv %s1425
        %v1427 = vmul.f32 %v1426, %v1330
        %v1428 = vmul.f32 %v1426, %v1331
        %v1429 = vmul.f32 %v1426, %v1332
        %1433 = vrot.lane.b32.xlu0 %v1427, 127
        %v1434 = vpop.permute.xlu0 %1433
        %1435 = vrot.lane.b32.xlu0 %v1428, 127
        %v1436 = vpop.permute.xlu0 %1435
        %1437 = vrot.lane.b32.xlu0 %v1429, 127
        %v1438 = vpop.permute.xlu0 %1437
        %v1442 = vadd.f32 %v1362, %v1434
        %v1443 = vadd.f32 %v1363, %v1436
        %v1444 = vadd.f32 %v1364, %v1438
        %s1445 = sld [smem:[#allocation5 + $0x2c]]
        %v1446 = vstv %s1445
        %v1447 = vmul.f32 %v1446, %v1330
        %v1448 = vmul.f32 %v1446, %v1331
        %v1449 = vmul.f32 %v1446, %v1332
        %1453 = vrot.lane.b32.xlu0 %v1447, 126
        %v1454 = vpop.permute.xlu0 %1453
        %1455 = vrot.lane.b32.xlu0 %v1448, 126
        %v1456 = vpop.permute.xlu0 %1455
        %1457 = vrot.lane.b32.xlu0 %v1449, 126
        %v1458 = vpop.permute.xlu0 %1457
        %v1462 = vadd.f32 %v1382, %v1454
        %v1463 = vadd.f32 %v1383, %v1456
        %v1464 = vadd.f32 %v1384, %v1458
        %s1465 = sld [smem:[#allocation5 + $0x35]]
        %v1466 = vstv %s1465
        %v1467 = vmul.f32 %v1466, %v1330
        %v1468 = vmul.f32 %v1466, %v1331
        %v1469 = vmul.f32 %v1466, %v1332
        %1473 = vrot.lane.b32.xlu0 %v1467, 126
        %v1474 = vpop.permute.xlu0 %1473
        %1475 = vrot.lane.b32.xlu0 %v1468, 126
        %v1476 = vpop.permute.xlu0 %1475
        %1477 = vrot.lane.b32.xlu0 %v1469, 126
        %v1478 = vpop.permute.xlu0 %1477
        %v1482 = vadd.f32 %v1402, %v1474
        %v1483 = vadd.f32 %v1403, %v1476
        %v1484 = vadd.f32 %v1404, %v1478
        %s1485 = sld [smem:[#allocation5 + $0x3e]]
        %v1486 = vstv %s1485
        %v1487 = vmul.f32 %v1486, %v1330
        %v1488 = vmul.f32 %v1486, %v1331
        %v1489 = vmul.f32 %v1486, %v1332
        %1493 = vrot.lane.b32.xlu0 %v1487, 126
        %v1494 = vpop.permute.xlu0 %1493
        %1495 = vrot.lane.b32.xlu0 %v1488, 126
        %v1496 = vpop.permute.xlu0 %1495
        %1497 = vrot.lane.b32.xlu0 %v1489, 126
        %v1498 = vpop.permute.xlu0 %1497
        %v1502 = vadd.f32 %v1422, %v1494
        %v1503 = vadd.f32 %v1423, %v1496
        %v1504 = vadd.f32 %v1424, %v1498
        %s1505 = sld [smem:[#allocation5 + $0x47]]
        %v1506 = vstv %s1505
        %v1507 = vmul.f32 %v1506, %v1330
        %v1508 = vmul.f32 %v1506, %v1331
        %v1509 = vmul.f32 %v1506, %v1332
        %1513 = vrot.lane.b32.xlu0 %v1507, 126
        %v1514 = vpop.permute.xlu0 %1513
        %1515 = vrot.lane.b32.xlu0 %v1508, 126
        %v1516 = vpop.permute.xlu0 %1515
        %1517 = vrot.lane.b32.xlu0 %v1509, 126
        %v1518 = vpop.permute.xlu0 %1517
        %v1522 = vadd.f32 %v1442, %v1514
        %v1523 = vadd.f32 %v1443, %v1516
        %v1524 = vadd.f32 %v1444, %v1518
        %s1525 = scalar_lea.vmem [#allocation2], 48
        %v1526 = vld [vmem:[%s1525] sm:$0xff]
        %v1527 = vld [vmem:[%s1525 + $0x8] sm:$0xff]
        %v1528 = vld [vmem:[%s1525 + $0x10] sm:$0x3]
        %s1529 = sld [smem:[#allocation5 + $0x48]]
        %v1530 = vstv %s1529
        %v1531 = vmul.f32 %v1530, %v1526
        %v1532 = vmul.f32 %v1530, %v1527
        %v1533 = vmul.f32 %v1530, %v1528
        %v1534 = vadd.f32 %v1462, %v1531
        %v1535 = vadd.f32 %v1463, %v1532
        %v1536 = vadd.f32 %v1464, %v1533
        %s1537 = sld [smem:[#allocation5 + $0x51]]
        %v1538 = vstv %s1537
        %v1539 = vmul.f32 %v1538, %v1526
        %v1540 = vmul.f32 %v1538, %v1527
        %v1541 = vmul.f32 %v1538, %v1528
        %v1542 = vadd.f32 %v1482, %v1539
        %v1543 = vadd.f32 %v1483, %v1540
        %v1544 = vadd.f32 %v1484, %v1541
        %s1545 = sld [smem:[#allocation5 + $0x5a]]
        %v1546 = vstv %s1545
        %v1547 = vmul.f32 %v1546, %v1526
        %v1548 = vmul.f32 %v1546, %v1527
        %v1549 = vmul.f32 %v1546, %v1528
        %v1550 = vadd.f32 %v1502, %v1547
        %v1551 = vadd.f32 %v1503, %v1548
        %v1552 = vadd.f32 %v1504, %v1549
        %s1553 = sld [smem:[#allocation5 + $0x63]]
        %v1554 = vstv %s1553
        %v1555 = vmul.f32 %v1554, %v1526
        %v1556 = vmul.f32 %v1554, %v1527
        %v1557 = vmul.f32 %v1554, %v1528
        %v1558 = vadd.f32 %v1522, %v1555
        %v1559 = vadd.f32 %v1523, %v1556
        %v1560 = vadd.f32 %v1524, %v1557
        %s1561 = sld [smem:[#allocation5 + $0x49]]
        %v1562 = vstv %s1561
        %v1563 = vmul.f32 %v1562, %v1526
        %v1564 = vmul.f32 %v1562, %v1527
        %v1565 = vmul.f32 %v1562, %v1528
        %1569 = vrot.lane.b32.xlu0 %v1563, 127
        %v1570 = vpop.permute.xlu0 %1569
        %1571 = vrot.lane.b32.xlu0 %v1564, 127
        %v1572 = vpop.permute.xlu0 %1571
        %1573 = vrot.lane.b32.xlu0 %v1565, 127
        %v1574 = vpop.permute.xlu0 %1573
        %v1578 = vadd.f32 %v1534, %v1570
        %v1579 = vadd.f32 %v1535, %v1572
        %v1580 = vadd.f32 %v1536, %v1574
        %s1581 = sld [smem:[#allocation5 + $0x52]]
        %v1582 = vstv %s1581
        %v1583 = vmul.f32 %v1582, %v1526
        %v1584 = vmul.f32 %v1582, %v1527
        %v1585 = vmul.f32 %v1582, %v1528
        %1589 = vrot.lane.b32.xlu0 %v1583, 127
        %v1590 = vpop.permute.xlu0 %1589
        %1591 = vrot.lane.b32.xlu0 %v1584, 127
        %v1592 = vpop.permute.xlu0 %1591
        %1593 = vrot.lane.b32.xlu0 %v1585, 127
        %v1594 = vpop.permute.xlu0 %1593
        %v1598 = vadd.f32 %v1542, %v1590
        %v1599 = vadd.f32 %v1543, %v1592
        %v1600 = vadd.f32 %v1544, %v1594
        %s1601 = sld [smem:[#allocation5 + $0x5b]]
        %v1602 = vstv %s1601
        %v1603 = vmul.f32 %v1602, %v1526
        %v1604 = vmul.f32 %v1602, %v1527
        %v1605 = vmul.f32 %v1602, %v1528
        %1609 = vrot.lane.b32.xlu0 %v1603, 127
        %v1610 = vpop.permute.xlu0 %1609
        %1611 = vrot.lane.b32.xlu0 %v1604, 127
        %v1612 = vpop.permute.xlu0 %1611
        %1613 = vrot.lane.b32.xlu0 %v1605, 127
        %v1614 = vpop.permute.xlu0 %1613
        %v1618 = vadd.f32 %v1550, %v1610
        %v1619 = vadd.f32 %v1551, %v1612
        %v1620 = vadd.f32 %v1552, %v1614
        %s1621 = sld [smem:[#allocation5 + $0x64]]
        %v1622 = vstv %s1621
        %v1623 = vmul.f32 %v1622, %v1526
        %v1624 = vmul.f32 %v1622, %v1527
        %v1625 = vmul.f32 %v1622, %v1528
        %1629 = vrot.lane.b32.xlu0 %v1623, 127
        %v1630 = vpop.permute.xlu0 %1629
        %1631 = vrot.lane.b32.xlu0 %v1624, 127
        %v1632 = vpop.permute.xlu0 %1631
        %1633 = vrot.lane.b32.xlu0 %v1625, 127
        %v1634 = vpop.permute.xlu0 %1633
        %v1638 = vadd.f32 %v1558, %v1630
        %v1639 = vadd.f32 %v1559, %v1632
        %v1640 = vadd.f32 %v1560, %v1634
        %s1641 = sld [smem:[#allocation5 + $0x4a]]
        %v1642 = vstv %s1641
        %v1643 = vmul.f32 %v1642, %v1526
        %v1644 = vmul.f32 %v1642, %v1527
        %v1645 = vmul.f32 %v1642, %v1528
        %1649 = vrot.lane.b32.xlu0 %v1643, 126
        %v1650 = vpop.permute.xlu0 %1649
        %1651 = vrot.lane.b32.xlu0 %v1644, 126
        %v1652 = vpop.permute.xlu0 %1651
        %1653 = vrot.lane.b32.xlu0 %v1645, 126
        %v1654 = vpop.permute.xlu0 %1653
        %v1658 = vadd.f32 %v1578, %v1650
        %v1659 = vadd.f32 %v1579, %v1652
        %v1660 = vadd.f32 %v1580, %v1654
        %s1661 = sld [smem:[#allocation5 + $0x53]]
        %v1662 = vstv %s1661
        %v1663 = vmul.f32 %v1662, %v1526
        %v1664 = vmul.f32 %v1662, %v1527
        %v1665 = vmul.f32 %v1662, %v1528
        %1669 = vrot.lane.b32.xlu0 %v1663, 126
        %v1670 = vpop.permute.xlu0 %1669
        %1671 = vrot.lane.b32.xlu0 %v1664, 126
        %v1672 = vpop.permute.xlu0 %1671
        %1673 = vrot.lane.b32.xlu0 %v1665, 126
        %v1674 = vpop.permute.xlu0 %1673
        %v1678 = vadd.f32 %v1598, %v1670
        %v1679 = vadd.f32 %v1599, %v1672
        %v1680 = vadd.f32 %v1600, %v1674
        %s1681 = sld [smem:[#allocation5 + $0x5c]]
        %v1682 = vstv %s1681
        %v1683 = vmul.f32 %v1682, %v1526
        %v1684 = vmul.f32 %v1682, %v1527
        %v1685 = vmul.f32 %v1682, %v1528
        %1689 = vrot.lane.b32.xlu0 %v1683, 126
        %v1690 = vpop.permute.xlu0 %1689
        %1691 = vrot.lane.b32.xlu0 %v1684, 126
        %v1692 = vpop.permute.xlu0 %1691
        %1693 = vrot.lane.b32.xlu0 %v1685, 126
        %v1694 = vpop.permute.xlu0 %1693
        %v1698 = vadd.f32 %v1618, %v1690
        %v1699 = vadd.f32 %v1619, %v1692
        %v1700 = vadd.f32 %v1620, %v1694
        %s1701 = sld [smem:[#allocation5 + $0x65]]
        %v1702 = vstv %s1701
        %v1703 = vmul.f32 %v1702, %v1526
        %v1704 = vmul.f32 %v1702, %v1527
        %v1705 = vmul.f32 %v1702, %v1528
        %1709 = vrot.lane.b32.xlu0 %v1703, 126
        %v1710 = vpop.permute.xlu0 %1709
        %1711 = vrot.lane.b32.xlu0 %v1704, 126
        %v1712 = vpop.permute.xlu0 %1711
        %1713 = vrot.lane.b32.xlu0 %v1705, 126
        %v1714 = vpop.permute.xlu0 %1713
        %v1718 = vadd.f32 %v1638, %v1710
        %v1719 = vadd.f32 %v1639, %v1712
        %v1720 = vadd.f32 %v1640, %v1714
        %v1721 = vld [vmem:[%s1525 + $0x1] sm:$0xff]
        %v1722 = vld [vmem:[%s1525 + $0x9] sm:$0xff]
        %v1723 = vld [vmem:[%s1525 + $0x11] sm:$0x3]
        %s1724 = sld [smem:[#allocation5 + $0x4b]]
        %v1725 = vstv %s1724
        %v1726 = vmul.f32 %v1725, %v1721
        %v1727 = vmul.f32 %v1725, %v1722
        %v1728 = vmul.f32 %v1725, %v1723
        %v1729 = vadd.f32 %v1658, %v1726
        %v1730 = vadd.f32 %v1659, %v1727
        %v1731 = vadd.f32 %v1660, %v1728
        %s1732 = sld [smem:[#allocation5 + $0x54]]
        %v1733 = vstv %s1732
        %v1734 = vmul.f32 %v1733, %v1721
        %v1735 = vmul.f32 %v1733, %v1722
        %v1736 = vmul.f32 %v1733, %v1723
        %v1737 = vadd.f32 %v1678, %v1734
        %v1738 = vadd.f32 %v1679, %v1735
        %v1739 = vadd.f32 %v1680, %v1736
        %s1740 = sld [smem:[#allocation5 + $0x5d]]
        %v1741 = vstv %s1740
        %v1742 = vmul.f32 %v1741, %v1721
        %v1743 = vmul.f32 %v1741, %v1722
        %v1744 = vmul.f32 %v1741, %v1723
        %v1745 = vadd.f32 %v1698, %v1742
        %v1746 = vadd.f32 %v1699, %v1743
        %v1747 = vadd.f32 %v1700, %v1744
        %s1748 = sld [smem:[#allocation5 + $0x66]]
        %v1749 = vstv %s1748
        %v1750 = vmul.f32 %v1749, %v1721
        %v1751 = vmul.f32 %v1749, %v1722
        %v1752 = vmul.f32 %v1749, %v1723
        %v1753 = vadd.f32 %v1718, %v1750
        %v1754 = vadd.f32 %v1719, %v1751
        %v1755 = vadd.f32 %v1720, %v1752
        %s1756 = sld [smem:[#allocation5 + $0x4c]]
        %v1757 = vstv %s1756
        %v1758 = vmul.f32 %v1757, %v1721
        %v1759 = vmul.f32 %v1757, %v1722
        %v1760 = vmul.f32 %v1757, %v1723
        %1764 = vrot.lane.b32.xlu0 %v1758, 127
        %v1765 = vpop.permute.xlu0 %1764
        %1766 = vrot.lane.b32.xlu0 %v1759, 127
        %v1767 = vpop.permute.xlu0 %1766
        %1768 = vrot.lane.b32.xlu0 %v1760, 127
        %v1769 = vpop.permute.xlu0 %1768
        %v1773 = vadd.f32 %v1729, %v1765
        %v1774 = vadd.f32 %v1730, %v1767
        %v1775 = vadd.f32 %v1731, %v1769
        %s1776 = sld [smem:[#allocation5 + $0x55]]
        %v1777 = vstv %s1776
        %v1778 = vmul.f32 %v1777, %v1721
        %v1779 = vmul.f32 %v1777, %v1722
        %v1780 = vmul.f32 %v1777, %v1723
        %1784 = vrot.lane.b32.xlu0 %v1778, 127
        %v1785 = vpop.permute.xlu0 %1784
        %1786 = vrot.lane.b32.xlu0 %v1779, 127
        %v1787 = vpop.permute.xlu0 %1786
        %1788 = vrot.lane.b32.xlu0 %v1780, 127
        %v1789 = vpop.permute.xlu0 %1788
        %v1793 = vadd.f32 %v1737, %v1785
        %v1794 = vadd.f32 %v1738, %v1787
        %v1795 = vadd.f32 %v1739, %v1789
        %s1796 = sld [smem:[#allocation5 + $0x5e]]
        %v1797 = vstv %s1796
        %v1798 = vmul.f32 %v1797, %v1721
        %v1799 = vmul.f32 %v1797, %v1722
        %v1800 = vmul.f32 %v1797, %v1723
        %1804 = vrot.lane.b32.xlu0 %v1798, 127
        %v1805 = vpop.permute.xlu0 %1804
        %1806 = vrot.lane.b32.xlu0 %v1799, 127
        %v1807 = vpop.permute.xlu0 %1806
        %1808 = vrot.lane.b32.xlu0 %v1800, 127
        %v1809 = vpop.permute.xlu0 %1808
        %v1813 = vadd.f32 %v1745, %v1805
        %v1814 = vadd.f32 %v1746, %v1807
        %v1815 = vadd.f32 %v1747, %v1809
        %s1816 = sld [smem:[#allocation5 + $0x67]]
        %v1817 = vstv %s1816
        %v1818 = vmul.f32 %v1817, %v1721
        %v1819 = vmul.f32 %v1817, %v1722
        %v1820 = vmul.f32 %v1817, %v1723
        %1824 = vrot.lane.b32.xlu0 %v1818, 127
        %v1825 = vpop.permute.xlu0 %1824
        %1826 = vrot.lane.b32.xlu0 %v1819, 127
        %v1827 = vpop.permute.xlu0 %1826
        %1828 = vrot.lane.b32.xlu0 %v1820, 127
        %v1829 = vpop.permute.xlu0 %1828
        %v1833 = vadd.f32 %v1753, %v1825
        %v1834 = vadd.f32 %v1754, %v1827
        %v1835 = vadd.f32 %v1755, %v1829
        %s1836 = sld [smem:[#allocation5 + $0x4d]]
        %v1837 = vstv %s1836
        %v1838 = vmul.f32 %v1837, %v1721
        %v1839 = vmul.f32 %v1837, %v1722
        %v1840 = vmul.f32 %v1837, %v1723
        %1844 = vrot.lane.b32.xlu0 %v1838, 126
        %v1845 = vpop.permute.xlu0 %1844
        %1846 = vrot.lane.b32.xlu0 %v1839, 126
        %v1847 = vpop.permute.xlu0 %1846
        %1848 = vrot.lane.b32.xlu0 %v1840, 126
        %v1849 = vpop.permute.xlu0 %1848
        %v1853 = vadd.f32 %v1773, %v1845
        %v1854 = vadd.f32 %v1774, %v1847
        %v1855 = vadd.f32 %v1775, %v1849
        %s1856 = sld [smem:[#allocation5 + $0x56]]
        %v1857 = vstv %s1856
        %v1858 = vmul.f32 %v1857, %v1721
        %v1859 = vmul.f32 %v1857, %v1722
        %v1860 = vmul.f32 %v1857, %v1723
        %1864 = vrot.lane.b32.xlu0 %v1858, 126
        %v1865 = vpop.permute.xlu0 %1864
        %1866 = vrot.lane.b32.xlu0 %v1859, 126
        %v1867 = vpop.permute.xlu0 %1866
        %1868 = vrot.lane.b32.xlu0 %v1860, 126
        %v1869 = vpop.permute.xlu0 %1868
        %v1873 = vadd.f32 %v1793, %v1865
        %v1874 = vadd.f32 %v1794, %v1867
        %v1875 = vadd.f32 %v1795, %v1869
        %s1876 = sld [smem:[#allocation5 + $0x5f]]
        %v1877 = vstv %s1876
        %v1878 = vmul.f32 %v1877, %v1721
        %v1879 = vmul.f32 %v1877, %v1722
        %v1880 = vmul.f32 %v1877, %v1723
        %1884 = vrot.lane.b32.xlu0 %v1878, 126
        %v1885 = vpop.permute.xlu0 %1884
        %1886 = vrot.lane.b32.xlu0 %v1879, 126
        %v1887 = vpop.permute.xlu0 %1886
        %1888 = vrot.lane.b32.xlu0 %v1880, 126
        %v1889 = vpop.permute.xlu0 %1888
        %v1893 = vadd.f32 %v1813, %v1885
        %v1894 = vadd.f32 %v1814, %v1887
        %v1895 = vadd.f32 %v1815, %v1889
        %s1896 = sld [smem:[#allocation5 + $0x68]]
        %v1897 = vstv %s1896
        %v1898 = vmul.f32 %v1897, %v1721
        %v1899 = vmul.f32 %v1897, %v1722
        %v1900 = vmul.f32 %v1897, %v1723
        %1904 = vrot.lane.b32.xlu0 %v1898, 126
        %v1905 = vpop.permute.xlu0 %1904
        %1906 = vrot.lane.b32.xlu0 %v1899, 126
        %v1907 = vpop.permute.xlu0 %1906
        %1908 = vrot.lane.b32.xlu0 %v1900, 126
        %v1909 = vpop.permute.xlu0 %1908
        %v1913 = vadd.f32 %v1833, %v1905
        %v1914 = vadd.f32 %v1834, %v1907
        %v1915 = vadd.f32 %v1835, %v1909
        %v1916 = vld [vmem:[%s1525 + $0x2] sm:$0xff]
        %v1917 = vld [vmem:[%s1525 + $0xa] sm:$0xff]
        %v1918 = vld [vmem:[%s1525 + $0x12] sm:$0x3]
        %s1919 = sld [smem:[#allocation5 + $0x4e]]
        %v1920 = vstv %s1919
        %v1921 = vmul.f32 %v1920, %v1916
        %v1922 = vmul.f32 %v1920, %v1917
        %v1923 = vmul.f32 %v1920, %v1918
        %v1924 = vadd.f32 %v1853, %v1921
        %v1925 = vadd.f32 %v1854, %v1922
        %v1926 = vadd.f32 %v1855, %v1923
        %s1927 = sld [smem:[#allocation5 + $0x57]]
        %v1928 = vstv %s1927
        %v1929 = vmul.f32 %v1928, %v1916
        %v1930 = vmul.f32 %v1928, %v1917
        %v1931 = vmul.f32 %v1928, %v1918
        %v1932 = vadd.f32 %v1873, %v1929
        %v1933 = vadd.f32 %v1874, %v1930
        %v1934 = vadd.f32 %v1875, %v1931
        %s1935 = sld [smem:[#allocation5 + $0x60]]
        %v1936 = vstv %s1935
        %v1937 = vmul.f32 %v1936, %v1916
        %v1938 = vmul.f32 %v1936, %v1917
        %v1939 = vmul.f32 %v1936, %v1918
        %v1940 = vadd.f32 %v1893, %v1937
        %v1941 = vadd.f32 %v1894, %v1938
        %v1942 = vadd.f32 %v1895, %v1939
        %s1943 = sld [smem:[#allocation5 + $0x69]]
        %v1944 = vstv %s1943
        %v1945 = vmul.f32 %v1944, %v1916
        %v1946 = vmul.f32 %v1944, %v1917
        %v1947 = vmul.f32 %v1944, %v1918
        %v1948 = vadd.f32 %v1913, %v1945
        %v1949 = vadd.f32 %v1914, %v1946
        %v1950 = vadd.f32 %v1915, %v1947
        %s1951 = sld [smem:[#allocation5 + $0x4f]]
        %v1952 = vstv %s1951
        %v1953 = vmul.f32 %v1952, %v1916
        %v1954 = vmul.f32 %v1952, %v1917
        %v1955 = vmul.f32 %v1952, %v1918
        %1959 = vrot.lane.b32.xlu0 %v1953, 127
        %v1960 = vpop.permute.xlu0 %1959
        %1961 = vrot.lane.b32.xlu0 %v1954, 127
        %v1962 = vpop.permute.xlu0 %1961
        %1963 = vrot.lane.b32.xlu0 %v1955, 127
        %v1964 = vpop.permute.xlu0 %1963
        %v1968 = vadd.f32 %v1924, %v1960
        %v1969 = vadd.f32 %v1925, %v1962
        %v1970 = vadd.f32 %v1926, %v1964
        %s1971 = sld [smem:[#allocation5 + $0x58]]
        %v1972 = vstv %s1971
        %v1973 = vmul.f32 %v1972, %v1916
        %v1974 = vmul.f32 %v1972, %v1917
        %v1975 = vmul.f32 %v1972, %v1918
        %1979 = vrot.lane.b32.xlu0 %v1973, 127
        %v1980 = vpop.permute.xlu0 %1979
        %1981 = vrot.lane.b32.xlu0 %v1974, 127
        %v1982 = vpop.permute.xlu0 %1981
        %1983 = vrot.lane.b32.xlu0 %v1975, 127
        %v1984 = vpop.permute.xlu0 %1983
        %v1988 = vadd.f32 %v1932, %v1980
        %v1989 = vadd.f32 %v1933, %v1982
        %v1990 = vadd.f32 %v1934, %v1984
        %s1991 = sld [smem:[#allocation5 + $0x61]]
        %v1992 = vstv %s1991
        %v1993 = vmul.f32 %v1992, %v1916
        %v1994 = vmul.f32 %v1992, %v1917
        %v1995 = vmul.f32 %v1992, %v1918
        %1999 = vrot.lane.b32.xlu0 %v1993, 127
        %v2000 = vpop.permute.xlu0 %1999
        %2001 = vrot.lane.b32.xlu0 %v1994, 127
        %v2002 = vpop.permute.xlu0 %2001
        %2003 = vrot.lane.b32.xlu0 %v1995, 127
        %v2004 = vpop.permute.xlu0 %2003
        %v2008 = vadd.f32 %v1940, %v2000
        %v2009 = vadd.f32 %v1941, %v2002
        %v2010 = vadd.f32 %v1942, %v2004
        %s2011 = sld [smem:[#allocation5 + $0x6a]]
        %v2012 = vstv %s2011
        %v2013 = vmul.f32 %v2012, %v1916
        %v2014 = vmul.f32 %v2012, %v1917
        %v2015 = vmul.f32 %v2012, %v1918
        %2019 = vrot.lane.b32.xlu0 %v2013, 127
        %v2020 = vpop.permute.xlu0 %2019
        %2021 = vrot.lane.b32.xlu0 %v2014, 127
        %v2022 = vpop.permute.xlu0 %2021
        %2023 = vrot.lane.b32.xlu0 %v2015, 127
        %v2024 = vpop.permute.xlu0 %2023
        %v2028 = vadd.f32 %v1948, %v2020
        %v2029 = vadd.f32 %v1949, %v2022
        %v2030 = vadd.f32 %v1950, %v2024
        %s2031 = sld [smem:[#allocation5 + $0x50]]
        %v2032 = vstv %s2031
        %v2033 = vmul.f32 %v2032, %v1916
        %v2034 = vmul.f32 %v2032, %v1917
        %v2035 = vmul.f32 %v2032, %v1918
        %2039 = vrot.lane.b32.xlu0 %v2033, 126
        %v2040 = vpop.permute.xlu0 %2039
        %2041 = vrot.lane.b32.xlu0 %v2034, 126
        %v2042 = vpop.permute.xlu0 %2041
        %2043 = vrot.lane.b32.xlu0 %v2035, 126
        %v2044 = vpop.permute.xlu0 %2043
        %v2048 = vadd.f32 %v1968, %v2040
        %v2049 = vadd.f32 %v1969, %v2042
        %v2050 = vadd.f32 %v1970, %v2044
        %s2051 = sld [smem:[#allocation5 + $0x59]]
        %v2052 = vstv %s2051
        %v2053 = vmul.f32 %v2052, %v1916
        %v2054 = vmul.f32 %v2052, %v1917
        %v2055 = vmul.f32 %v2052, %v1918
        %2059 = vrot.lane.b32.xlu0 %v2053, 126
        %v2060 = vpop.permute.xlu0 %2059
        %2061 = vrot.lane.b32.xlu0 %v2054, 126
        %v2062 = vpop.permute.xlu0 %2061
        %2063 = vrot.lane.b32.xlu0 %v2055, 126
        %v2064 = vpop.permute.xlu0 %2063
        %v2068 = vadd.f32 %v1988, %v2060
        %v2069 = vadd.f32 %v1989, %v2062
        %v2070 = vadd.f32 %v1990, %v2064
        %s2071 = sld [smem:[#allocation5 + $0x62]]
        %v2072 = vstv %s2071
        %v2073 = vmul.f32 %v2072, %v1916
        %v2074 = vmul.f32 %v2072, %v1917
        %v2075 = vmul.f32 %v2072, %v1918
        %2079 = vrot.lane.b32.xlu0 %v2073, 126
        %v2080 = vpop.permute.xlu0 %2079
        %2081 = vrot.lane.b32.xlu0 %v2074, 126
        %v2082 = vpop.permute.xlu0 %2081
        %2083 = vrot.lane.b32.xlu0 %v2075, 126
        %v2084 = vpop.permute.xlu0 %2083
        %v2088 = vadd.f32 %v2008, %v2080
        %v2089 = vadd.f32 %v2009, %v2082
        %v2090 = vadd.f32 %v2010, %v2084
        %s2091 = sld [smem:[#allocation5 + $0x6b]]
        %v2092 = vstv %s2091
        %v2093 = vmul.f32 %v2092, %v1916
        %v2094 = vmul.f32 %v2092, %v1917
        %v2095 = vmul.f32 %v2092, %v1918
        %2099 = vrot.lane.b32.xlu0 %v2093, 126
        %v2100 = vpop.permute.xlu0 %2099
        %2101 = vrot.lane.b32.xlu0 %v2094, 126
        %v2102 = vpop.permute.xlu0 %2101
        %2103 = vrot.lane.b32.xlu0 %v2095, 126
        %v2104 = vpop.permute.xlu0 %2103
        %v2108 = vadd.f32 %v2028, %v2100
        %v2109 = vadd.f32 %v2029, %v2102
        %v2110 = vadd.f32 %v2030, %v2104
        %s2111 = scalar_lea.vmem [#allocation2], 72
        %v2112 = vld [vmem:[%s2111] sm:$0xff]
        %v2113 = vld [vmem:[%s2111 + $0x8] sm:$0xff]
        %v2114 = vld [vmem:[%s2111 + $0x10] sm:$0x3]
        %s2115 = sld [smem:[#allocation5 + $0x6c]]
        %v2116 = vstv %s2115
        %v2117 = vmul.f32 %v2116, %v2112
        %v2118 = vmul.f32 %v2116, %v2113
        %v2119 = vmul.f32 %v2116, %v2114
        %v2120 = vadd.f32 %v2048, %v2117
        %v2121 = vadd.f32 %v2049, %v2118
        %v2122 = vadd.f32 %v2050, %v2119
        %s2123 = sld [smem:[#allocation5 + $0x75]]
        %v2124 = vstv %s2123
        %v2125 = vmul.f32 %v2124, %v2112
        %v2126 = vmul.f32 %v2124, %v2113
        %v2127 = vmul.f32 %v2124, %v2114
        %v2128 = vadd.f32 %v2068, %v2125
        %v2129 = vadd.f32 %v2069, %v2126
        %v2130 = vadd.f32 %v2070, %v2127
        %s2131 = sld [smem:[#allocation5 + $0x7e]]
        %v2132 = vstv %s2131
        %v2133 = vmul.f32 %v2132, %v2112
        %v2134 = vmul.f32 %v2132, %v2113
        %v2135 = vmul.f32 %v2132, %v2114
        %v2136 = vadd.f32 %v2088, %v2133
        %v2137 = vadd.f32 %v2089, %v2134
        %v2138 = vadd.f32 %v2090, %v2135
        %s2139 = sld [smem:[#allocation5 + $0x87]]
        %v2140 = vstv %s2139
        %v2141 = vmul.f32 %v2140, %v2112
        %v2142 = vmul.f32 %v2140, %v2113
        %v2143 = vmul.f32 %v2140, %v2114
        %v2144 = vadd.f32 %v2108, %v2141
        %v2145 = vadd.f32 %v2109, %v2142
        %v2146 = vadd.f32 %v2110, %v2143
        %s2147 = sld [smem:[#allocation5 + $0x6d]]
        %v2148 = vstv %s2147
        %v2149 = vmul.f32 %v2148, %v2112
        %v2150 = vmul.f32 %v2148, %v2113
        %v2151 = vmul.f32 %v2148, %v2114
        %2155 = vrot.lane.b32.xlu0 %v2149, 127
        %v2156 = vpop.permute.xlu0 %2155
        %2157 = vrot.lane.b32.xlu0 %v2150, 127
        %v2158 = vpop.permute.xlu0 %2157
        %2159 = vrot.lane.b32.xlu0 %v2151, 127
        %v2160 = vpop.permute.xlu0 %2159
        %v2164 = vadd.f32 %v2120, %v2156
        %v2165 = vadd.f32 %v2121, %v2158
        %v2166 = vadd.f32 %v2122, %v2160
        %s2167 = sld [smem:[#allocation5 + $0x76]]
        %v2168 = vstv %s2167
        %v2169 = vmul.f32 %v2168, %v2112
        %v2170 = vmul.f32 %v2168, %v2113
        %v2171 = vmul.f32 %v2168, %v2114
        %2175 = vrot.lane.b32.xlu0 %v2169, 127
        %v2176 = vpop.permute.xlu0 %2175
        %2177 = vrot.lane.b32.xlu0 %v2170, 127
        %v2178 = vpop.permute.xlu0 %2177
        %2179 = vrot.lane.b32.xlu0 %v2171, 127
        %v2180 = vpop.permute.xlu0 %2179
        %v2184 = vadd.f32 %v2128, %v2176
        %v2185 = vadd.f32 %v2129, %v2178
        %v2186 = vadd.f32 %v2130, %v2180
        %s2187 = sld [smem:[#allocation5 + $0x7f]]
        %v2188 = vstv %s2187
        %v2189 = vmul.f32 %v2188, %v2112
        %v2190 = vmul.f32 %v2188, %v2113
        %v2191 = vmul.f32 %v2188, %v2114
        %2195 = vrot.lane.b32.xlu0 %v2189, 127
        %v2196 = vpop.permute.xlu0 %2195
        %2197 = vrot.lane.b32.xlu0 %v2190, 127
        %v2198 = vpop.permute.xlu0 %2197
        %2199 = vrot.lane.b32.xlu0 %v2191, 127
        %v2200 = vpop.permute.xlu0 %2199
        %v2204 = vadd.f32 %v2136, %v2196
        %v2205 = vadd.f32 %v2137, %v2198
        %v2206 = vadd.f32 %v2138, %v2200
        %s2207 = sld [smem:[#allocation5 + $0x88]]
        %v2208 = vstv %s2207
        %v2209 = vmul.f32 %v2208, %v2112
        %v2210 = vmul.f32 %v2208, %v2113
        %v2211 = vmul.f32 %v2208, %v2114
        %2215 = vrot.lane.b32.xlu0 %v2209, 127
        %v2216 = vpop.permute.xlu0 %2215
        %2217 = vrot.lane.b32.xlu0 %v2210, 127
        %v2218 = vpop.permute.xlu0 %2217
        %2219 = vrot.lane.b32.xlu0 %v2211, 127
        %v2220 = vpop.permute.xlu0 %2219
        %v2224 = vadd.f32 %v2144, %v2216
        %v2225 = vadd.f32 %v2145, %v2218
        %v2226 = vadd.f32 %v2146, %v2220
        %s2227 = sld [smem:[#allocation5 + $0x6e]]
        %v2228 = vstv %s2227
        %v2229 = vmul.f32 %v2228, %v2112
        %v2230 = vmul.f32 %v2228, %v2113
        %v2231 = vmul.f32 %v2228, %v2114
        %2235 = vrot.lane.b32.xlu0 %v2229, 126
        %v2236 = vpop.permute.xlu0 %2235
        %2237 = vrot.lane.b32.xlu0 %v2230, 126
        %v2238 = vpop.permute.xlu0 %2237
        %2239 = vrot.lane.b32.xlu0 %v2231, 126
        %v2240 = vpop.permute.xlu0 %2239
        %v2244 = vadd.f32 %v2164, %v2236
        %v2245 = vadd.f32 %v2165, %v2238
        %v2246 = vadd.f32 %v2166, %v2240
        %s2247 = sld [smem:[#allocation5 + $0x77]]
        %v2248 = vstv %s2247
        %v2249 = vmul.f32 %v2248, %v2112
        %v2250 = vmul.f32 %v2248, %v2113
        %v2251 = vmul.f32 %v2248, %v2114
        %2255 = vrot.lane.b32.xlu0 %v2249, 126
        %v2256 = vpop.permute.xlu0 %2255
        %2257 = vrot.lane.b32.xlu0 %v2250, 126
        %v2258 = vpop.permute.xlu0 %2257
        %2259 = vrot.lane.b32.xlu0 %v2251, 126
        %v2260 = vpop.permute.xlu0 %2259
        %v2264 = vadd.f32 %v2184, %v2256
        %v2265 = vadd.f32 %v2185, %v2258
        %v2266 = vadd.f32 %v2186, %v2260
        %s2267 = sld [smem:[#allocation5 + $0x80]]
        %v2268 = vstv %s2267
        %v2269 = vmul.f32 %v2268, %v2112
        %v2270 = vmul.f32 %v2268, %v2113
        %v2271 = vmul.f32 %v2268, %v2114
        %2275 = vrot.lane.b32.xlu0 %v2269, 126
        %v2276 = vpop.permute.xlu0 %2275
        %2277 = vrot.lane.b32.xlu0 %v2270, 126
        %v2278 = vpop.permute.xlu0 %2277
        %2279 = vrot.lane.b32.xlu0 %v2271, 126
        %v2280 = vpop.permute.xlu0 %2279
        %v2284 = vadd.f32 %v2204, %v2276
        %v2285 = vadd.f32 %v2205, %v2278
        %v2286 = vadd.f32 %v2206, %v2280
        %s2287 = sld [smem:[#allocation5 + $0x89]]
        %v2288 = vstv %s2287
        %v2289 = vmul.f32 %v2288, %v2112
        %v2290 = vmul.f32 %v2288, %v2113
        %v2291 = vmul.f32 %v2288, %v2114
        %2295 = vrot.lane.b32.xlu0 %v2289, 126
        %v2296 = vpop.permute.xlu0 %2295
        %2297 = vrot.lane.b32.xlu0 %v2290, 126
        %v2298 = vpop.permute.xlu0 %2297
        %2299 = vrot.lane.b32.xlu0 %v2291, 126
        %v2300 = vpop.permute.xlu0 %2299
        %v2304 = vadd.f32 %v2224, %v2296
        %v2305 = vadd.f32 %v2225, %v2298
        %v2306 = vadd.f32 %v2226, %v2300
        %v2307 = vld [vmem:[%s2111 + $0x1] sm:$0xff]
        %v2308 = vld [vmem:[%s2111 + $0x9] sm:$0xff]
        %v2309 = vld [vmem:[%s2111 + $0x11] sm:$0x3]
        %s2310 = sld [smem:[#allocation5 + $0x6f]]
        %v2311 = vstv %s2310
        %v2312 = vmul.f32 %v2311, %v2307
        %v2313 = vmul.f32 %v2311, %v2308
        %v2314 = vmul.f32 %v2311, %v2309
        %v2315 = vadd.f32 %v2244, %v2312
        %v2316 = vadd.f32 %v2245, %v2313
        %v2317 = vadd.f32 %v2246, %v2314
        %s2318 = sld [smem:[#allocation5 + $0x78]]
        %v2319 = vstv %s2318
        %v2320 = vmul.f32 %v2319, %v2307
        %v2321 = vmul.f32 %v2319, %v2308
        %v2322 = vmul.f32 %v2319, %v2309
        %v2323 = vadd.f32 %v2264, %v2320
        %v2324 = vadd.f32 %v2265, %v2321
        %v2325 = vadd.f32 %v2266, %v2322
        %s2326 = sld [smem:[#allocation5 + $0x81]]
        %v2327 = vstv %s2326
        %v2328 = vmul.f32 %v2327, %v2307
        %v2329 = vmul.f32 %v2327, %v2308
        %v2330 = vmul.f32 %v2327, %v2309
        %v2331 = vadd.f32 %v2284, %v2328
        %v2332 = vadd.f32 %v2285, %v2329
        %v2333 = vadd.f32 %v2286, %v2330
        %s2334 = sld [smem:[#allocation5 + $0x8a]]
        %v2335 = vstv %s2334
        %v2336 = vmul.f32 %v2335, %v2307
        %v2337 = vmul.f32 %v2335, %v2308
        %v2338 = vmul.f32 %v2335, %v2309
        %v2339 = vadd.f32 %v2304, %v2336
        %v2340 = vadd.f32 %v2305, %v2337
        %v2341 = vadd.f32 %v2306, %v2338
        %s2342 = sld [smem:[#allocation5 + $0x70]]
        %v2343 = vstv %s2342
        %v2344 = vmul.f32 %v2343, %v2307
        %v2345 = vmul.f32 %v2343, %v2308
        %v2346 = vmul.f32 %v2343, %v2309
        %2350 = vrot.lane.b32.xlu0 %v2344, 127
        %v2351 = vpop.permute.xlu0 %2350
        %2352 = vrot.lane.b32.xlu0 %v2345, 127
        %v2353 = vpop.permute.xlu0 %2352
        %2354 = vrot.lane.b32.xlu0 %v2346, 127
        %v2355 = vpop.permute.xlu0 %2354
        %v2359 = vadd.f32 %v2315, %v2351
        %v2360 = vadd.f32 %v2316, %v2353
        %v2361 = vadd.f32 %v2317, %v2355
        %s2362 = sld [smem:[#allocation5 + $0x79]]
        %v2363 = vstv %s2362
        %v2364 = vmul.f32 %v2363, %v2307
        %v2365 = vmul.f32 %v2363, %v2308
        %v2366 = vmul.f32 %v2363, %v2309
        %2370 = vrot.lane.b32.xlu0 %v2364, 127
        %v2371 = vpop.permute.xlu0 %2370
        %2372 = vrot.lane.b32.xlu0 %v2365, 127
        %v2373 = vpop.permute.xlu0 %2372
        %2374 = vrot.lane.b32.xlu0 %v2366, 127
        %v2375 = vpop.permute.xlu0 %2374
        %v2379 = vadd.f32 %v2323, %v2371
        %v2380 = vadd.f32 %v2324, %v2373
        %v2381 = vadd.f32 %v2325, %v2375
        %s2382 = sld [smem:[#allocation5 + $0x82]]
        %v2383 = vstv %s2382
        %v2384 = vmul.f32 %v2383, %v2307
        %v2385 = vmul.f32 %v2383, %v2308
        %v2386 = vmul.f32 %v2383, %v2309
        %2390 = vrot.lane.b32.xlu0 %v2384, 127
        %v2391 = vpop.permute.xlu0 %2390
        %2392 = vrot.lane.b32.xlu0 %v2385, 127
        %v2393 = vpop.permute.xlu0 %2392
        %2394 = vrot.lane.b32.xlu0 %v2386, 127
        %v2395 = vpop.permute.xlu0 %2394
        %v2399 = vadd.f32 %v2331, %v2391
        %v2400 = vadd.f32 %v2332, %v2393
        %v2401 = vadd.f32 %v2333, %v2395
        %s2402 = sld [smem:[#allocation5 + $0x8b]]
        %v2403 = vstv %s2402
        %v2404 = vmul.f32 %v2403, %v2307
        %v2405 = vmul.f32 %v2403, %v2308
        %v2406 = vmul.f32 %v2403, %v2309
        %2410 = vrot.lane.b32.xlu0 %v2404, 127
        %v2411 = vpop.permute.xlu0 %2410
        %2412 = vrot.lane.b32.xlu0 %v2405, 127
        %v2413 = vpop.permute.xlu0 %2412
        %2414 = vrot.lane.b32.xlu0 %v2406, 127
        %v2415 = vpop.permute.xlu0 %2414
        %v2419 = vadd.f32 %v2339, %v2411
        %v2420 = vadd.f32 %v2340, %v2413
        %v2421 = vadd.f32 %v2341, %v2415
        %s2422 = sld [smem:[#allocation5 + $0x71]]
        %v2423 = vstv %s2422
        %v2424 = vmul.f32 %v2423, %v2307
        %v2425 = vmul.f32 %v2423, %v2308
        %v2426 = vmul.f32 %v2423, %v2309
        %2430 = vrot.lane.b32.xlu0 %v2424, 126
        %v2431 = vpop.permute.xlu0 %2430
        %2432 = vrot.lane.b32.xlu0 %v2425, 126
        %v2433 = vpop.permute.xlu0 %2432
        %2434 = vrot.lane.b32.xlu0 %v2426, 126
        %v2435 = vpop.permute.xlu0 %2434
        %v2439 = vadd.f32 %v2359, %v2431
        %v2440 = vadd.f32 %v2360, %v2433
        %v2441 = vadd.f32 %v2361, %v2435
        %s2442 = sld [smem:[#allocation5 + $0x7a]]
        %v2443 = vstv %s2442
        %v2444 = vmul.f32 %v2443, %v2307
        %v2445 = vmul.f32 %v2443, %v2308
        %v2446 = vmul.f32 %v2443, %v2309
        %2450 = vrot.lane.b32.xlu0 %v2444, 126
        %v2451 = vpop.permute.xlu0 %2450
        %2452 = vrot.lane.b32.xlu0 %v2445, 126
        %v2453 = vpop.permute.xlu0 %2452
        %2454 = vrot.lane.b32.xlu0 %v2446, 126
        %v2455 = vpop.permute.xlu0 %2454
        %v2459 = vadd.f32 %v2379, %v2451
        %v2460 = vadd.f32 %v2380, %v2453
        %v2461 = vadd.f32 %v2381, %v2455
        %s2462 = sld [smem:[#allocation5 + $0x83]]
        %v2463 = vstv %s2462
        %v2464 = vmul.f32 %v2463, %v2307
        %v2465 = vmul.f32 %v2463, %v2308
        %v2466 = vmul.f32 %v2463, %v2309
        %2470 = vrot.lane.b32.xlu0 %v2464, 126
        %v2471 = vpop.permute.xlu0 %2470
        %2472 = vrot.lane.b32.xlu0 %v2465, 126
        %v2473 = vpop.permute.xlu0 %2472
        %2474 = vrot.lane.b32.xlu0 %v2466, 126
        %v2475 = vpop.permute.xlu0 %2474
        %v2479 = vadd.f32 %v2399, %v2471
        %v2480 = vadd.f32 %v2400, %v2473
        %v2481 = vadd.f32 %v2401, %v2475
        %s2482 = sld [smem:[#allocation5 + $0x8c]]
        %v2483 = vstv %s2482
        %v2484 = vmul.f32 %v2483, %v2307
        %v2485 = vmul.f32 %v2483, %v2308
        %v2486 = vmul.f32 %v2483, %v2309
        %2490 = vrot.lane.b32.xlu0 %v2484, 126
        %v2491 = vpop.permute.xlu0 %2490
        %2492 = vrot.lane.b32.xlu0 %v2485, 126
        %v2493 = vpop.permute.xlu0 %2492
        %2494 = vrot.lane.b32.xlu0 %v2486, 126
        %v2495 = vpop.permute.xlu0 %2494
        %v2499 = vadd.f32 %v2419, %v2491
        %v2500 = vadd.f32 %v2420, %v2493
        %v2501 = vadd.f32 %v2421, %v2495
        %v2502 = vld [vmem:[%s2111 + $0x2] sm:$0xff]
        %v2503 = vld [vmem:[%s2111 + $0xa] sm:$0xff]
        %v2504 = vld [vmem:[%s2111 + $0x12] sm:$0x3]
        %s2505 = sld [smem:[#allocation5 + $0x72]]
        %v2506 = vstv %s2505
        %v2507 = vmul.f32 %v2506, %v2502
        %v2508 = vmul.f32 %v2506, %v2503
        %v2509 = vmul.f32 %v2506, %v2504
        %v2510 = vadd.f32 %v2439, %v2507
        %v2511 = vadd.f32 %v2440, %v2508
        %v2512 = vadd.f32 %v2441, %v2509
        %s2513 = sld [smem:[#allocation5 + $0x7b]]
        %v2514 = vstv %s2513
        %v2515 = vmul.f32 %v2514, %v2502
        %v2516 = vmul.f32 %v2514, %v2503
        %v2517 = vmul.f32 %v2514, %v2504
        %v2518 = vadd.f32 %v2459, %v2515
        %v2519 = vadd.f32 %v2460, %v2516
        %v2520 = vadd.f32 %v2461, %v2517
        %s2521 = sld [smem:[#allocation5 + $0x84]]
        %v2522 = vstv %s2521
        %v2523 = vmul.f32 %v2522, %v2502
        %v2524 = vmul.f32 %v2522, %v2503
        %v2525 = vmul.f32 %v2522, %v2504
        %v2526 = vadd.f32 %v2479, %v2523
        %v2527 = vadd.f32 %v2480, %v2524
        %v2528 = vadd.f32 %v2481, %v2525
        %s2529 = sld [smem:[#allocation5 + $0x8d]]
        %v2530 = vstv %s2529
        %v2531 = vmul.f32 %v2530, %v2502
        %v2532 = vmul.f32 %v2530, %v2503
        %v2533 = vmul.f32 %v2530, %v2504
        %v2534 = vadd.f32 %v2499, %v2531
        %v2535 = vadd.f32 %v2500, %v2532
        %v2536 = vadd.f32 %v2501, %v2533
        %s2537 = sld [smem:[#allocation5 + $0x73]]
        %v2538 = vstv %s2537
        %v2539 = vmul.f32 %v2538, %v2502
        %v2540 = vmul.f32 %v2538, %v2503
        %v2541 = vmul.f32 %v2538, %v2504
        %2545 = vrot.lane.b32.xlu0 %v2539, 127
        %v2546 = vpop.permute.xlu0 %2545
        %2547 = vrot.lane.b32.xlu0 %v2540, 127
        %v2548 = vpop.permute.xlu0 %2547
        %2549 = vrot.lane.b32.xlu0 %v2541, 127
        %v2550 = vpop.permute.xlu0 %2549
        %v2554 = vadd.f32 %v2510, %v2546
        %v2555 = vadd.f32 %v2511, %v2548
        %v2556 = vadd.f32 %v2512, %v2550
        %s2557 = sld [smem:[#allocation5 + $0x7c]]
        %v2558 = vstv %s2557
        %v2559 = vmul.f32 %v2558, %v2502
        %v2560 = vmul.f32 %v2558, %v2503
        %v2561 = vmul.f32 %v2558, %v2504
        %2565 = vrot.lane.b32.xlu0 %v2559, 127
        %v2566 = vpop.permute.xlu0 %2565
        %2567 = vrot.lane.b32.xlu0 %v2560, 127
        %v2568 = vpop.permute.xlu0 %2567
        %2569 = vrot.lane.b32.xlu0 %v2561, 127
        %v2570 = vpop.permute.xlu0 %2569
        %v2574 = vadd.f32 %v2518, %v2566
        %v2575 = vadd.f32 %v2519, %v2568
        %v2576 = vadd.f32 %v2520, %v2570
        %s2577 = sld [smem:[#allocation5 + $0x85]]
        %v2578 = vstv %s2577
        %v2579 = vmul.f32 %v2578, %v2502
        %v2580 = vmul.f32 %v2578, %v2503
        %v2581 = vmul.f32 %v2578, %v2504
        %2585 = vrot.lane.b32.xlu0 %v2579, 127
        %v2586 = vpop.permute.xlu0 %2585
        %2587 = vrot.lane.b32.xlu0 %v2580, 127
        %v2588 = vpop.permute.xlu0 %2587
        %2589 = vrot.lane.b32.xlu0 %v2581, 127
        %v2590 = vpop.permute.xlu0 %2589
        %v2594 = vadd.f32 %v2526, %v2586
        %v2595 = vadd.f32 %v2527, %v2588
        %v2596 = vadd.f32 %v2528, %v2590
        %s2597 = sld [smem:[#allocation5 + $0x8e]]
        %v2598 = vstv %s2597
        %v2599 = vmul.f32 %v2598, %v2502
        %v2600 = vmul.f32 %v2598, %v2503
        %v2601 = vmul.f32 %v2598, %v2504
        %2605 = vrot.lane.b32.xlu0 %v2599, 127
        %v2606 = vpop.permute.xlu0 %2605
        %2607 = vrot.lane.b32.xlu0 %v2600, 127
        %v2608 = vpop.permute.xlu0 %2607
        %2609 = vrot.lane.b32.xlu0 %v2601, 127
        %v2610 = vpop.permute.xlu0 %2609
        %v2614 = vadd.f32 %v2534, %v2606
        %v2615 = vadd.f32 %v2535, %v2608
        %v2616 = vadd.f32 %v2536, %v2610
        %s2617 = sld [smem:[#allocation5 + $0x74]]
        %v2618 = vstv %s2617
        %v2619 = vmul.f32 %v2618, %v2502
        %v2620 = vmul.f32 %v2618, %v2503
        %v2621 = vmul.f32 %v2618, %v2504
        %2625 = vrot.lane.b32.xlu0 %v2619, 126
        %v2626 = vpop.permute.xlu0 %2625
        %2627 = vrot.lane.b32.xlu0 %v2620, 126
        %v2628 = vpop.permute.xlu0 %2627
        %2629 = vrot.lane.b32.xlu0 %v2621, 126
        %v2630 = vpop.permute.xlu0 %2629
        %v2634 = vadd.f32 %v2554, %v2626
        %v2635 = vadd.f32 %v2555, %v2628
        %v2636 = vadd.f32 %v2556, %v2630
        %s2637 = sld [smem:[#allocation5 + $0x7d]]
        %v2638 = vstv %s2637
        %v2639 = vmul.f32 %v2638, %v2502
        %v2640 = vmul.f32 %v2638, %v2503
        %v2641 = vmul.f32 %v2638, %v2504
        %2645 = vrot.lane.b32.xlu0 %v2639, 126
        %v2646 = vpop.permute.xlu0 %2645
        %2647 = vrot.lane.b32.xlu0 %v2640, 126
        %v2648 = vpop.permute.xlu0 %2647
        %2649 = vrot.lane.b32.xlu0 %v2641, 126
        %v2650 = vpop.permute.xlu0 %2649
        %v2654 = vadd.f32 %v2574, %v2646
        %v2655 = vadd.f32 %v2575, %v2648
        %v2656 = vadd.f32 %v2576, %v2650
        %s2657 = sld [smem:[#allocation5 + $0x86]]
        %v2658 = vstv %s2657
        %v2659 = vmul.f32 %v2658, %v2502
        %v2660 = vmul.f32 %v2658, %v2503
        %v2661 = vmul.f32 %v2658, %v2504
        %2665 = vrot.lane.b32.xlu0 %v2659, 126
        %v2666 = vpop.permute.xlu0 %2665
        %2667 = vrot.lane.b32.xlu0 %v2660, 126
        %v2668 = vpop.permute.xlu0 %2667
        %2669 = vrot.lane.b32.xlu0 %v2661, 126
        %v2670 = vpop.permute.xlu0 %2669
        %v2674 = vadd.f32 %v2594, %v2666
        %v2675 = vadd.f32 %v2595, %v2668
        %v2676 = vadd.f32 %v2596, %v2670
        %s2677 = sld [smem:[#allocation5 + $0x8f]]
        %v2678 = vstv %s2677
        %v2679 = vmul.f32 %v2678, %v2502
        %v2680 = vmul.f32 %v2678, %v2503
        %v2681 = vmul.f32 %v2678, %v2504
        %2685 = vrot.lane.b32.xlu0 %v2679, 126
        %v2686 = vpop.permute.xlu0 %2685
        %2687 = vrot.lane.b32.xlu0 %v2680, 126
        %v2688 = vpop.permute.xlu0 %2687
        %2689 = vrot.lane.b32.xlu0 %v2681, 126
        %v2690 = vpop.permute.xlu0 %2689
        %v2694 = vadd.f32 %v2614, %v2686
        %v2695 = vadd.f32 %v2615, %v2688
        %v2696 = vadd.f32 %v2616, %v2690
        %2700 = vrot.lane.b32.xlu0 %v2634, 2
        %v2701 = vpop.permute.xlu0 %2700
        %2702 = vrot.lane.b32.xlu0 %v2635, 2
        %v2703 = vpop.permute.xlu0 %2702
        %2704 = vrot.lane.b32.xlu0 %v2636, 2
        %v2705 = vpop.permute.xlu0 %2704
        %vm2709 = vcmask 162832
        %2710 = vst.msk [vmem:[#allocation3 + $0x2] sm:$0xff] %vm2709, %v2701
        %2711 = vst.msk [vmem:[#allocation3 + $0xa] sm:$0xff] %vm2709, %v2703
        %vm2712 = vcmask 156688
        %2713 = vst.msk [vmem:[#allocation3 + $0x12] sm:$0x3] %vm2712, %v2705
        %2717 = vrot.lane.b32.xlu0 %v2654, 2
        %v2718 = vpop.permute.xlu0 %2717
        %2719 = vrot.lane.b32.xlu0 %v2655, 2
        %v2720 = vpop.permute.xlu0 %2719
        %2721 = vrot.lane.b32.xlu0 %v2656, 2
        %v2722 = vpop.permute.xlu0 %2721
        %s2726 = scalar_lea.vmem [#allocation3], 24
        %2727 = vst.msk [vmem:[%s2726 + $0x2] sm:$0xff] %vm2709, %v2718
        %2728 = vst.msk [vmem:[%s2726 + $0xa] sm:$0xff] %vm2709, %v2720
        %2729 = vst.msk [vmem:[%s2726 + $0x12] sm:$0x3] %vm2712, %v2722
        %2733 = vrot.lane.b32.xlu0 %v2674, 2
        %v2734 = vpop.permute.xlu0 %2733
        %2735 = vrot.lane.b32.xlu0 %v2675, 2
        %v2736 = vpop.permute.xlu0 %2735
        %2737 = vrot.lane.b32.xlu0 %v2676, 2
        %v2738 = vpop.permute.xlu0 %2737
        %s2742 = scalar_lea.vmem [#allocation3], 48
        %2743 = vst.msk [vmem:[%s2742 + $0x2] sm:$0xff] %vm2709, %v2734
        %2744 = vst.msk [vmem:[%s2742 + $0xa] sm:$0xff] %vm2709, %v2736
        %2745 = vst.msk [vmem:[%s2742 + $0x12] sm:$0x3] %vm2712, %v2738
        %2749 = vrot.lane.b32.xlu0 %v2694, 2
        %v2750 = vpop.permute.xlu0 %2749
        %2751 = vrot.lane.b32.xlu0 %v2695, 2
        %v2752 = vpop.permute.xlu0 %2751
        %2753 = vrot.lane.b32.xlu0 %v2696, 2
        %v2754 = vpop.permute.xlu0 %2753
        %s2758 = scalar_lea.vmem [#allocation3], 72
        %2759 = vst.msk [vmem:[%s2758 + $0x2] sm:$0xff] %vm2709, %v2750
        %2760 = vst.msk [vmem:[%s2758 + $0xa] sm:$0xff] %vm2709, %v2752
        %2761 = vst.msk [vmem:[%s2758 + $0x12] sm:$0x3] %vm2712, %v2754
        %s2762 = sld [smem:[#allocation4]]
        %v2763 = vstv %s2762
        %v2764 = vadd.f32 %v2763, 0.0
        %v2765 = vld [vmem:[#allocation3] sm:$0xff]
        %v2766 = vld [vmem:[#allocation3 + $0x8] sm:$0xff]
        %v2767 = vld [vmem:[#allocation3 + $0x10] sm:$0xf]
        %s2768 = sld [smem:[#allocation9]]
        %v2769 = vstv %s2768
        %v2770 = vmul.f32 %v2769, %v2765
        %v2771 = vmul.f32 %v2769, %v2766
        %v2772 = vmul.f32 %v2769, %v2767
        %v2773 = vadd.f32 %v2764, %v2770
        %v2774 = vadd.f32 %v2764, %v2771
        %v2775 = vadd.f32 %v2764, %v2772
        %s2776 = sld [smem:[#allocation9 + $0x1]]
        %v2777 = vstv %s2776
        %v2778 = vmul.f32 %v2777, %v2765
        %v2779 = vmul.f32 %v2777, %v2766
        %v2780 = vmul.f32 %v2777, %v2767
        %2784 = vrot.lane.b32.xlu0 %v2778, 127
        %v2785 = vpop.permute.xlu0 %2784
        %2786 = vrot.lane.b32.xlu0 %v2779, 127
        %v2787 = vpop.permute.xlu0 %2786
        %2788 = vrot.lane.b32.xlu0 %v2780, 127
        %v2789 = vpop.permute.xlu0 %2788
        %v2793 = vadd.f32 %v2773, %v2785
        %v2794 = vadd.f32 %v2774, %v2787
        %v2795 = vadd.f32 %v2775, %v2789
        %s2796 = sld [smem:[#allocation9 + $0x2]]
        %v2797 = vstv %s2796
        %v2798 = vmul.f32 %v2797, %v2765
        %v2799 = vmul.f32 %v2797, %v2766
        %v2800 = vmul.f32 %v2797, %v2767
        %2804 = vrot.lane.b32.xlu0 %v2798, 126
        %v2805 = vpop.permute.xlu0 %2804
        %2806 = vrot.lane.b32.xlu0 %v2799, 126
        %v2807 = vpop.permute.xlu0 %2806
        %2808 = vrot.lane.b32.xlu0 %v2800, 126
        %v2809 = vpop.permute.xlu0 %2808
        %v2813 = vadd.f32 %v2793, %v2805
        %v2814 = vadd.f32 %v2794, %v2807
        %v2815 = vadd.f32 %v2795, %v2809
        %v2816 = vld [vmem:[#allocation3 + $0x1] sm:$0xff]
        %v2817 = vld [vmem:[#allocation3 + $0x9] sm:$0xff]
        %v2818 = vld [vmem:[#allocation3 + $0x11] sm:$0xf]
        %s2819 = sld [smem:[#allocation9 + $0x3]]
        %v2820 = vstv %s2819
        %v2821 = vmul.f32 %v2820, %v2816
        %v2822 = vmul.f32 %v2820, %v2817
        %v2823 = vmul.f32 %v2820, %v2818
        %v2824 = vadd.f32 %v2813, %v2821
        %v2825 = vadd.f32 %v2814, %v2822
        %v2826 = vadd.f32 %v2815, %v2823
        %s2827 = sld [smem:[#allocation9 + $0x4]]
        %v2828 = vstv %s2827
        %v2829 = vmul.f32 %v2828, %v2816
        %v2830 = vmul.f32 %v2828, %v2817
        %v2831 = vmul.f32 %v2828, %v2818
        %2835 = vrot.lane.b32.xlu0 %v2829, 127
        %v2836 = vpop.permute.xlu0 %2835
        %2837 = vrot.lane.b32.xlu0 %v2830, 127
        %v2838 = vpop.permute.xlu0 %2837
        %2839 = vrot.lane.b32.xlu0 %v2831, 127
        %v2840 = vpop.permute.xlu0 %2839
        %v2844 = vadd.f32 %v2824, %v2836
        %v2845 = vadd.f32 %v2825, %v2838
        %v2846 = vadd.f32 %v2826, %v2840
        %s2847 = sld [smem:[#allocation9 + $0x5]]
        %v2848 = vstv %s2847
        %v2849 = vmul.f32 %v2848, %v2816
        %v2850 = vmul.f32 %v2848, %v2817
        %v2851 = vmul.f32 %v2848, %v2818
        %2855 = vrot.lane.b32.xlu0 %v2849, 126
        %v2856 = vpop.permute.xlu0 %2855
        %2857 = vrot.lane.b32.xlu0 %v2850, 126
        %v2858 = vpop.permute.xlu0 %2857
        %2859 = vrot.lane.b32.xlu0 %v2851, 126
        %v2860 = vpop.permute.xlu0 %2859
        %v2864 = vadd.f32 %v2844, %v2856
        %v2865 = vadd.f32 %v2845, %v2858
        %v2866 = vadd.f32 %v2846, %v2860
        %v2867 = vld [vmem:[#allocation3 + $0x2] sm:$0xff]
        %v2868 = vld [vmem:[#allocation3 + $0xa] sm:$0xff]
        %v2869 = vld [vmem:[#allocation3 + $0x12] sm:$0xf]
        %s2870 = sld [smem:[#allocation9 + $0x6]]
        %v2871 = vstv %s2870
        %v2872 = vmul.f32 %v2871, %v2867
        %v2873 = vmul.f32 %v2871, %v2868
        %v2874 = vmul.f32 %v2871, %v2869
        %v2875 = vadd.f32 %v2864, %v2872
        %v2876 = vadd.f32 %v2865, %v2873
        %v2877 = vadd.f32 %v2866, %v2874
        %s2878 = sld [smem:[#allocation9 + $0x7]]
        %v2879 = vstv %s2878
        %v2880 = vmul.f32 %v2879, %v2867
        %v2881 = vmul.f32 %v2879, %v2868
        %v2882 = vmul.f32 %v2879, %v2869
        %2886 = vrot.lane.b32.xlu0 %v2880, 127
        %v2887 = vpop.permute.xlu0 %2886
        %2888 = vrot.lane.b32.xlu0 %v2881, 127
        %v2889 = vpop.permute.xlu0 %2888
        %2890 = vrot.lane.b32.xlu0 %v2882, 127
        %v2891 = vpop.permute.xlu0 %2890
        %v2895 = vadd.f32 %v2875, %v2887
        %v2896 = vadd.f32 %v2876, %v2889
        %v2897 = vadd.f32 %v2877, %v2891
        %s2898 = sld [smem:[#allocation9 + $0x8]]
        %v2899 = vstv %s2898
        %v2900 = vmul.f32 %v2899, %v2867
        %v2901 = vmul.f32 %v2899, %v2868
        %v2902 = vmul.f32 %v2899, %v2869
        %2906 = vrot.lane.b32.xlu0 %v2900, 126
        %v2907 = vpop.permute.xlu0 %2906
        %2908 = vrot.lane.b32.xlu0 %v2901, 126
        %v2909 = vpop.permute.xlu0 %2908
        %2910 = vrot.lane.b32.xlu0 %v2902, 126
        %v2911 = vpop.permute.xlu0 %2910
        %v2915 = vadd.f32 %v2895, %v2907
        %v2916 = vadd.f32 %v2896, %v2909
        %v2917 = vadd.f32 %v2897, %v2911
        %v2918 = vld [vmem:[%s2726] sm:$0xff]
        %v2919 = vld [vmem:[%s2726 + $0x8] sm:$0xff]
        %v2920 = vld [vmem:[%s2726 + $0x10] sm:$0xf]
        %s2921 = sld [smem:[#allocation9 + $0x9]]
        %v2922 = vstv %s2921
        %v2923 = vmul.f32 %v2922, %v2918
        %v2924 = vmul.f32 %v2922, %v2919
        %v2925 = vmul.f32 %v2922, %v2920
        %v2926 = vadd.f32 %v2915, %v2923
        %v2927 = vadd.f32 %v2916, %v2924
        %v2928 = vadd.f32 %v2917, %v2925
        %s2929 = sld [smem:[#allocation9 + $0xa]]
        %v2930 = vstv %s2929
        %v2931 = vmul.f32 %v2930, %v2918
        %v2932 = vmul.f32 %v2930, %v2919
        %v2933 = vmul.f32 %v2930, %v2920
        %2937 = vrot.lane.b32.xlu0 %v2931, 127
        %v2938 = vpop.permute.xlu0 %2937
        %2939 = vrot.lane.b32.xlu0 %v2932, 127
        %v2940 = vpop.permute.xlu0 %2939
        %2941 = vrot.lane.b32.xlu0 %v2933, 127
        %v2942 = vpop.permute.xlu0 %2941
        %v2946 = vadd.f32 %v2926, %v2938
        %v2947 = vadd.f32 %v2927, %v2940
        %v2948 = vadd.f32 %v2928, %v2942
        %s2949 = sld [smem:[#allocation9 + $0xb]]
        %v2950 = vstv %s2949
        %v2951 = vmul.f32 %v2950, %v2918
        %v2952 = vmul.f32 %v2950, %v2919
        %v2953 = vmul.f32 %v2950, %v2920
        %2957 = vrot.lane.b32.xlu0 %v2951, 126
        %v2958 = vpop.permute.xlu0 %2957
        %2959 = vrot.lane.b32.xlu0 %v2952, 126
        %v2960 = vpop.permute.xlu0 %2959
        %2961 = vrot.lane.b32.xlu0 %v2953, 126
        %v2962 = vpop.permute.xlu0 %2961
        %v2966 = vadd.f32 %v2946, %v2958
        %v2967 = vadd.f32 %v2947, %v2960
        %v2968 = vadd.f32 %v2948, %v2962
        %v2969 = vld [vmem:[%s2726 + $0x1] sm:$0xff]
        %v2970 = vld [vmem:[%s2726 + $0x9] sm:$0xff]
        %v2971 = vld [vmem:[%s2726 + $0x11] sm:$0xf]
        %s2972 = sld [smem:[#allocation9 + $0xc]]
        %v2973 = vstv %s2972
        %v2974 = vmul.f32 %v2973, %v2969
        %v2975 = vmul.f32 %v2973, %v2970
        %v2976 = vmul.f32 %v2973, %v2971
        %v2977 = vadd.f32 %v2966, %v2974
        %v2978 = vadd.f32 %v2967, %v2975
        %v2979 = vadd.f32 %v2968, %v2976
        %s2980 = sld [smem:[#allocation9 + $0xd]]
        %v2981 = vstv %s2980
        %v2982 = vmul.f32 %v2981, %v2969
        %v2983 = vmul.f32 %v2981, %v2970
        %v2984 = vmul.f32 %v2981, %v2971
        %2988 = vrot.lane.b32.xlu0 %v2982, 127
        %v2989 = vpop.permute.xlu0 %2988
        %2990 = vrot.lane.b32.xlu0 %v2983, 127
        %v2991 = vpop.permute.xlu0 %2990
        %2992 = vrot.lane.b32.xlu0 %v2984, 127
        %v2993 = vpop.permute.xlu0 %2992
        %v2997 = vadd.f32 %v2977, %v2989
        %v2998 = vadd.f32 %v2978, %v2991
        %v2999 = vadd.f32 %v2979, %v2993
        %s3000 = sld [smem:[#allocation9 + $0xe]]
        %v3001 = vstv %s3000
        %v3002 = vmul.f32 %v3001, %v2969
        %v3003 = vmul.f32 %v3001, %v2970
        %v3004 = vmul.f32 %v3001, %v2971
        %3008 = vrot.lane.b32.xlu0 %v3002, 126
        %v3009 = vpop.permute.xlu0 %3008
        %3010 = vrot.lane.b32.xlu0 %v3003, 126
        %v3011 = vpop.permute.xlu0 %3010
        %3012 = vrot.lane.b32.xlu0 %v3004, 126
        %v3013 = vpop.permute.xlu0 %3012
        %v3017 = vadd.f32 %v2997, %v3009
        %v3018 = vadd.f32 %v2998, %v3011
        %v3019 = vadd.f32 %v2999, %v3013
        %v3020 = vld [vmem:[%s2726 + $0x2] sm:$0xff]
        %v3021 = vld [vmem:[%s2726 + $0xa] sm:$0xff]
        %v3022 = vld [vmem:[%s2726 + $0x12] sm:$0xf]
        %s3023 = sld [smem:[#allocation9 + $0xf]]
        %v3024 = vstv %s3023
        %v3025 = vmul.f32 %v3024, %v3020
        %v3026 = vmul.f32 %v3024, %v3021
        %v3027 = vmul.f32 %v3024, %v3022
        %v3028 = vadd.f32 %v3017, %v3025
        %v3029 = vadd.f32 %v3018, %v3026
        %v3030 = vadd.f32 %v3019, %v3027
        %s3031 = sld [smem:[#allocation9 + $0x10]]
        %v3032 = vstv %s3031
        %v3033 = vmul.f32 %v3032, %v3020
        %v3034 = vmul.f32 %v3032, %v3021
        %v3035 = vmul.f32 %v3032, %v3022
        %3039 = vrot.lane.b32.xlu0 %v3033, 127
        %v3040 = vpop.permute.xlu0 %3039
        %3041 = vrot.lane.b32.xlu0 %v3034, 127
        %v3042 = vpop.permute.xlu0 %3041
        %3043 = vrot.lane.b32.xlu0 %v3035, 127
        %v3044 = vpop.permute.xlu0 %3043
        %v3048 = vadd.f32 %v3028, %v3040
        %v3049 = vadd.f32 %v3029, %v3042
        %v3050 = vadd.f32 %v3030, %v3044
        %s3051 = sld [smem:[#allocation9 + $0x11]]
        %v3052 = vstv %s3051
        %v3053 = vmul.f32 %v3052, %v3020
        %v3054 = vmul.f32 %v3052, %v3021
        %v3055 = vmul.f32 %v3052, %v3022
        %3059 = vrot.lane.b32.xlu0 %v3053, 126
        %v3060 = vpop.permute.xlu0 %3059
        %3061 = vrot.lane.b32.xlu0 %v3054, 126
        %v3062 = vpop.permute.xlu0 %3061
        %3063 = vrot.lane.b32.xlu0 %v3055, 126
        %v3064 = vpop.permute.xlu0 %3063
        %v3068 = vadd.f32 %v3048, %v3060
        %v3069 = vadd.f32 %v3049, %v3062
        %v3070 = vadd.f32 %v3050, %v3064
        %v3071 = vld [vmem:[%s2742] sm:$0xff]
        %v3072 = vld [vmem:[%s2742 + $0x8] sm:$0xff]
        %v3073 = vld [vmem:[%s2742 + $0x10] sm:$0xf]
        %s3074 = sld [smem:[#allocation9 + $0x12]]
        %v3075 = vstv %s3074
        %v3076 = vmul.f32 %v3075, %v3071
        %v3077 = vmul.f32 %v3075, %v3072
        %v3078 = vmul.f32 %v3075, %v3073
        %v3079 = vadd.f32 %v3068, %v3076
        %v3080 = vadd.f32 %v3069, %v3077
        %v3081 = vadd.f32 %v3070, %v3078
        %s3082 = sld [smem:[#allocation9 + $0x13]]
        %v3083 = vstv %s3082
        %v3084 = vmul.f32 %v3083, %v3071
        %v3085 = vmul.f32 %v3083, %v3072
        %v3086 = vmul.f32 %v3083, %v3073
        %3090 = vrot.lane.b32.xlu0 %v3084, 127
        %v3091 = vpop.permute.xlu0 %3090
        %3092 = vrot.lane.b32.xlu0 %v3085, 127
        %v3093 = vpop.permute.xlu0 %3092
        %3094 = vrot.lane.b32.xlu0 %v3086, 127
        %v3095 = vpop.permute.xlu0 %3094
        %v3099 = vadd.f32 %v3079, %v3091
        %v3100 = vadd.f32 %v3080, %v3093
        %v3101 = vadd.f32 %v3081, %v3095
        %s3102 = sld [smem:[#allocation9 + $0x14]]
        %v3103 = vstv %s3102
        %v3104 = vmul.f32 %v3103, %v3071
        %v3105 = vmul.f32 %v3103, %v3072
        %v3106 = vmul.f32 %v3103, %v3073
        %3110 = vrot.lane.b32.xlu0 %v3104, 126
        %v3111 = vpop.permute.xlu0 %3110
        %3112 = vrot.lane.b32.xlu0 %v3105, 126
        %v3113 = vpop.permute.xlu0 %3112
        %3114 = vrot.lane.b32.xlu0 %v3106, 126
        %v3115 = vpop.permute.xlu0 %3114
        %v3119 = vadd.f32 %v3099, %v3111
        %v3120 = vadd.f32 %v3100, %v3113
        %v3121 = vadd.f32 %v3101, %v3115
        %v3122 = vld [vmem:[%s2742 + $0x1] sm:$0xff]
        %v3123 = vld [vmem:[%s2742 + $0x9] sm:$0xff]
        %v3124 = vld [vmem:[%s2742 + $0x11] sm:$0xf]
        %s3125 = sld [smem:[#allocation9 + $0x15]]
        %v3126 = vstv %s3125
        %v3127 = vmul.f32 %v3126, %v3122
        %v3128 = vmul.f32 %v3126, %v3123
        %v3129 = vmul.f32 %v3126, %v3124
        %v3130 = vadd.f32 %v3119, %v3127
        %v3131 = vadd.f32 %v3120, %v3128
        %v3132 = vadd.f32 %v3121, %v3129
        %s3133 = sld [smem:[#allocation9 + $0x16]]
        %v3134 = vstv %s3133
        %v3135 = vmul.f32 %v3134, %v3122
        %v3136 = vmul.f32 %v3134, %v3123
        %v3137 = vmul.f32 %v3134, %v3124
        %3141 = vrot.lane.b32.xlu0 %v3135, 127
        %v3142 = vpop.permute.xlu0 %3141
        %3143 = vrot.lane.b32.xlu0 %v3136, 127
        %v3144 = vpop.permute.xlu0 %3143
        %3145 = vrot.lane.b32.xlu0 %v3137, 127
        %v3146 = vpop.permute.xlu0 %3145
        %v3150 = vadd.f32 %v3130, %v3142
        %v3151 = vadd.f32 %v3131, %v3144
        %v3152 = vadd.f32 %v3132, %v3146
        %s3153 = sld [smem:[#allocation9 + $0x17]]
        %v3154 = vstv %s3153
        %v3155 = vmul.f32 %v3154, %v3122
        %v3156 = vmul.f32 %v3154, %v3123
        %v3157 = vmul.f32 %v3154, %v3124
        %3161 = vrot.lane.b32.xlu0 %v3155, 126
        %v3162 = vpop.permute.xlu0 %3161
        %3163 = vrot.lane.b32.xlu0 %v3156, 126
        %v3164 = vpop.permute.xlu0 %3163
        %3165 = vrot.lane.b32.xlu0 %v3157, 126
        %v3166 = vpop.permute.xlu0 %3165
        %v3170 = vadd.f32 %v3150, %v3162
        %v3171 = vadd.f32 %v3151, %v3164
        %v3172 = vadd.f32 %v3152, %v3166
        %v3173 = vld [vmem:[%s2742 + $0x2] sm:$0xff]
        %v3174 = vld [vmem:[%s2742 + $0xa] sm:$0xff]
        %v3175 = vld [vmem:[%s2742 + $0x12] sm:$0xf]
        %s3176 = sld [smem:[#allocation9 + $0x18]]
        %v3177 = vstv %s3176
        %v3178 = vmul.f32 %v3177, %v3173
        %v3179 = vmul.f32 %v3177, %v3174
        %v3180 = vmul.f32 %v3177, %v3175
        %v3181 = vadd.f32 %v3170, %v3178
        %v3182 = vadd.f32 %v3171, %v3179
        %v3183 = vadd.f32 %v3172, %v3180
        %s3184 = sld [smem:[#allocation9 + $0x19]]
        %v3185 = vstv %s3184
        %v3186 = vmul.f32 %v3185, %v3173
        %v3187 = vmul.f32 %v3185, %v3174
        %v3188 = vmul.f32 %v3185, %v3175
        %3192 = vrot.lane.b32.xlu0 %v3186, 127
        %v3193 = vpop.permute.xlu0 %3192
        %3194 = vrot.lane.b32.xlu0 %v3187, 127
        %v3195 = vpop.permute.xlu0 %3194
        %3196 = vrot.lane.b32.xlu0 %v3188, 127
        %v3197 = vpop.permute.xlu0 %3196
        %v3201 = vadd.f32 %v3181, %v3193
        %v3202 = vadd.f32 %v3182, %v3195
        %v3203 = vadd.f32 %v3183, %v3197
        %s3204 = sld [smem:[#allocation9 + $0x1a]]
        %v3205 = vstv %s3204
        %v3206 = vmul.f32 %v3205, %v3173
        %v3207 = vmul.f32 %v3205, %v3174
        %v3208 = vmul.f32 %v3205, %v3175
        %3212 = vrot.lane.b32.xlu0 %v3206, 126
        %v3213 = vpop.permute.xlu0 %3212
        %3214 = vrot.lane.b32.xlu0 %v3207, 126
        %v3215 = vpop.permute.xlu0 %3214
        %3216 = vrot.lane.b32.xlu0 %v3208, 126
        %v3217 = vpop.permute.xlu0 %3216
        %v3221 = vadd.f32 %v3201, %v3213
        %v3222 = vadd.f32 %v3202, %v3215
        %v3223 = vadd.f32 %v3203, %v3217
        %v3224 = vld [vmem:[%s2758] sm:$0xff]
        %v3225 = vld [vmem:[%s2758 + $0x8] sm:$0xff]
        %v3226 = vld [vmem:[%s2758 + $0x10] sm:$0xf]
        %s3227 = sld [smem:[#allocation9 + $0x1b]]
        %v3228 = vstv %s3227
        %v3229 = vmul.f32 %v3228, %v3224
        %v3230 = vmul.f32 %v3228, %v3225
        %v3231 = vmul.f32 %v3228, %v3226
        %v3232 = vadd.f32 %v3221, %v3229
        %v3233 = vadd.f32 %v3222, %v3230
        %v3234 = vadd.f32 %v3223, %v3231
        %s3235 = sld [smem:[#allocation9 + $0x1c]]
        %v3236 = vstv %s3235
        %v3237 = vmul.f32 %v3236, %v3224
        %v3238 = vmul.f32 %v3236, %v3225
        %v3239 = vmul.f32 %v3236, %v3226
        %3243 = vrot.lane.b32.xlu0 %v3237, 127
        %v3244 = vpop.permute.xlu0 %3243
        %3245 = vrot.lane.b32.xlu0 %v3238, 127
        %v3246 = vpop.permute.xlu0 %3245
        %3247 = vrot.lane.b32.xlu0 %v3239, 127
        %v3248 = vpop.permute.xlu0 %3247
        %v3252 = vadd.f32 %v3232, %v3244
        %v3253 = vadd.f32 %v3233, %v3246
        %v3254 = vadd.f32 %v3234, %v3248
        %s3255 = sld [smem:[#allocation9 + $0x1d]]
        %v3256 = vstv %s3255
        %v3257 = vmul.f32 %v3256, %v3224
        %v3258 = vmul.f32 %v3256, %v3225
        %v3259 = vmul.f32 %v3256, %v3226
        %3263 = vrot.lane.b32.xlu0 %v3257, 126
        %v3264 = vpop.permute.xlu0 %3263
        %3265 = vrot.lane.b32.xlu0 %v3258, 126
        %v3266 = vpop.permute.xlu0 %3265
        %3267 = vrot.lane.b32.xlu0 %v3259, 126
        %v3268 = vpop.permute.xlu0 %3267
        %v3272 = vadd.f32 %v3252, %v3264
        %v3273 = vadd.f32 %v3253, %v3266
        %v3274 = vadd.f32 %v3254, %v3268
        %v3275 = vld [vmem:[%s2758 + $0x1] sm:$0xff]
        %v3276 = vld [vmem:[%s2758 + $0x9] sm:$0xff]
        %v3277 = vld [vmem:[%s2758 + $0x11] sm:$0xf]
        %s3278 = sld [smem:[#allocation9 + $0x1e]]
        %v3279 = vstv %s3278
        %v3280 = vmul.f32 %v3279, %v3275
        %v3281 = vmul.f32 %v3279, %v3276
        %v3282 = vmul.f32 %v3279, %v3277
        %v3283 = vadd.f32 %v3272, %v3280
        %v3284 = vadd.f32 %v3273, %v3281
        %v3285 = vadd.f32 %v3274, %v3282
        %s3286 = sld [smem:[#allocation9 + $0x1f]]
        %v3287 = vstv %s3286
        %v3288 = vmul.f32 %v3287, %v3275
        %v3289 = vmul.f32 %v3287, %v3276
        %v3290 = vmul.f32 %v3287, %v3277
        %3294 = vrot.lane.b32.xlu0 %v3288, 127
        %v3295 = vpop.permute.xlu0 %3294
        %3296 = vrot.lane.b32.xlu0 %v3289, 127
        %v3297 = vpop.permute.xlu0 %3296
        %3298 = vrot.lane.b32.xlu0 %v3290, 127
        %v3299 = vpop.permute.xlu0 %3298
        %v3303 = vadd.f32 %v3283, %v3295
        %v3304 = vadd.f32 %v3284, %v3297
        %v3305 = vadd.f32 %v3285, %v3299
        %s3306 = sld [smem:[#allocation9 + $0x20]]
        %v3307 = vstv %s3306
        %v3308 = vmul.f32 %v3307, %v3275
        %v3309 = vmul.f32 %v3307, %v3276
        %v3310 = vmul.f32 %v3307, %v3277
        %3314 = vrot.lane.b32.xlu0 %v3308, 126
        %v3315 = vpop.permute.xlu0 %3314
        %3316 = vrot.lane.b32.xlu0 %v3309, 126
        %v3317 = vpop.permute.xlu0 %3316
        %3318 = vrot.lane.b32.xlu0 %v3310, 126
        %v3319 = vpop.permute.xlu0 %3318
        %v3323 = vadd.f32 %v3303, %v3315
        %v3324 = vadd.f32 %v3304, %v3317
        %v3325 = vadd.f32 %v3305, %v3319
        %v3326 = vld [vmem:[%s2758 + $0x2] sm:$0xff]
        %v3327 = vld [vmem:[%s2758 + $0xa] sm:$0xff]
        %v3328 = vld [vmem:[%s2758 + $0x12] sm:$0xf]
        %s3329 = sld [smem:[#allocation9 + $0x21]]
        %v3330 = vstv %s3329
        %v3331 = vmul.f32 %v3330, %v3326
        %v3332 = vmul.f32 %v3330, %v3327
        %v3333 = vmul.f32 %v3330, %v3328
        %v3334 = vadd.f32 %v3323, %v3331
        %v3335 = vadd.f32 %v3324, %v3332
        %v3336 = vadd.f32 %v3325, %v3333
        %s3337 = sld [smem:[#allocation9 + $0x22]]
        %v3338 = vstv %s3337
        %v3339 = vmul.f32 %v3338, %v3326
        %v3340 = vmul.f32 %v3338, %v3327
        %v3341 = vmul.f32 %v3338, %v3328
        %3345 = vrot.lane.b32.xlu0 %v3339, 127
        %v3346 = vpop.permute.xlu0 %3345
        %3347 = vrot.lane.b32.xlu0 %v3340, 127
        %v3348 = vpop.permute.xlu0 %3347
        %3349 = vrot.lane.b32.xlu0 %v3341, 127
        %v3350 = vpop.permute.xlu0 %3349
        %v3354 = vadd.f32 %v3334, %v3346
        %v3355 = vadd.f32 %v3335, %v3348
        %v3356 = vadd.f32 %v3336, %v3350
        %s3357 = sld [smem:[#allocation9 + $0x23]]
        %v3358 = vstv %s3357
        %v3359 = vmul.f32 %v3358, %v3326
        %v3360 = vmul.f32 %v3358, %v3327
        %v3361 = vmul.f32 %v3358, %v3328
        %3365 = vrot.lane.b32.xlu0 %v3359, 126
        %v3366 = vpop.permute.xlu0 %3365
        %3367 = vrot.lane.b32.xlu0 %v3360, 126
        %v3368 = vpop.permute.xlu0 %3367
        %3369 = vrot.lane.b32.xlu0 %v3361, 126
        %v3370 = vpop.permute.xlu0 %3369
        %v3374 = vadd.f32 %v3354, %v3366
        %v3375 = vadd.f32 %v3355, %v3368
        %v3376 = vadd.f32 %v3356, %v3370
        %3377 = vst.msk [vmem:[%s264] sm:$0xff] %vm265, %v3374
        %3378 = vst.msk [vmem:[%s264 + $0x8] sm:$0xff] %vm265, %v3375
        %3379 = vst.msk [vmem:[%s264 + $0x10] sm:$0xf] %vm268, %v3376
        %p3380 = scmp.lt.s32.totalorder %s19, 1
        %s3381 = scalar_select %p3380, %s19, 1
        %s3382 = smul.addr %s3381, 3
        %s3383 = smul.addr %s3382, 8
        %s3384 = scalar_lea.vmem %s5, %s3383
        // Predicated region
        $region53: #{decoder_forward.1} parent=39 // pred_check
          %p3385 = pneg %p147
        $region54: #{decoder_forward.1} parent=39 // pred_check_branch
          %3387 = sbr.rel (%p3385) target = $region56
        $region55: #{decoder_forward.1} parent=39 // pred_region
          _
        $region56: #{decoder_forward.1} parent=39 // pred_fallthru
          _
      $region40: #{decoder_forward.1} parent=5 // pred_fallthru
        _
      %p3388 = scmp.le.s32.totalorder 2, %s14
      // Predicated region
      $region57: #{decoder_forward.1} parent=5 // pred_check
        %p3389 = pneg %p3388
      $region58: #{decoder_forward.1} parent=5 // pred_check_branch
        %3391 = sbr.rel (%p3389) target = $region60
      $region59: #{decoder_forward.1} parent=5 // pred_region
        %s3392 = ssub.s32 %s14, 2
        // Predicated region
        $region61: #{decoder_forward.1} parent=59 // pred_check
          %p3393 = pneg %p153
        $region62: #{decoder_forward.1} parent=59 // pred_check_branch
          %3395 = sbr.rel (%p3393) target = $region64
        $region63: #{decoder_forward.1} parent=59 // pred_region
          %p3396 = scmp.lt.s32.totalorder %s20, 1
          %s3397 = scalar_select %p3396, %s20, 1
          %s3398 = smul.addr %s3397, 3
          %s3399 = smul.addr %s3398, 8
          %s3400 = scalar_lea.vmem %s5, %s3399
        $region64: #{decoder_forward.1} parent=59 // pred_fallthru
          _
      $region60: #{decoder_forward.1} parent=5 // pred_fallthru
        _
    $region6: #{decoder_forward.1} parent=1 // loop_footer
      %s18 = sadd.s32 1, %s14
    $region7: #{decoder_forward.1} parent=1 // loop_footer_branch
      %13 = sbr.rel target = $region3
    $region8: #{decoder_forward.1} parent=1 // loop_exit
      _
    %3401 = vsyncpa [#allocation6], 1
    %s3402 = scalar_lea.sflag [#allocation6], 1
    %3403 = vsyncpa %s3402, 1
    %3404 = vsyncpa [#allocation8], 1

</llo_original>
